<compile_context>
chip_gen: v6e
topology: v6e:2x2x1
jax: 0.10.0
libtpu: 0.0.40
codegen_flags: <defaults>
</compile_context>

<pallas_src>
import jax
import jax.numpy as jnp
from jax import lax
from jax.experimental import pallas as pl
from jax.experimental.pallas import tpu as pltpu


def _round_up(x, m):
    return ((x + m - 1) // m) * m


# ---------------- fused conv3x3 + ReLU + maxpool(2) ----------------

def _conv_relu_pool_kernel(p_ref, w_ref, b_ref, o_ref):
    # p_ref: (4, tm, Kp) bf16 -- the four 2x2 pool positions stacked.
    _, tm, kp = p_ref.shape
    y = jnp.dot(p_ref[...].reshape(4 * tm, kp), w_ref[...],
                preferred_element_type=jnp.float32)            # (4*tm, Cout)
    m = jnp.maximum(jnp.maximum(y[:tm], y[tm:2 * tm]),
                    jnp.maximum(y[2 * tm:3 * tm], y[3 * tm:]))
    o_ref[...] = jnp.maximum(m + b_ref[...], 0.0)              # relu(max+bias)


def conv3x3_relu_pool(x, w, b, *, tm=1024):
    """x: (B, H, W, Cin) NHWC -> (B, H//2, W//2, Cout).

    Equivalent to MaxPool2d(2)(ReLU(Conv2d(3x3, padding=1))).  `w` is stored in
    im2col layout ((dy, dx, cin), cout); `b` is (1, cout).  Assumes even H, W
    (PyTorch MaxPool2d(2) floors; TODO(synk): odd spatial dims unsupported here).
    """
    B, H, W, Cin = x.shape
    Ho, Wo = H // 2, W // 2
    Cout = w.shape[1]
    K = 9 * Cin
    M = B * Ho * Wo

    xp = jnp.pad(x, ((0, 0), (1, 1), (1, 1), (0, 0)))

    # Build the four pool-position im2col slabs directly (no full-res patches array).
    def slab(py, px):
        cols = [xp[:, py + dy: py + dy + 2 * Ho: 2, px + dx: px + dx + 2 * Wo: 2, :]
                for dy in range(3) for dx in range(3)]
        return jnp.concatenate(cols, axis=-1).reshape(M, K)

    slabs = jnp.stack([slab(py, px) for py in (0, 1) for px in (0, 1)], axis=0)

    tm = min(tm, _round_up(M, 16))             # 16-sublane aligned for bf16 blocks
    Mp = _round_up(M, tm)
    Kp = _round_up(K, 8)
    slabs = jnp.pad(slabs, ((0, 0), (0, Mp - M), (0, Kp - K))).astype(jnp.bfloat16)
    wp = jnp.pad(w, ((0, Kp - K), (0, 0))).astype(jnp.bfloat16)
    bf = b.astype(jnp.float32)

    out = pl.pallas_call(
        _conv_relu_pool_kernel,
        out_shape=jax.ShapeDtypeStruct((Mp, Cout), jnp.float32),
        grid_spec=pltpu.PrefetchScalarGridSpec(
            num_scalar_prefetch=0,
            grid=(Mp // tm,),
            in_specs=[pl.BlockSpec((4, tm, Kp), lambda i: (0, i, 0)),
                      pl.BlockSpec((Kp, Cout), lambda i: (0, 0)),
                      pl.BlockSpec((1, Cout), lambda i: (0, 0))],
            out_specs=pl.BlockSpec((tm, Cout), lambda i: (i, 0)),
        ),
        compiler_params=pltpu.CompilerParams(
            dimension_semantics=("parallel",)),
    )(slabs, wp, bf)
    return out[:M].reshape(B, Ho, Wo, Cout)


# ---------------- fused 2-layer bidirectional LSTM + classifier ----------------

def _lstm_stack_classifier_kernel(
        x_ref,
        wih_f0_ref, whh_f0_ref, b_f0_ref,
        wih_b0_ref, whh_b0_ref, b_b0_ref,
        wihf1_f_ref, wihf1_b_ref, whh_f1_ref, b_f1_ref,
        wihb1_f_ref, wihb1_b_ref, b_b1_ref,
        w1f_ref, w1b_ref, b1_ref, w2_ref, b2_ref,
        o_ref,
        xgf0_scr, xgb0_scr, hf0_scr, hb0_scr, xgf1_scr):
    T, Bp, D0 = x_ref.shape
    H = whh_f0_ref.shape[0]
    H3 = 3 * H
    unroll = T if T <= 16 else 8

    def gates_to_hc(gates, c):
        # gate columns pre-permuted offline to (i, f, o, g)
        s = jax.nn.sigmoid(gates[:, :H3])
        g = jnp.tanh(gates[:, H3:])
        i_g = s[:, :H]
        f_g = s[:, H:2 * H]
        o_g = s[:, 2 * H:]
        c_new = f_g * c + i_g * g
        h_new = o_g * jnp.tanh(c_new)
        return h_new, c_new

    def rec_cell(xg_t, h, c, whh_ref):
        gates = xg_t + jnp.dot(h.astype(jnp.bfloat16), whh_ref[...],
                               preferred_element_type=jnp.float32)
        return gates_to_hc(gates, c)

    # ---- layer 0: input projections hoisted out of the time loop ----
    x2d = x_ref[...].reshape(T * Bp, D0)
    xgf0_scr[...] = (jnp.dot(x2d, wih_f0_ref[...],
                             preferred_element_type=jnp.float32)
                     + b_f0_ref[...]).reshape(T, Bp, 4 * H)
    xgb0_scr[...] = (jnp.dot(x2d, wih_b0_ref[...],
                             preferred_element_type=jnp.float32)
                     + b_b0_ref[...]).reshape(T, Bp, 4 * H)

    zeros = jnp.zeros((Bp, H), jnp.float32)

    def step0(t, carry):
        h_f, c_f, h_b, c_b = carry
        h_f, c_f = rec_cell(xgf0_scr[t], h_f, c_f, whh_f0_ref)
        h_b, c_b = rec_cell(xgb0_scr[T - 1 - t], h_b, c_b, whh_b0_ref)
        hf0_scr[t] = h_f
        hb0_scr[T - 1 - t] = h_b
        return h_f, c_f, h_b, c_b

    lax.fori_loop(0, T, step0, (zeros, zeros, zeros, zeros), unroll=unroll)

    # ---- layer 1 forward: hoisted input projection, keep only the final hidden ----
    hf0_2d = hf0_scr[...].reshape(T * Bp, H).astype(jnp.bfloat16)
    hb0_2d = hb0_scr[...].reshape(T * Bp, H).astype(jnp.bfloat16)
    xgf1_scr[...] = (jnp.dot(hf0_2d, wihf1_f_ref[...],
                             preferred_element_type=jnp.float32)
                     + jnp.dot(hb0_2d, wihf1_b_ref[...],
                               preferred_element_type=jnp.float32)
                     + b_f1_ref[...]).reshape(T, Bp, 4 * H)

    def step1(t, carry):
        h_f, c_f = carry
        return rec_cell(xgf1_scr[t], h_f, c_f, whh_f1_ref)

    h_f1, _ = lax.fori_loop(0, T, step1, (zeros, zeros), unroll=unroll)

    # ---- layer 1 backward: only its first step (output position T-1) is consumed ----
    gates_b1 = (jnp.dot(hf0_scr[T - 1].astype(jnp.bfloat16), wihb1_f_ref[...],
                        preferred_element_type=jnp.float32)
                + jnp.dot(hb0_scr[T - 1].astype(jnp.bfloat16), wihb1_b_ref[...],
                          preferred_element_type=jnp.float32)
                + b_b1_ref[...])
    h_b1, _ = gates_to_hc(gates_b1, zeros)      # zero initial h/c for backward dir

    # ---- classifier epilogue (Dropout is identity at inference) ----
    hidden = (jnp.dot(h_f1.astype(jnp.bfloat16), w1f_ref[...],
                      preferred_element_type=jnp.float32)
              + jnp.dot(h_b1.astype(jnp.bfloat16), w1b_ref[...],
                        preferred_element_type=jnp.float32)
              + b1_ref[...])
    hidden = jnp.maximum(hidden, 0.0)
    o_ref[...] = (jnp.dot(hidden.astype(jnp.bfloat16), w2_ref[...],
                          preferred_element_type=jnp.float32) + b2_ref[...])


def _prep_lstm_direction(wih, whh, b):
    """Permute PyTorch gate order (i,f,g,o)->(i,f,o,g); cast weights to bf16.
    wih: (D,4H), whh: (H,4H), b: (1,4H) = b_ih + b_hh."""
    H = whh.shape[0]

    def perm(m):
        i, f, g, o = (m[:, k * H:(k + 1) * H] for k in range(4))
        return jnp.concatenate([i, f, o, g], axis=-1)

    return (perm(wih).astype(jnp.bfloat16),
            perm(whh).astype(jnp.bfloat16),
            perm(b).astype(jnp.float32))


def lstm_stack_classifier(x_tbd, params):
    """x_tbd: (T, Bp, D0) bf16 time-major. Returns logits (Bp, 128) (class-padded)."""
    T, Bp, _ = x_tbd.shape
    l0, l1 = params["lstm0"], params["lstm1"]
    H = l0["whh_f"].shape[0]

    wih_f0, whh_f0, b_f0 = _prep_lstm_direction(l0["wih_f"], l0["whh_f"], l0["b_f"])
    wih_b0, whh_b0, b_b0 = _prep_lstm_direction(l0["wih_b"], l0["whh_b"], l0["b_b"])
    wih_f1, whh_f1, b_f1 = _prep_lstm_direction(l1["wih_f"], l1["whh_f"], l1["b_f"])
    wih_b1, _unused, b_b1 = _prep_lstm_direction(l1["wih_b"], l1["whh_b"], l1["b_b"])

    # Split layer-1 / classifier input weights by layer-0 direction so the kernel
    # never concatenates along the feature dim.
    wihf1_f, wihf1_b = wih_f1[:H], wih_f1[H:]
    wihb1_f, wihb1_b = wih_b1[:H], wih_b1[H:]

    w1 = params["fc1_w"].astype(jnp.bfloat16)
    w1f, w1b = w1[:H], w1[H:]
    b1 = params["fc1_b"].astype(jnp.float32)

    C = params["fc2_w"].shape[1]
    Cp = _round_up(C, 128)                      # lane-dense classifier output
    w2 = jnp.pad(params["fc2_w"], ((0, 0), (0, Cp - C))).astype(jnp.bfloat16)
    b2 = jnp.pad(params["fc2_b"], ((0, 0), (0, Cp - C))).astype(jnp.float32)

    return pl.pallas_call(
        _lstm_stack_classifier_kernel,
        out_shape=jax.ShapeDtypeStruct((Bp, Cp), jnp.float32),
        scratch_shapes=[
            pltpu.VMEM((T, Bp, 4 * H), jnp.float32),   # layer-0 fwd input proj
            pltpu.VMEM((T, Bp, 4 * H), jnp.float32),   # layer-0 bwd input proj
            pltpu.VMEM((T, Bp, H), jnp.float32),       # layer-0 fwd hiddens
            pltpu.VMEM((T, Bp, H), jnp.float32),       # layer-0 bwd hiddens
            pltpu.VMEM((T, Bp, 4 * H), jnp.float32),   # layer-1 fwd input proj
        ],
    )(x_tbd,
      wih_f0, whh_f0, b_f0, wih_b0, whh_b0, b_b0,
      wihf1_f, wihf1_b, whh_f1, b_f1,
      wihb1_f, wihb1_b, b_b1,
      w1f, w1b, b1, w2, b2)


# ---------------- full forward pass ----------------

def cnn_lstm_forward(params, inputs, seq_lengths):
    # inputs: (B, H, W) float32 -> PyTorch 3-D path: x = inputs.unsqueeze(1) (NCHW).
    del seq_lengths  # unused by the reference forward pass
    B = inputs.shape[0]
    x = inputs[..., None].astype(jnp.float32)                      # NHWC (B, H, W, 1)

    x = conv3x3_relu_pool(x, params["conv1_w"], params["conv1_b"])  # (B, H/2, W/2, 16)
    x = conv3x3_relu_pool(x, params["conv2_w"], params["conv2_b"])  # (B, H/4, W/4, 32)

    # NCHW permute(0,2,1,3) + view(B, T, -1): feature order = (channel, width)
    T, W4 = x.shape[1], x.shape[2]
    seq = jnp.transpose(x, (0, 1, 3, 2)).reshape(B, T, 32 * W4)    # (B, T, 32) when W4==1

    # Time-major; pad the batch to 16 sublanes (padded rows never mix with real rows —
    # all LSTM/classifier math is row-independent).  bf16 input feeds the MXU directly.
    Bp = _round_up(B, 16)
    x_tbd = jnp.transpose(seq, (1, 0, 2))                          # (T, B, feat)
    x_tbd = jnp.pad(x_tbd, ((0, 0), (0, Bp - B), (0, 0))).astype(jnp.bfloat16)

    out = lstm_stack_classifier(x_tbd, params)                     # (Bp, 128)
    return out[:B, :params["fc2_w"].shape[1]]


def init_params(key, num_classes, hidden=64):
    keys = iter(jax.random.split(key, 32))

    def u(shape, scale=0.1):
        return jax.random.uniform(next(keys), shape, jnp.float32, -scale, scale)

    def lstm_layer_params(in_dim):
        return {
            "wih_f": u((in_dim, 4 * hidden)), "whh_f": u((hidden, 4 * hidden)),
            "b_f": u((1, 4 * hidden)),
            "wih_b": u((in_dim, 4 * hidden)), "whh_b": u((hidden, 4 * hidden)),
            "b_b": u((1, 4 * hidden)),
        }

    return {
        # conv weights stored in im2col layout: ((dy, dx, cin), cout)
        "conv1_w": u((9 * 1, 16)),  "conv1_b": u((1, 16)),
        "conv2_w": u((9 * 16, 32)), "conv2_b": u((1, 32)),
        "lstm0": lstm_layer_params(32),
        "lstm1": lstm_layer_params(2 * hidden),
        "fc1_w": u((2 * hidden, 128)), "fc1_b": u((1, 128)),
        "fc2_w": u((128, num_classes)), "fc2_b": u((1, num_classes)),
    }


if __name__ == "__main__":
    key = jax.random.PRNGKey(0)
    k_in, k_par = jax.random.split(key)

    num_classes = 5
    B, H, W = 2, 16, 4   # W=4 so the flattened feature dim after pooling is 32 (LSTM input_size)
    inputs = jax.random.normal(k_in, (B, H, W), jnp.float32)
    seq_lengths = jnp.full((B,), H // 4, jnp.int32)

    params = init_params(k_par, num_classes)
    fwd = jax.jit(cnn_lstm_forward)
    out = fwd(params, inputs, seq_lengths)
    jax.block_until_ready(out)
    assert out.shape == (B, num_classes), out.shape
    print("KERNEL_OK")
</pallas_src>

<mosaic_0001>
module attributes {stable_mosaic.version = 11 : i64} {
  func.func @_conv_relu_pool_kernel(%arg0: i32, %arg1: memref<4x32x16xbf16, #tpu.memory_space<vmem>>, %arg2: memref<16x16xbf16, #tpu.memory_space<vmem>>, %arg3: memref<1x16xf32, #tpu.memory_space<vmem>>, %arg4: memref<32x16xf32, #tpu.memory_space<vmem>>) attributes {dimension_semantics = [#tpu.dimension_semantics<parallel>], iteration_bounds = array<i64: 1>, scalar_prefetch = 0 : i64, scratch_operands = 0 : i64, tpu.core_type = #tpu.core_type<tc>, window_params = [{transform_indices = @transform_0, window_bounds = array<i64: 4, 32, 16>}, {pipeline_mode = #tpu.pipeline_mode<synchronous>, transform_indices = @transform_1, window_bounds = array<i64: 16, 16>}, {pipeline_mode = #tpu.pipeline_mode<synchronous>, transform_indices = @transform_2, window_bounds = array<i64: 1, 16>}, {transform_indices = @transform_3, window_bounds = array<i64: 32, 16>}]} {
    %c0 = arith.constant 0 : index
    %c0_0 = arith.constant 0 : index
    %c0_1 = arith.constant 0 : index
    %0 = vector.load %arg1[%c0, %c0_0, %c0_1] : memref<4x32x16xbf16, #tpu.memory_space<vmem>>, vector<4x32x16xbf16>
    %1 = vector.shape_cast %0 : vector<4x32x16xbf16> to vector<128x16xbf16>
    %c0_2 = arith.constant 0 : index
    %c0_3 = arith.constant 0 : index
    %2 = vector.load %arg2[%c0_2, %c0_3] : memref<16x16xbf16, #tpu.memory_space<vmem>>, vector<16x16xbf16>
    %cst = arith.constant dense<0.000000e+00> : vector<128x16xf32>
    %3 = tpu.matmul %1, %2, %cst {dimension_numbers = #tpu.dot_dimension_numbers<[1], [0], [0], [1], [0, 0, 1, 1], [], []>} : vector<128x16xbf16>, vector<16x16xbf16>, vector<128x16xf32> -> vector<128x16xf32>
    %4 = vector.extract_strided_slice %3 {offsets = [0, 0], sizes = [32, 16], strides = [1, 1]} : vector<128x16xf32> to vector<32x16xf32>
    %5 = vector.extract_strided_slice %3 {offsets = [32, 0], sizes = [32, 16], strides = [1, 1]} : vector<128x16xf32> to vector<32x16xf32>
    %6 = arith.maximumf %4, %5 : vector<32x16xf32>
    %7 = vector.extract_strided_slice %3 {offsets = [64, 0], sizes = [32, 16], strides = [1, 1]} : vector<128x16xf32> to vector<32x16xf32>
    %8 = vector.extract_strided_slice %3 {offsets = [96, 0], sizes = [32, 16], strides = [1, 1]} : vector<128x16xf32> to vector<32x16xf32>
    %9 = arith.maximumf %7, %8 : vector<32x16xf32>
    %10 = arith.maximumf %6, %9 : vector<32x16xf32>
    %c0_4 = arith.constant 0 : index
    %c0_5 = arith.constant 0 : index
    %11 = vector.load %arg3[%c0_4, %c0_5] : memref<1x16xf32, #tpu.memory_space<vmem>>, vector<1x16xf32>
    %12 = vector.broadcast %11 : vector<1x16xf32> to vector<32x16xf32>
    %13 = arith.addf %10, %12 : vector<32x16xf32>
    %cst_6 = arith.constant 0.000000e+00 : f32
    %14 = vector.broadcast %cst_6 : f32 to vector<32x16xf32>
    %15 = arith.maximumf %13, %14 : vector<32x16xf32>
    %c0_7 = arith.constant 0 : index
    %c0_8 = arith.constant 0 : index
    %16 = vector.load %arg4[%c0_7, %c0_8] : memref<32x16xf32, #tpu.memory_space<vmem>>, vector<32x16xf32>
    tpu.vector_store %arg4[%c0_7, %c0_8], %15 {strides = array<i32>} : memref<32x16xf32, #tpu.memory_space<vmem>>, vector<32x16xf32>,
    return
  }
  func.func @transform_0(%arg0: i32) -> (i32, i32, i32) {
    %c0_i32 = arith.constant 0 : i32
    %c0_i32_0 = arith.constant 0 : i32
    %c0_i32_1 = arith.constant 0 : i32
    return %c0_i32, %arg0, %c0_i32_0 : i32, i32, i32
  }
  func.func @transform_1(%arg0: i32) -> (i32, i32) {
    %c0_i32 = arith.constant 0 : i32
    %c0_i32_0 = arith.constant 0 : i32
    %c0_i32_1 = arith.constant 0 : i32
    return %c0_i32, %c0_i32_0 : i32, i32
  }
  func.func @transform_2(%arg0: i32) -> (i32, i32) {
    %c0_i32 = arith.constant 0 : i32
    %c0_i32_0 = arith.constant 0 : i32
    %c0_i32_1 = arith.constant 0 : i32
    return %c0_i32, %c0_i32_0 : i32, i32
  }
  func.func @transform_3(%arg0: i32) -> (i32, i32) {
    %c0_i32 = arith.constant 0 : i32
    %c0_i32_0 = arith.constant 0 : i32
    return %arg0, %c0_i32 : i32, i32
  }
}

module attributes {stable_mosaic.version = 11 : i64} {
  func.func @_conv_relu_pool_kernel(%arg0: i32, %arg1: memref<4x16x144xbf16, #tpu.memory_space<vmem>>, %arg2: memref<144x32xbf16, #tpu.memory_space<vmem>>, %arg3: memref<1x32xf32, #tpu.memory_space<vmem>>, %arg4: memref<16x32xf32, #tpu.memory_space<vmem>>) attributes {dimension_semantics = [#tpu.dimension_semantics<parallel>], iteration_bounds = array<i64: 1>, scalar_prefetch = 0 : i64, scratch_operands = 0 : i64, tpu.core_type = #tpu.core_type<tc>, window_params = [{transform_indices = @transform_0, window_bounds = array<i64: 4, 16, 144>}, {pipeline_mode = #tpu.pipeline_mode<synchronous>, transform_indices = @transform_1, window_bounds = array<i64: 144, 32>}, {pipeline_mode = #tpu.pipeline_mode<synchronous>, transform_indices = @transform_2, window_bounds = array<i64: 1, 32>}, {transform_indices = @transform_3, window_bounds = array<i64: 16, 32>}]} {
    %c0 = arith.constant 0 : index
    %c0_0 = arith.constant 0 : index
    %c0_1 = arith.constant 0 : index
    %0 = vector.load %arg1[%c0, %c0_0, %c0_1] : memref<4x16x144xbf16, #tpu.memory_space<vmem>>, vector<4x16x144xbf16>
    %1 = vector.shape_cast %0 : vector<4x16x144xbf16> to vector<64x144xbf16>
    %c0_2 = arith.constant 0 : index
    %c0_3 = arith.constant 0 : index
    %2 = vector.load %arg2[%c0_2, %c0_3] : memref<144x32xbf16, #tpu.memory_space<vmem>>, vector<144x32xbf16>
    %cst = arith.constant dense<0.000000e+00> : vector<64x32xf32>
    %3 = tpu.matmul %1, %2, %cst {dimension_numbers = #tpu.dot_dimension_numbers<[1], [0], [0], [1], [0, 0, 1, 1], [], []>} : vector<64x144xbf16>, vector<144x32xbf16>, vector<64x32xf32> -> vector<64x32xf32>
    %4 = vector.extract_strided_slice %3 {offsets = [0, 0], sizes = [16, 32], strides = [1, 1]} : vector<64x32xf32> to vector<16x32xf32>
    %5 = vector.extract_strided_slice %3 {offsets = [16, 0], sizes = [16, 32], strides = [1, 1]} : vector<64x32xf32> to vector<16x32xf32>
    %6 = arith.maximumf %4, %5 : vector<16x32xf32>
    %7 = vector.extract_strided_slice %3 {offsets = [32, 0], sizes = [16, 32], strides = [1, 1]} : vector<64x32xf32> to vector<16x32xf32>
    %8 = vector.extract_strided_slice %3 {offsets = [48, 0], sizes = [16, 32], strides = [1, 1]} : vector<64x32xf32> to vector<16x32xf32>
    %9 = arith.maximumf %7, %8 : vector<16x32xf32>
    %10 = arith.maximumf %6, %9 : vector<16x32xf32>
    %c0_4 = arith.constant 0 : index
    %c0_5 = arith.constant 0 : index
    %11 = vector.load %arg3[%c0_4, %c0_5] : memref<1x32xf32, #tpu.memory_space<vmem>>, vector<1x32xf32>
    %12 = vector.broadcast %11 : vector<1x32xf32> to vector<16x32xf32>
    %13 = arith.addf %10, %12 : vector<16x32xf32>
    %cst_6 = arith.constant 0.000000e+00 : f32
    %14 = vector.broadcast %cst_6 : f32 to vector<16x32xf32>
    %15 = arith.maximumf %13, %14 : vector<16x32xf32>
    %c0_7 = arith.constant 0 : index
    %c0_8 = arith.constant 0 : index
    %16 = vector.load %arg4[%c0_7, %c0_8] : memref<16x32xf32, #tpu.memory_space<vmem>>, vector<16x32xf32>
    tpu.vector_store %arg4[%c0_7, %c0_8], %15 {strides = array<i32>} : memref<16x32xf32, #tpu.memory_space<vmem>>, vector<16x32xf32>,
    return
  }
  func.func @transform_0(%arg0: i32) -> (i32, i32, i32) {
    %c0_i32 = arith.constant 0 : i32
    %c0_i32_0 = arith.constant 0 : i32
    %c0_i32_1 = arith.constant 0 : i32
    return %c0_i32, %arg0, %c0_i32_0 : i32, i32, i32
  }
  func.func @transform_1(%arg0: i32) -> (i32, i32) {
    %c0_i32 = arith.constant 0 : i32
    %c0_i32_0 = arith.constant 0 : i32
    %c0_i32_1 = arith.constant 0 : i32
    return %c0_i32, %c0_i32_0 : i32, i32
  }
  func.func @transform_2(%arg0: i32) -> (i32, i32) {
    %c0_i32 = arith.constant 0 : i32
    %c0_i32_0 = arith.constant 0 : i32
    %c0_i32_1 = arith.constant 0 : i32
    return %c0_i32, %c0_i32_0 : i32, i32
  }
  func.func @transform_3(%arg0: i32) -> (i32, i32) {
    %c0_i32 = arith.constant 0 : i32
    %c0_i32_0 = arith.constant 0 : i32
    return %arg0, %c0_i32 : i32, i32
  }
}

module attributes {stable_mosaic.version = 11 : i64} {
  func.func @_lstm_stack_classifier_kernel(%arg0: memref<4x16x32xbf16, #tpu.memory_space<vmem>>, %arg1: memref<32x256xbf16, #tpu.memory_space<vmem>>, %arg2: memref<64x256xbf16, #tpu.memory_space<vmem>>, %arg3: memref<1x256xf32, #tpu.memory_space<vmem>>, %arg4: memref<32x256xbf16, #tpu.memory_space<vmem>>, %arg5: memref<64x256xbf16, #tpu.memory_space<vmem>>, %arg6: memref<1x256xf32, #tpu.memory_space<vmem>>, %arg7: memref<64x256xbf16, #tpu.memory_space<vmem>>, %arg8: memref<64x256xbf16, #tpu.memory_space<vmem>>, %arg9: memref<64x256xbf16, #tpu.memory_space<vmem>>, %arg10: memref<1x256xf32, #tpu.memory_space<vmem>>, %arg11: memref<64x256xbf16, #tpu.memory_space<vmem>>, %arg12: memref<64x256xbf16, #tpu.memory_space<vmem>>, %arg13: memref<1x256xf32, #tpu.memory_space<vmem>>, %arg14: memref<64x128xbf16, #tpu.memory_space<vmem>>, %arg15: memref<64x128xbf16, #tpu.memory_space<vmem>>, %arg16: memref<1x128xf32, #tpu.memory_space<vmem>>, %arg17: memref<128x128xbf16, #tpu.memory_space<vmem>>, %arg18: memref<1x128xf32, #tpu.memory_space<vmem>>, %arg19: memref<16x128xf32, #tpu.memory_space<vmem>>, %arg20: memref<4x16x256xf32, #tpu.memory_space<vmem>>, %arg21: memref<4x16x256xf32, #tpu.memory_space<vmem>>, %arg22: memref<4x16x64xf32, #tpu.memory_space<vmem>>, %arg23: memref<4x16x64xf32, #tpu.memory_space<vmem>>, %arg24: memref<4x16x256xf32, #tpu.memory_space<vmem>>) attributes {dimension_semantics = [], scalar_prefetch = 0 : i64, scratch_operands = 5 : i64, tpu.core_type = #tpu.core_type<tc>} {
    %c0 = arith.constant 0 : index
    %c0_0 = arith.constant 0 : index
    %c0_1 = arith.constant 0 : index
    %0 = vector.load %arg0[%c0, %c0_0, %c0_1] : memref<4x16x32xbf16, #tpu.memory_space<vmem>>, vector<4x16x32xbf16>
    %1 = vector.shape_cast %0 : vector<4x16x32xbf16> to vector<64x32xbf16>
    %c0_2 = arith.constant 0 : index
    %c0_3 = arith.constant 0 : index
    %2 = vector.load %arg1[%c0_2, %c0_3] : memref<32x256xbf16, #tpu.memory_space<vmem>>, vector<32x256xbf16>
    %cst = arith.constant dense<0.000000e+00> : vector<64x256xf32>
    %3 = tpu.matmul %1, %2, %cst {dimension_numbers = #tpu.dot_dimension_numbers<[1], [0], [0], [1], [0, 0, 1, 1], [], []>} : vector<64x32xbf16>, vector<32x256xbf16>, vector<64x256xf32> -> vector<64x256xf32>
    %c0_4 = arith.constant 0 : index
    %c0_5 = arith.constant 0 : index
    %4 = vector.load %arg3[%c0_4, %c0_5] : memref<1x256xf32, #tpu.memory_space<vmem>>, vector<1x256xf32>
    %5 = vector.broadcast %4 : vector<1x256xf32> to vector<64x256xf32>
    %6 = arith.addf %3, %5 : vector<64x256xf32>
    %7 = vector.shape_cast %6 : vector<64x256xf32> to vector<4x16x256xf32>
    %c0_6 = arith.constant 0 : index
    %c0_7 = arith.constant 0 : index
    %c0_8 = arith.constant 0 : index
    %8 = vector.load %arg20[%c0_6, %c0_7, %c0_8] : memref<4x16x256xf32, #tpu.memory_space<vmem>>, vector<4x16x256xf32>
    tpu.vector_store %arg20[%c0_6, %c0_7, %c0_8], %7 {strides = array<i32>} : memref<4x16x256xf32, #tpu.memory_space<vmem>>, vector<4x16x256xf32>,
    %c0_9 = arith.constant 0 : index
    %c0_10 = arith.constant 0 : index
    %9 = vector.load %arg4[%c0_9, %c0_10] : memref<32x256xbf16, #tpu.memory_space<vmem>>, vector<32x256xbf16>
    %cst_11 = arith.constant dense<0.000000e+00> : vector<64x256xf32>
    %10 = tpu.matmul %1, %9, %cst_11 {dimension_numbers = #tpu.dot_dimension_numbers<[1], [0], [0], [1], [0, 0, 1, 1], [], []>} : vector<64x32xbf16>, vector<32x256xbf16>, vector<64x256xf32> -> vector<64x256xf32>
    %c0_12 = arith.constant 0 : index
    %c0_13 = arith.constant 0 : index
    %11 = vector.load %arg6[%c0_12, %c0_13] : memref<1x256xf32, #tpu.memory_space<vmem>>, vector<1x256xf32>
    %12 = vector.broadcast %11 : vector<1x256xf32> to vector<64x256xf32>
    %13 = arith.addf %10, %12 : vector<64x256xf32>
    %14 = vector.shape_cast %13 : vector<64x256xf32> to vector<4x16x256xf32>
    %c0_14 = arith.constant 0 : index
    %c0_15 = arith.constant 0 : index
    %c0_16 = arith.constant 0 : index
    %15 = vector.load %arg21[%c0_14, %c0_15, %c0_16] : memref<4x16x256xf32, #tpu.memory_space<vmem>>, vector<4x16x256xf32>
    tpu.vector_store %arg21[%c0_14, %c0_15, %c0_16], %14 {strides = array<i32>} : memref<4x16x256xf32, #tpu.memory_space<vmem>>, vector<4x16x256xf32>,
    %cst_17 = arith.constant 0.000000e+00 : f32
    %16 = vector.broadcast %cst_17 : f32 to vector<16x64xf32>
    %c0_i32 = arith.constant 0 : i32
    %17 = arith.index_cast %c0_i32 : i32 to index
    %c0_18 = arith.constant 0 : index
    %c0_19 = arith.constant 0 : index
    %18 = vector.load %arg20[%17, %c0_18, %c0_19] : memref<4x16x256xf32, #tpu.memory_space<vmem>>, vector<1x16x256xf32>
    %19 = vector.shape_cast %18 : vector<1x16x256xf32> to vector<16x256xf32>
    %20 = arith.truncf %16 : vector<16x64xf32> to vector<16x64xbf16>
    %c0_20 = arith.constant 0 : index
    %c0_21 = arith.constant 0 : index
    %21 = vector.load %arg2[%c0_20, %c0_21] : memref<64x256xbf16, #tpu.memory_space<vmem>>, vector<64x256xbf16>
    %cst_22 = arith.constant dense<0.000000e+00> : vector<16x256xf32>
    %22 = tpu.matmul %20, %21, %cst_22 {dimension_numbers = #tpu.dot_dimension_numbers<[1], [0], [0], [1], [0, 0, 1, 1], [], []>} : vector<16x64xbf16>, vector<64x256xbf16>, vector<16x256xf32> -> vector<16x256xf32>
    %23 = arith.addf %19, %22 : vector<16x256xf32>
    %24 = vector.extract_strided_slice %23 {offsets = [0, 0], sizes = [16, 192], strides = [1, 1]} : vector<16x256xf32> to vector<16x192xf32>
    %25 = arith.negf %24 : vector<16x192xf32>
    %26 = math.exp %25 : vector<16x192xf32>
    %cst_23 = arith.constant 1.000000e+00 : f32
    %27 = vector.broadcast %cst_23 : f32 to vector<16x192xf32>
    %28 = arith.addf %27, %26 : vector<16x192xf32>
    %29 = arith.divf %27, %28 : vector<16x192xf32>
    %30 = vector.extract_strided_slice %23 {offsets = [0, 192], sizes = [16, 64], strides = [1, 1]} : vector<16x256xf32> to vector<16x64xf32>
    %31 = math.tanh %30 : vector<16x64xf32>
    %32 = vector.extract_strided_slice %29 {offsets = [0, 0], sizes = [16, 64], strides = [1, 1]} : vector<16x192xf32> to vector<16x64xf32>
    %33 = vector.extract_strided_slice %29 {offsets = [0, 64], sizes = [16, 64], strides = [1, 1]} : vector<16x192xf32> to vector<16x64xf32>
    %34 = vector.extract_strided_slice %29 {offsets = [0, 128], sizes = [16, 64], strides = [1, 1]} : vector<16x192xf32> to vector<16x64xf32>
    %35 = arith.mulf %33, %16 : vector<16x64xf32>
    %36 = arith.mulf %32, %31 : vector<16x64xf32>
    %37 = arith.addf %35, %36 : vector<16x64xf32>
    %38 = math.tanh %37 : vector<16x64xf32>
    %39 = arith.mulf %34, %38 : vector<16x64xf32>
    %c3_i32 = arith.constant 3 : i32
    %40 = arith.subi %c3_i32, %c0_i32 : i32
    %41 = arith.index_cast %40 : i32 to index
    %c0_24 = arith.constant 0 : index
    %c0_25 = arith.constant 0 : index
    %42 = vector.load %arg21[%41, %c0_24, %c0_25] : memref<4x16x256xf32, #tpu.memory_space<vmem>>, vector<1x16x256xf32>
    %43 = vector.shape_cast %42 : vector<1x16x256xf32> to vector<16x256xf32>
    %44 = arith.truncf %16 : vector<16x64xf32> to vector<16x64xbf16>
    %c0_26 = arith.constant 0 : index
    %c0_27 = arith.constant 0 : index
    %45 = vector.load %arg5[%c0_26, %c0_27] : memref<64x256xbf16, #tpu.memory_space<vmem>>, vector<64x256xbf16>
    %cst_28 = arith.constant dense<0.000000e+00> : vector<16x256xf32>
    %46 = tpu.matmul %44, %45, %cst_28 {dimension_numbers = #tpu.dot_dimension_numbers<[1], [0], [0], [1], [0, 0, 1, 1], [], []>} : vector<16x64xbf16>, vector<64x256xbf16>, vector<16x256xf32> -> vector<16x256xf32>
    %47 = arith.addf %43, %46 : vector<16x256xf32>
    %48 = vector.extract_strided_slice %47 {offsets = [0, 0], sizes = [16, 192], strides = [1, 1]} : vector<16x256xf32> to vector<16x192xf32>
    %49 = arith.negf %48 : vector<16x192xf32>
    %50 = math.exp %49 : vector<16x192xf32>
    %cst_29 = arith.constant 1.000000e+00 : f32
    %51 = vector.broadcast %cst_29 : f32 to vector<16x192xf32>
    %52 = arith.addf %51, %50 : vector<16x192xf32>
    %53 = arith.divf %51, %52 : vector<16x192xf32>
    %54 = vector.extract_strided_slice %47 {offsets = [0, 192], sizes = [16, 64], strides = [1, 1]} : vector<16x256xf32> to vector<16x64xf32>
    %55 = math.tanh %54 : vector<16x64xf32>
    %56 = vector.extract_strided_slice %53 {offsets = [0, 0], sizes = [16, 64], strides = [1, 1]} : vector<16x192xf32> to vector<16x64xf32>
    %57 = vector.extract_strided_slice %53 {offsets = [0, 64], sizes = [16, 64], strides = [1, 1]} : vector<16x192xf32> to vector<16x64xf32>
    %58 = vector.extract_strided_slice %53 {offsets = [0, 128], sizes = [16, 64], strides = [1, 1]} : vector<16x192xf32> to vector<16x64xf32>
    %59 = arith.mulf %57, %16 : vector<16x64xf32>
    %60 = arith.mulf %56, %55 : vector<16x64xf32>
    %61 = arith.addf %59, %60 : vector<16x64xf32>
    %62 = math.tanh %61 : vector<16x64xf32>
    %63 = arith.mulf %58, %62 : vector<16x64xf32>
    %64 = arith.index_cast %c0_i32 : i32 to index
    %c0_30 = arith.constant 0 : index
    %c0_31 = arith.constant 0 : index
    %65 = vector.load %arg22[%64, %c0_30, %c0_31] : memref<4x16x64xf32, #tpu.memory_space<vmem>>, vector<1x16x64xf32>
    %66 = vector.shape_cast %65 : vector<1x16x64xf32> to vector<16x64xf32>
    %67 = vector.shape_cast %39 : vector<16x64xf32> to vector<1x16x64xf32>
    tpu.vector_store %arg22[%64, %c0_30, %c0_31], %67 {strides = array<i32>} : memref<4x16x64xf32, #tpu.memory_space<vmem>>, vector<1x16x64xf32>,
    %c3_i32_32 = arith.constant 3 : i32
    %68 = arith.subi %c3_i32_32, %c0_i32 : i32
    %69 = arith.index_cast %68 : i32 to index
    %c0_33 = arith.constant 0 : index
    %c0_34 = arith.constant 0 : index
    %70 = vector.load %arg23[%69, %c0_33, %c0_34] : memref<4x16x64xf32, #tpu.memory_space<vmem>>, vector<1x16x64xf32>
    %71 = vector.shape_cast %70 : vector<1x16x64xf32> to vector<16x64xf32>
    %72 = vector.shape_cast %63 : vector<16x64xf32> to vector<1x16x64xf32>
    tpu.vector_store %arg23[%69, %c0_33, %c0_34], %72 {strides = array<i32>} : memref<4x16x64xf32, #tpu.memory_space<vmem>>, vector<1x16x64xf32>,
    %c1_i32 = arith.constant 1 : i32
    %73 = arith.index_cast %c1_i32 : i32 to index
    %c0_35 = arith.constant 0 : index
    %c0_36 = arith.constant 0 : index
    %74 = vector.load %arg20[%73, %c0_35, %c0_36] : memref<4x16x256xf32, #tpu.memory_space<vmem>>, vector<1x16x256xf32>
    %75 = vector.shape_cast %74 : vector<1x16x256xf32> to vector<16x256xf32>
    %76 = arith.truncf %39 : vector<16x64xf32> to vector<16x64xbf16>
    %c0_37 = arith.constant 0 : index
    %c0_38 = arith.constant 0 : index
    %77 = vector.load %arg2[%c0_37, %c0_38] : memref<64x256xbf16, #tpu.memory_space<vmem>>, vector<64x256xbf16>
    %cst_39 = arith.constant dense<0.000000e+00> : vector<16x256xf32>
    %78 = tpu.matmul %76, %77, %cst_39 {dimension_numbers = #tpu.dot_dimension_numbers<[1], [0], [0], [1], [0, 0, 1, 1], [], []>} : vector<16x64xbf16>, vector<64x256xbf16>, vector<16x256xf32> -> vector<16x256xf32>
    %79 = arith.addf %75, %78 : vector<16x256xf32>
    %80 = vector.extract_strided_slice %79 {offsets = [0, 0], sizes = [16, 192], strides = [1, 1]} : vector<16x256xf32> to vector<16x192xf32>
    %81 = arith.negf %80 : vector<16x192xf32>
    %82 = math.exp %81 : vector<16x192xf32>
    %cst_40 = arith.constant 1.000000e+00 : f32
    %83 = vector.broadcast %cst_40 : f32 to vector<16x192xf32>
    %84 = arith.addf %83, %82 : vector<16x192xf32>
    %85 = arith.divf %83, %84 : vector<16x192xf32>
    %86 = vector.extract_strided_slice %79 {offsets = [0, 192], sizes = [16, 64], strides = [1, 1]} : vector<16x256xf32> to vector<16x64xf32>
    %87 = math.tanh %86 : vector<16x64xf32>
    %88 = vector.extract_strided_slice %85 {offsets = [0, 0], sizes = [16, 64], strides = [1, 1]} : vector<16x192xf32> to vector<16x64xf32>
    %89 = vector.extract_strided_slice %85 {offsets = [0, 64], sizes = [16, 64], strides = [1, 1]} : vector<16x192xf32> to vector<16x64xf32>
    %90 = vector.extract_strided_slice %85 {offsets = [0, 128], sizes = [16, 64], strides = [1, 1]} : vector<16x192xf32> to vector<16x64xf32>
    %91 = arith.mulf %89, %37 : vector<16x64xf32>
    %92 = arith.mulf %88, %87 : vector<16x64xf32>
    %93 = arith.addf %91, %92 : vector<16x64xf32>
    %94 = math.tanh %93 : vector<16x64xf32>
    %95 = arith.mulf %90, %94 : vector<16x64xf32>
    %c3_i32_41 = arith.constant 3 : i32
    %96 = arith.subi %c3_i32_41, %c1_i32 : i32
    %97 = arith.index_cast %96 : i32 to index
    %c0_42 = arith.constant 0 : index
    %c0_43 = arith.constant 0 : index
    %98 = vector.load %arg21[%97, %c0_42, %c0_43] : memref<4x16x256xf32, #tpu.memory_space<vmem>>, vector<1x16x256xf32>
    %99 = vector.shape_cast %98 : vector<1x16x256xf32> to vector<16x256xf32>
    %100 = arith.truncf %63 : vector<16x64xf32> to vector<16x64xbf16>
    %c0_44 = arith.constant 0 : index
    %c0_45 = arith.constant 0 : index
    %101 = vector.load %arg5[%c0_44, %c0_45] : memref<64x256xbf16, #tpu.memory_space<vmem>>, vector<64x256xbf16>
    %cst_46 = arith.constant dense<0.000000e+00> : vector<16x256xf32>
    %102 = tpu.matmul %100, %101, %cst_46 {dimension_numbers = #tpu.dot_dimension_numbers<[1], [0], [0], [1], [0, 0, 1, 1], [], []>} : vector<16x64xbf16>, vector<64x256xbf16>, vector<16x256xf32> -> vector<16x256xf32>
    %103 = arith.addf %99, %102 : vector<16x256xf32>
    %104 = vector.extract_strided_slice %103 {offsets = [0, 0], sizes = [16, 192], strides = [1, 1]} : vector<16x256xf32> to vector<16x192xf32>
    %105 = arith.negf %104 : vector<16x192xf32>
    %106 = math.exp %105 : vector<16x192xf32>
    %cst_47 = arith.constant 1.000000e+00 : f32
    %107 = vector.broadcast %cst_47 : f32 to vector<16x192xf32>
    %108 = arith.addf %107, %106 : vector<16x192xf32>
    %109 = arith.divf %107, %108 : vector<16x192xf32>
    %110 = vector.extract_strided_slice %103 {offsets = [0, 192], sizes = [16, 64], strides = [1, 1]} : vector<16x256xf32> to vector<16x64xf32>
    %111 = math.tanh %110 : vector<16x64xf32>
    %112 = vector.extract_strided_slice %109 {offsets = [0, 0], sizes = [16, 64], strides = [1, 1]} : vector<16x192xf32> to vector<16x64xf32>
    %113 = vector.extract_strided_slice %109 {offsets = [0, 64], sizes = [16, 64], strides = [1, 1]} : vector<16x192xf32> to vector<16x64xf32>
    %114 = vector.extract_strided_slice %109 {offsets = [0, 128], sizes = [16, 64], strides = [1, 1]} : vector<16x192xf32> to vector<16x64xf32>
    %115 = arith.mulf %113, %61 : vector<16x64xf32>
    %116 = arith.mulf %112, %111 : vector<16x64xf32>
    %117 = arith.addf %115, %116 : vector<16x64xf32>
    %118 = math.tanh %117 : vector<16x64xf32>
    %119 = arith.mulf %114, %118 : vector<16x64xf32>
    %120 = arith.index_cast %c1_i32 : i32 to index
    %c0_48 = arith.constant 0 : index
    %c0_49 = arith.constant 0 : index
    %121 = vector.load %arg22[%120, %c0_48, %c0_49] : memref<4x16x64xf32, #tpu.memory_space<vmem>>, vector<1x16x64xf32>
    %122 = vector.shape_cast %121 : vector<1x16x64xf32> to vector<16x64xf32>
    %123 = vector.shape_cast %95 : vector<16x64xf32> to vector<1x16x64xf32>
    tpu.vector_store %arg22[%120, %c0_48, %c0_49], %123 {strides = array<i32>} : memref<4x16x64xf32, #tpu.memory_space<vmem>>, vector<1x16x64xf32>,
    %c3_i32_50 = arith.constant 3 : i32
    %124 = arith.subi %c3_i32_50, %c1_i32 : i32
    %125 = arith.index_cast %124 : i32 to index
    %c0_51 = arith.constant 0 : index
    %c0_52 = arith.constant 0 : index
    %126 = vector.load %arg23[%125, %c0_51, %c0_52] : memref<4x16x64xf32, #tpu.memory_space<vmem>>, vector<1x16x64xf32>
    %127 = vector.shape_cast %126 : vector<1x16x64xf32> to vector<16x64xf32>
    %128 = vector.shape_cast %119 : vector<16x64xf32> to vector<1x16x64xf32>
    tpu.vector_store %arg23[%125, %c0_51, %c0_52], %128 {strides = array<i32>} : memref<4x16x64xf32, #tpu.memory_space<vmem>>, vector<1x16x64xf32>,
    %c2_i32 = arith.constant 2 : i32
    %129 = arith.index_cast %c2_i32 : i32 to index
    %c0_53 = arith.constant 0 : index
    %c0_54 = arith.constant 0 : index
    %130 = vector.load %arg20[%129, %c0_53, %c0_54] : memref<4x16x256xf32, #tpu.memory_space<vmem>>, vector<1x16x256xf32>
    %131 = vector.shape_cast %130 : vector<1x16x256xf32> to vector<16x256xf32>
    %132 = arith.truncf %95 : vector<16x64xf32> to vector<16x64xbf16>
    %c0_55 = arith.constant 0 : index
    %c0_56 = arith.constant 0 : index
    %133 = vector.load %arg2[%c0_55, %c0_56] : memref<64x256xbf16, #tpu.memory_space<vmem>>, vector<64x256xbf16>
    %cst_57 = arith.constant dense<0.000000e+00> : vector<16x256xf32>
    %134 = tpu.matmul %132, %133, %cst_57 {dimension_numbers = #tpu.dot_dimension_numbers<[1], [0], [0], [1], [0, 0, 1, 1], [], []>} : vector<16x64xbf16>, vector<64x256xbf16>, vector<16x256xf32> -> vector<16x256xf32>
    %135 = arith.addf %131, %134 : vector<16x256xf32>
    %136 = vector.extract_strided_slice %135 {offsets = [0, 0], sizes = [16, 192], strides = [1, 1]} : vector<16x256xf32> to vector<16x192xf32>
    %137 = arith.negf %136 : vector<16x192xf32>
    %138 = math.exp %137 : vector<16x192xf32>
    %cst_58 = arith.constant 1.000000e+00 : f32
    %139 = vector.broadcast %cst_58 : f32 to vector<16x192xf32>
    %140 = arith.addf %139, %138 : vector<16x192xf32>
    %141 = arith.divf %139, %140 : vector<16x192xf32>
    %142 = vector.extract_strided_slice %135 {offsets = [0, 192], sizes = [16, 64], strides = [1, 1]} : vector<16x256xf32> to vector<16x64xf32>
    %143 = math.tanh %142 : vector<16x64xf32>
    %144 = vector.extract_strided_slice %141 {offsets = [0, 0], sizes = [16, 64], strides = [1, 1]} : vector<16x192xf32> to vector<16x64xf32>
    %145 = vector.extract_strided_slice %141 {offsets = [0, 64], sizes = [16, 64], strides = [1, 1]} : vector<16x192xf32> to vector<16x64xf32>
    %146 = vector.extract_strided_slice %141 {offsets = [0, 128], sizes = [16, 64], strides = [1, 1]} : vector<16x192xf32> to vector<16x64xf32>
    %147 = arith.mulf %145, %93 : vector<16x64xf32>
    %148 = arith.mulf %144, %143 : vector<16x64xf32>
    %149 = arith.addf %147, %148 : vector<16x64xf32>
    %150 = math.tanh %149 : vector<16x64xf32>
    %151 = arith.mulf %146, %150 : vector<16x64xf32>
    %c3_i32_59 = arith.constant 3 : i32
    %152 = arith.subi %c3_i32_59, %c2_i32 : i32
    %153 = arith.index_cast %152 : i32 to index
    %c0_60 = arith.constant 0 : index
    %c0_61 = arith.constant 0 : index
    %154 = vector.load %arg21[%153, %c0_60, %c0_61] : memref<4x16x256xf32, #tpu.memory_space<vmem>>, vector<1x16x256xf32>
    %155 = vector.shape_cast %154 : vector<1x16x256xf32> to vector<16x256xf32>
    %156 = arith.truncf %119 : vector<16x64xf32> to vector<16x64xbf16>
    %c0_62 = arith.constant 0 : index
    %c0_63 = arith.constant 0 : index
    %157 = vector.load %arg5[%c0_62, %c0_63] : memref<64x256xbf16, #tpu.memory_space<vmem>>, vector<64x256xbf16>
    %cst_64 = arith.constant dense<0.000000e+00> : vector<16x256xf32>
    %158 = tpu.matmul %156, %157, %cst_64 {dimension_numbers = #tpu.dot_dimension_numbers<[1], [0], [0], [1], [0, 0, 1, 1], [], []>} : vector<16x64xbf16>, vector<64x256xbf16>, vector<16x256xf32> -> vector<16x256xf32>
    %159 = arith.addf %155, %158 : vector<16x256xf32>
    %160 = vector.extract_strided_slice %159 {offsets = [0, 0], sizes = [16, 192], strides = [1, 1]} : vector<16x256xf32> to vector<16x192xf32>
    %161 = arith.negf %160 : vector<16x192xf32>
    %162 = math.exp %161 : vector<16x192xf32>
    %cst_65 = arith.constant 1.000000e+00 : f32
    %163 = vector.broadcast %cst_65 : f32 to vector<16x192xf32>
    %164 = arith.addf %163, %162 : vector<16x192xf32>
    %165 = arith.divf %163, %164 : vector<16x192xf32>
    %166 = vector.extract_strided_slice %159 {offsets = [0, 192], sizes = [16, 64], strides = [1, 1]} : vector<16x256xf32> to vector<16x64xf32>
    %167 = math.tanh %166 : vector<16x64xf32>
    %168 = vector.extract_strided_slice %165 {offsets = [0, 0], sizes = [16, 64], strides = [1, 1]} : vector<16x192xf32> to vector<16x64xf32>
    %169 = vector.extract_strided_slice %165 {offsets = [0, 64], sizes = [16, 64], strides = [1, 1]} : vector<16x192xf32> to vector<16x64xf32>
    %170 = vector.extract_strided_slice %165 {offsets = [0, 128], sizes = [16, 64], strides = [1, 1]} : vector<16x192xf32> to vector<16x64xf32>
    %171 = arith.mulf %169, %117 : vector<16x64xf32>
    %172 = arith.mulf %168, %167 : vector<16x64xf32>
    %173 = arith.addf %171, %172 : vector<16x64xf32>
    %174 = math.tanh %173 : vector<16x64xf32>
    %175 = arith.mulf %170, %174 : vector<16x64xf32>
    %176 = arith.index_cast %c2_i32 : i32 to index
    %c0_66 = arith.constant 0 : index
    %c0_67 = arith.constant 0 : index
    %177 = vector.load %arg22[%176, %c0_66, %c0_67] : memref<4x16x64xf32, #tpu.memory_space<vmem>>, vector<1x16x64xf32>
    %178 = vector.shape_cast %177 : vector<1x16x64xf32> to vector<16x64xf32>
    %179 = vector.shape_cast %151 : vector<16x64xf32> to vector<1x16x64xf32>
    tpu.vector_store %arg22[%176, %c0_66, %c0_67], %179 {strides = array<i32>} : memref<4x16x64xf32, #tpu.memory_space<vmem>>, vector<1x16x64xf32>,
    %c3_i32_68 = arith.constant 3 : i32
    %180 = arith.subi %c3_i32_68, %c2_i32 : i32
    %181 = arith.index_cast %180 : i32 to index
    %c0_69 = arith.constant 0 : index
    %c0_70 = arith.constant 0 : index
    %182 = vector.load %arg23[%181, %c0_69, %c0_70] : memref<4x16x64xf32, #tpu.memory_space<vmem>>, vector<1x16x64xf32>
    %183 = vector.shape_cast %182 : vector<1x16x64xf32> to vector<16x64xf32>
    %184 = vector.shape_cast %175 : vector<16x64xf32> to vector<1x16x64xf32>
    tpu.vector_store %arg23[%181, %c0_69, %c0_70], %184 {strides = array<i32>} : memref<4x16x64xf32, #tpu.memory_space<vmem>>, vector<1x16x64xf32>,
    %c3_i32_71 = arith.constant 3 : i32
    %185 = arith.index_cast %c3_i32_71 : i32 to index
    %c0_72 = arith.constant 0 : index
    %c0_73 = arith.constant 0 : index
    %186 = vector.load %arg20[%185, %c0_72, %c0_73] : memref<4x16x256xf32, #tpu.memory_space<vmem>>, vector<1x16x256xf32>
    %187 = vector.shape_cast %186 : vector<1x16x256xf32> to vector<16x256xf32>
    %188 = arith.truncf %151 : vector<16x64xf32> to vector<16x64xbf16>
    %c0_74 = arith.constant 0 : index
    %c0_75 = arith.constant 0 : index
    %189 = vector.load %arg2[%c0_74, %c0_75] : memref<64x256xbf16, #tpu.memory_space<vmem>>, vector<64x256xbf16>
    %cst_76 = arith.constant dense<0.000000e+00> : vector<16x256xf32>
    %190 = tpu.matmul %188, %189, %cst_76 {dimension_numbers = #tpu.dot_dimension_numbers<[1], [0], [0], [1], [0, 0, 1, 1], [], []>} : vector<16x64xbf16>, vector<64x256xbf16>, vector<16x256xf32> -> vector<16x256xf32>
    %191 = arith.addf %187, %190 : vector<16x256xf32>
    %192 = vector.extract_strided_slice %191 {offsets = [0, 0], sizes = [16, 192], strides = [1, 1]} : vector<16x256xf32> to vector<16x192xf32>
    %193 = arith.negf %192 : vector<16x192xf32>
    %194 = math.exp %193 : vector<16x192xf32>
    %cst_77 = arith.constant 1.000000e+00 : f32
    %195 = vector.broadcast %cst_77 : f32 to vector<16x192xf32>
    %196 = arith.addf %195, %194 : vector<16x192xf32>
    %197 = arith.divf %195, %196 : vector<16x192xf32>
    %198 = vector.extract_strided_slice %191 {offsets = [0, 192], sizes = [16, 64], strides = [1, 1]} : vector<16x256xf32> to vector<16x64xf32>
    %199 = math.tanh %198 : vector<16x64xf32>
    %200 = vector.extract_strided_slice %197 {offsets = [0, 0], sizes = [16, 64], strides = [1, 1]} : vector<16x192xf32> to vector<16x64xf32>
    %201 = vector.extract_strided_slice %197 {offsets = [0, 64], sizes = [16, 64], strides = [1, 1]} : vector<16x192xf32> to vector<16x64xf32>
    %202 = vector.extract_strided_slice %197 {offsets = [0, 128], sizes = [16, 64], strides = [1, 1]} : vector<16x192xf32> to vector<16x64xf32>
    %203 = arith.mulf %201, %149 : vector<16x64xf32>
    %204 = arith.mulf %200, %199 : vector<16x64xf32>
    %205 = arith.addf %203, %204 : vector<16x64xf32>
    %206 = math.tanh %205 : vector<16x64xf32>
    %207 = arith.mulf %202, %206 : vector<16x64xf32>
    %c3_i32_78 = arith.constant 3 : i32
    %208 = arith.subi %c3_i32_78, %c3_i32_71 : i32
    %209 = arith.index_cast %208 : i32 to index
    %c0_79 = arith.constant 0 : index
    %c0_80 = arith.constant 0 : index
    %210 = vector.load %arg21[%209, %c0_79, %c0_80] : memref<4x16x256xf32, #tpu.memory_space<vmem>>, vector<1x16x256xf32>
    %211 = vector.shape_cast %210 : vector<1x16x256xf32> to vector<16x256xf32>
    %212 = arith.truncf %175 : vector<16x64xf32> to vector<16x64xbf16>
    %c0_81 = arith.constant 0 : index
    %c0_82 = arith.constant 0 : index
    %213 = vector.load %arg5[%c0_81, %c0_82] : memref<64x256xbf16, #tpu.memory_space<vmem>>, vector<64x256xbf16>
    %cst_83 = arith.constant dense<0.000000e+00> : vector<16x256xf32>
    %214 = tpu.matmul %212, %213, %cst_83 {dimension_numbers = #tpu.dot_dimension_numbers<[1], [0], [0], [1], [0, 0, 1, 1], [], []>} : vector<16x64xbf16>, vector<64x256xbf16>, vector<16x256xf32> -> vector<16x256xf32>
    %215 = arith.addf %211, %214 : vector<16x256xf32>
    %216 = vector.extract_strided_slice %215 {offsets = [0, 0], sizes = [16, 192], strides = [1, 1]} : vector<16x256xf32> to vector<16x192xf32>
    %217 = arith.negf %216 : vector<16x192xf32>
    %218 = math.exp %217 : vector<16x192xf32>
    %cst_84 = arith.constant 1.000000e+00 : f32
    %219 = vector.broadcast %cst_84 : f32 to vector<16x192xf32>
    %220 = arith.addf %219, %218 : vector<16x192xf32>
    %221 = arith.divf %219, %220 : vector<16x192xf32>
    %222 = vector.extract_strided_slice %215 {offsets = [0, 192], sizes = [16, 64], strides = [1, 1]} : vector<16x256xf32> to vector<16x64xf32>
    %223 = math.tanh %222 : vector<16x64xf32>
    %224 = vector.extract_strided_slice %221 {offsets = [0, 0], sizes = [16, 64], strides = [1, 1]} : vector<16x192xf32> to vector<16x64xf32>
    %225 = vector.extract_strided_slice %221 {offsets = [0, 64], sizes = [16, 64], strides = [1, 1]} : vector<16x192xf32> to vector<16x64xf32>
    %226 = vector.extract_strided_slice %221 {offsets = [0, 128], sizes = [16, 64], strides = [1, 1]} : vector<16x192xf32> to vector<16x64xf32>
    %227 = arith.mulf %225, %173 : vector<16x64xf32>
    %228 = arith.mulf %224, %223 : vector<16x64xf32>
    %229 = arith.addf %227, %228 : vector<16x64xf32>
    %230 = math.tanh %229 : vector<16x64xf32>
    %231 = arith.mulf %226, %230 : vector<16x64xf32>
    %232 = arith.index_cast %c3_i32_71 : i32 to index
    %c0_85 = arith.constant 0 : index
    %c0_86 = arith.constant 0 : index
    %233 = vector.load %arg22[%232, %c0_85, %c0_86] : memref<4x16x64xf32, #tpu.memory_space<vmem>>, vector<1x16x64xf32>
    %234 = vector.shape_cast %233 : vector<1x16x64xf32> to vector<16x64xf32>
    %235 = vector.shape_cast %207 : vector<16x64xf32> to vector<1x16x64xf32>
    tpu.vector_store %arg22[%232, %c0_85, %c0_86], %235 {strides = array<i32>} : memref<4x16x64xf32, #tpu.memory_space<vmem>>, vector<1x16x64xf32>,
    %c3_i32_87 = arith.constant 3 : i32
    %236 = arith.subi %c3_i32_87, %c3_i32_71 : i32
    %237 = arith.index_cast %236 : i32 to index
    %c0_88 = arith.constant 0 : index
    %c0_89 = arith.constant 0 : index
    %238 = vector.load %arg23[%237, %c0_88, %c0_89] : memref<4x16x64xf32, #tpu.memory_space<vmem>>, vector<1x16x64xf32>
    %239 = vector.shape_cast %238 : vector<1x16x64xf32> to vector<16x64xf32>
    %240 = vector.shape_cast %231 : vector<16x64xf32> to vector<1x16x64xf32>
    tpu.vector_store %arg23[%237, %c0_88, %c0_89], %240 {strides = array<i32>} : memref<4x16x64xf32, #tpu.memory_space<vmem>>, vector<1x16x64xf32>,
    %c4_i32 = arith.constant 4 : i32
    %c0_90 = arith.constant 0 : index
    %c0_91 = arith.constant 0 : index
    %c0_92 = arith.constant 0 : index
    %241 = vector.load %arg22[%c0_90, %c0_91, %c0_92] : memref<4x16x64xf32, #tpu.memory_space<vmem>>, vector<4x16x64xf32>
    %242 = vector.shape_cast %241 : vector<4x16x64xf32> to vector<64x64xf32>
    %243 = arith.truncf %242 : vector<64x64xf32> to vector<64x64xbf16>
    %c0_93 = arith.constant 0 : index
    %c0_94 = arith.constant 0 : index
    %c0_95 = arith.constant 0 : index
    %244 = vector.load %arg23[%c0_93, %c0_94, %c0_95] : memref<4x16x64xf32, #tpu.memory_space<vmem>>, vector<4x16x64xf32>
    %245 = vector.shape_cast %244 : vector<4x16x64xf32> to vector<64x64xf32>
    %246 = arith.truncf %245 : vector<64x64xf32> to vector<64x64xbf16>
    %c0_96 = arith.constant 0 : index
    %c0_97 = arith.constant 0 : index
    %247 = vector.load %arg7[%c0_96, %c0_97] : memref<64x256xbf16, #tpu.memory_space<vmem>>, vector<64x256xbf16>
    %cst_98 = arith.constant dense<0.000000e+00> : vector<64x256xf32>
    %248 = tpu.matmul %243, %247, %cst_98 {dimension_numbers = #tpu.dot_dimension_numbers<[1], [0], [0], [1], [0, 0, 1, 1], [], []>} : vector<64x64xbf16>, vector<64x256xbf16>, vector<64x256xf32> -> vector<64x256xf32>
    %c0_99 = arith.constant 0 : index
    %c0_100 = arith.constant 0 : index
    %249 = vector.load %arg8[%c0_99, %c0_100] : memref<64x256xbf16, #tpu.memory_space<vmem>>, vector<64x256xbf16>
    %cst_101 = arith.constant dense<0.000000e+00> : vector<64x256xf32>
    %250 = tpu.matmul %246, %249, %cst_101 {dimension_numbers = #tpu.dot_dimension_numbers<[1], [0], [0], [1], [0, 0, 1, 1], [], []>} : vector<64x64xbf16>, vector<64x256xbf16>, vector<64x256xf32> -> vector<64x256xf32>
    %251 = arith.addf %248, %250 : vector<64x256xf32>
    %c0_102 = arith.constant 0 : index
    %c0_103 = arith.constant 0 : index
    %252 = vector.load %arg10[%c0_102, %c0_103] : memref<1x256xf32, #tpu.memory_space<vmem>>, vector<1x256xf32>
    %253 = vector.broadcast %252 : vector<1x256xf32> to vector<64x256xf32>
    %254 = arith.addf %251, %253 : vector<64x256xf32>
    %255 = vector.shape_cast %254 : vector<64x256xf32> to vector<4x16x256xf32>
    %c0_104 = arith.constant 0 : index
    %c0_105 = arith.constant 0 : index
    %c0_106 = arith.constant 0 : index
    %256 = vector.load %arg24[%c0_104, %c0_105, %c0_106] : memref<4x16x256xf32, #tpu.memory_space<vmem>>, vector<4x16x256xf32>
    tpu.vector_store %arg24[%c0_104, %c0_105, %c0_106], %255 {strides = array<i32>} : memref<4x16x256xf32, #tpu.memory_space<vmem>>, vector<4x16x256xf32>,
    %c0_i32_107 = arith.constant 0 : i32
    %257 = arith.index_cast %c0_i32_107 : i32 to index
    %c0_108 = arith.constant 0 : index
    %c0_109 = arith.constant 0 : index
    %258 = vector.load %arg24[%257, %c0_108, %c0_109] : memref<4x16x256xf32, #tpu.memory_space<vmem>>, vector<1x16x256xf32>
    %259 = vector.shape_cast %258 : vector<1x16x256xf32> to vector<16x256xf32>
    %260 = arith.truncf %16 : vector<16x64xf32> to vector<16x64xbf16>
    %c0_110 = arith.constant 0 : index
    %c0_111 = arith.constant 0 : index
    %261 = vector.load %arg9[%c0_110, %c0_111] : memref<64x256xbf16, #tpu.memory_space<vmem>>, vector<64x256xbf16>
    %cst_112 = arith.constant dense<0.000000e+00> : vector<16x256xf32>
    %262 = tpu.matmul %260, %261, %cst_112 {dimension_numbers = #tpu.dot_dimension_numbers<[1], [0], [0], [1], [0, 0, 1, 1], [], []>} : vector<16x64xbf16>, vector<64x256xbf16>, vector<16x256xf32> -> vector<16x256xf32>
    %263 = arith.addf %259, %262 : vector<16x256xf32>
    %264 = vector.extract_strided_slice %263 {offsets = [0, 0], sizes = [16, 192], strides = [1, 1]} : vector<16x256xf32> to vector<16x192xf32>
    %265 = arith.negf %264 : vector<16x192xf32>
    %266 = math.exp %265 : vector<16x192xf32>
    %cst_113 = arith.constant 1.000000e+00 : f32
    %267 = vector.broadcast %cst_113 : f32 to vector<16x192xf32>
    %268 = arith.addf %267, %266 : vector<16x192xf32>
    %269 = arith.divf %267, %268 : vector<16x192xf32>
    %270 = vector.extract_strided_slice %263 {offsets = [0, 192], sizes = [16, 64], strides = [1, 1]} : vector<16x256xf32> to vector<16x64xf32>
    %271 = math.tanh %270 : vector<16x64xf32>
    %272 = vector.extract_strided_slice %269 {offsets = [0, 0], sizes = [16, 64], strides = [1, 1]} : vector<16x192xf32> to vector<16x64xf32>
    %273 = vector.extract_strided_slice %269 {offsets = [0, 64], sizes = [16, 64], strides = [1, 1]} : vector<16x192xf32> to vector<16x64xf32>
    %274 = vector.extract_strided_slice %269 {offsets = [0, 128], sizes = [16, 64], strides = [1, 1]} : vector<16x192xf32> to vector<16x64xf32>
    %275 = arith.mulf %273, %16 : vector<16x64xf32>
    %276 = arith.mulf %272, %271 : vector<16x64xf32>
    %277 = arith.addf %275, %276 : vector<16x64xf32>
    %278 = math.tanh %277 : vector<16x64xf32>
    %279 = arith.mulf %274, %278 : vector<16x64xf32>
    %c1_i32_114 = arith.constant 1 : i32
    %280 = arith.index_cast %c1_i32_114 : i32 to index
    %c0_115 = arith.constant 0 : index
    %c0_116 = arith.constant 0 : index
    %281 = vector.load %arg24[%280, %c0_115, %c0_116] : memref<4x16x256xf32, #tpu.memory_space<vmem>>, vector<1x16x256xf32>
    %282 = vector.shape_cast %281 : vector<1x16x256xf32> to vector<16x256xf32>
    %283 = arith.truncf %279 : vector<16x64xf32> to vector<16x64xbf16>
    %c0_117 = arith.constant 0 : index
    %c0_118 = arith.constant 0 : index
    %284 = vector.load %arg9[%c0_117, %c0_118] : memref<64x256xbf16, #tpu.memory_space<vmem>>, vector<64x256xbf16>
    %cst_119 = arith.constant dense<0.000000e+00> : vector<16x256xf32>
    %285 = tpu.matmul %283, %284, %cst_119 {dimension_numbers = #tpu.dot_dimension_numbers<[1], [0], [0], [1], [0, 0, 1, 1], [], []>} : vector<16x64xbf16>, vector<64x256xbf16>, vector<16x256xf32> -> vector<16x256xf32>
    %286 = arith.addf %282, %285 : vector<16x256xf32>
    %287 = vector.extract_strided_slice %286 {offsets = [0, 0], sizes = [16, 192], strides = [1, 1]} : vector<16x256xf32> to vector<16x192xf32>
    %288 = arith.negf %287 : vector<16x192xf32>
    %289 = math.exp %288 : vector<16x192xf32>
    %cst_120 = arith.constant 1.000000e+00 : f32
    %290 = vector.broadcast %cst_120 : f32 to vector<16x192xf32>
    %291 = arith.addf %290, %289 : vector<16x192xf32>
    %292 = arith.divf %290, %291 : vector<16x192xf32>
    %293 = vector.extract_strided_slice %286 {offsets = [0, 192], sizes = [16, 64], strides = [1, 1]} : vector<16x256xf32> to vector<16x64xf32>
    %294 = math.tanh %293 : vector<16x64xf32>
    %295 = vector.extract_strided_slice %292 {offsets = [0, 0], sizes = [16, 64], strides = [1, 1]} : vector<16x192xf32> to vector<16x64xf32>
    %296 = vector.extract_strided_slice %292 {offsets = [0, 64], sizes = [16, 64], strides = [1, 1]} : vector<16x192xf32> to vector<16x64xf32>
    %297 = vector.extract_strided_slice %292 {offsets = [0, 128], sizes = [16, 64], strides = [1, 1]} : vector<16x192xf32> to vector<16x64xf32>
    %298 = arith.mulf %296, %277 : vector<16x64xf32>
    %299 = arith.mulf %295, %294 : vector<16x64xf32>
    %300 = arith.addf %298, %299 : vector<16x64xf32>
    %301 = math.tanh %300 : vector<16x64xf32>
    %302 = arith.mulf %297, %301 : vector<16x64xf32>
    %c2_i32_121 = arith.constant 2 : i32
    %303 = arith.index_cast %c2_i32_121 : i32 to index
    %c0_122 = arith.constant 0 : index
    %c0_123 = arith.constant 0 : index
    %304 = vector.load %arg24[%303, %c0_122, %c0_123] : memref<4x16x256xf32, #tpu.memory_space<vmem>>, vector<1x16x256xf32>
    %305 = vector.shape_cast %304 : vector<1x16x256xf32> to vector<16x256xf32>
    %306 = arith.truncf %302 : vector<16x64xf32> to vector<16x64xbf16>
    %c0_124 = arith.constant 0 : index
    %c0_125 = arith.constant 0 : index
    %307 = vector.load %arg9[%c0_124, %c0_125] : memref<64x256xbf16, #tpu.memory_space<vmem>>, vector<64x256xbf16>
    %cst_126 = arith.constant dense<0.000000e+00> : vector<16x256xf32>
    %308 = tpu.matmul %306, %307, %cst_126 {dimension_numbers = #tpu.dot_dimension_numbers<[1], [0], [0], [1], [0, 0, 1, 1], [], []>} : vector<16x64xbf16>, vector<64x256xbf16>, vector<16x256xf32> -> vector<16x256xf32>
    %309 = arith.addf %305, %308 : vector<16x256xf32>
    %310 = vector.extract_strided_slice %309 {offsets = [0, 0], sizes = [16, 192], strides = [1, 1]} : vector<16x256xf32> to vector<16x192xf32>
    %311 = arith.negf %310 : vector<16x192xf32>
    %312 = math.exp %311 : vector<16x192xf32>
    %cst_127 = arith.constant 1.000000e+00 : f32
    %313 = vector.broadcast %cst_127 : f32 to vector<16x192xf32>
    %314 = arith.addf %313, %312 : vector<16x192xf32>
    %315 = arith.divf %313, %314 : vector<16x192xf32>
    %316 = vector.extract_strided_slice %309 {offsets = [0, 192], sizes = [16, 64], strides = [1, 1]} : vector<16x256xf32> to vector<16x64xf32>
    %317 = math.tanh %316 : vector<16x64xf32>
    %318 = vector.extract_strided_slice %315 {offsets = [0, 0], sizes = [16, 64], strides = [1, 1]} : vector<16x192xf32> to vector<16x64xf32>
    %319 = vector.extract_strided_slice %315 {offsets = [0, 64], sizes = [16, 64], strides = [1, 1]} : vector<16x192xf32> to vector<16x64xf32>
    %320 = vector.extract_strided_slice %315 {offsets = [0, 128], sizes = [16, 64], strides = [1, 1]} : vector<16x192xf32> to vector<16x64xf32>
    %321 = arith.mulf %319, %300 : vector<16x64xf32>
    %322 = arith.mulf %318, %317 : vector<16x64xf32>
    %323 = arith.addf %321, %322 : vector<16x64xf32>
    %324 = math.tanh %323 : vector<16x64xf32>
    %325 = arith.mulf %320, %324 : vector<16x64xf32>
    %c3_i32_128 = arith.constant 3 : i32
    %326 = arith.index_cast %c3_i32_128 : i32 to index
    %c0_129 = arith.constant 0 : index
    %c0_130 = arith.constant 0 : index
    %327 = vector.load %arg24[%326, %c0_129, %c0_130] : memref<4x16x256xf32, #tpu.memory_space<vmem>>, vector<1x16x256xf32>
    %328 = vector.shape_cast %327 : vector<1x16x256xf32> to vector<16x256xf32>
    %329 = arith.truncf %325 : vector<16x64xf32> to vector<16x64xbf16>
    %c0_131 = arith.constant 0 : index
    %c0_132 = arith.constant 0 : index
    %330 = vector.load %arg9[%c0_131, %c0_132] : memref<64x256xbf16, #tpu.memory_space<vmem>>, vector<64x256xbf16>
    %cst_133 = arith.constant dense<0.000000e+00> : vector<16x256xf32>
    %331 = tpu.matmul %329, %330, %cst_133 {dimension_numbers = #tpu.dot_dimension_numbers<[1], [0], [0], [1], [0, 0, 1, 1], [], []>} : vector<16x64xbf16>, vector<64x256xbf16>, vector<16x256xf32> -> vector<16x256xf32>
    %332 = arith.addf %328, %331 : vector<16x256xf32>
    %333 = vector.extract_strided_slice %332 {offsets = [0, 0], sizes = [16, 192], strides = [1, 1]} : vector<16x256xf32> to vector<16x192xf32>
    %334 = arith.negf %333 : vector<16x192xf32>
    %335 = math.exp %334 : vector<16x192xf32>
    %cst_134 = arith.constant 1.000000e+00 : f32
    %336 = vector.broadcast %cst_134 : f32 to vector<16x192xf32>
    %337 = arith.addf %336, %335 : vector<16x192xf32>
    %338 = arith.divf %336, %337 : vector<16x192xf32>
    %339 = vector.extract_strided_slice %332 {offsets = [0, 192], sizes = [16, 64], strides = [1, 1]} : vector<16x256xf32> to vector<16x64xf32>
    %340 = math.tanh %339 : vector<16x64xf32>
    %341 = vector.extract_strided_slice %338 {offsets = [0, 0], sizes = [16, 64], strides = [1, 1]} : vector<16x192xf32> to vector<16x64xf32>
    %342 = vector.extract_strided_slice %338 {offsets = [0, 64], sizes = [16, 64], strides = [1, 1]} : vector<16x192xf32> to vector<16x64xf32>
    %343 = vector.extract_strided_slice %338 {offsets = [0, 128], sizes = [16, 64], strides = [1, 1]} : vector<16x192xf32> to vector<16x64xf32>
    %344 = arith.mulf %342, %323 : vector<16x64xf32>
    %345 = arith.mulf %341, %340 : vector<16x64xf32>
    %346 = arith.addf %344, %345 : vector<16x64xf32>
    %347 = math.tanh %346 : vector<16x64xf32>
    %348 = arith.mulf %343, %347 : vector<16x64xf32>
    %c4_i32_135 = arith.constant 4 : i32
    %c3 = arith.constant 3 : index
    %c0_136 = arith.constant 0 : index
    %c0_137 = arith.constant 0 : index
    %349 = vector.load %arg22[%c3, %c0_136, %c0_137] : memref<4x16x64xf32, #tpu.memory_space<vmem>>, vector<1x16x64xf32>
    %350 = vector.shape_cast %349 : vector<1x16x64xf32> to vector<16x64xf32>
    %351 = arith.truncf %350 : vector<16x64xf32> to vector<16x64xbf16>
    %c0_138 = arith.constant 0 : index
    %c0_139 = arith.constant 0 : index
    %352 = vector.load %arg11[%c0_138, %c0_139] : memref<64x256xbf16, #tpu.memory_space<vmem>>, vector<64x256xbf16>
    %cst_140 = arith.constant dense<0.000000e+00> : vector<16x256xf32>
    %353 = tpu.matmul %351, %352, %cst_140 {dimension_numbers = #tpu.dot_dimension_numbers<[1], [0], [0], [1], [0, 0, 1, 1], [], []>} : vector<16x64xbf16>, vector<64x256xbf16>, vector<16x256xf32> -> vector<16x256xf32>
    %c3_141 = arith.constant 3 : index
    %c0_142 = arith.constant 0 : index
    %c0_143 = arith.constant 0 : index
    %354 = vector.load %arg23[%c3_141, %c0_142, %c0_143] : memref<4x16x64xf32, #tpu.memory_space<vmem>>, vector<1x16x64xf32>
    %355 = vector.shape_cast %354 : vector<1x16x64xf32> to vector<16x64xf32>
    %356 = arith.truncf %355 : vector<16x64xf32> to vector<16x64xbf16>
    %c0_144 = arith.constant 0 : index
    %c0_145 = arith.constant 0 : index
    %357 = vector.load %arg12[%c0_144, %c0_145] : memref<64x256xbf16, #tpu.memory_space<vmem>>, vector<64x256xbf16>
    %cst_146 = arith.constant dense<0.000000e+00> : vector<16x256xf32>
    %358 = tpu.matmul %356, %357, %cst_146 {dimension_numbers = #tpu.dot_dimension_numbers<[1], [0], [0], [1], [0, 0, 1, 1], [], []>} : vector<16x64xbf16>, vector<64x256xbf16>, vector<16x256xf32> -> vector<16x256xf32>
    %359 = arith.addf %353, %358 : vector<16x256xf32>
    %c0_147 = arith.constant 0 : index
    %c0_148 = arith.constant 0 : index
    %360 = vector.load %arg13[%c0_147, %c0_148] : memref<1x256xf32, #tpu.memory_space<vmem>>, vector<1x256xf32>
    %361 = vector.broadcast %360 : vector<1x256xf32> to vector<16x256xf32>
    %362 = arith.addf %359, %361 : vector<16x256xf32>
    %363 = vector.extract_strided_slice %362 {offsets = [0, 0], sizes = [16, 192], strides = [1, 1]} : vector<16x256xf32> to vector<16x192xf32>
    %364 = arith.negf %363 : vector<16x192xf32>
    %365 = math.exp %364 : vector<16x192xf32>
    %cst_149 = arith.constant 1.000000e+00 : f32
    %366 = vector.broadcast %cst_149 : f32 to vector<16x192xf32>
    %367 = arith.addf %366, %365 : vector<16x192xf32>
    %368 = arith.divf %366, %367 : vector<16x192xf32>
    %369 = vector.extract_strided_slice %362 {offsets = [0, 192], sizes = [16, 64], strides = [1, 1]} : vector<16x256xf32> to vector<16x64xf32>
    %370 = math.tanh %369 : vector<16x64xf32>
    %371 = vector.extract_strided_slice %368 {offsets = [0, 0], sizes = [16, 64], strides = [1, 1]} : vector<16x192xf32> to vector<16x64xf32>
    %372 = vector.extract_strided_slice %368 {offsets = [0, 64], sizes = [16, 64], strides = [1, 1]} : vector<16x192xf32> to vector<16x64xf32>
    %373 = vector.extract_strided_slice %368 {offsets = [0, 128], sizes = [16, 64], strides = [1, 1]} : vector<16x192xf32> to vector<16x64xf32>
    %374 = arith.mulf %372, %16 : vector<16x64xf32>
    %375 = arith.mulf %371, %370 : vector<16x64xf32>
    %376 = arith.addf %374, %375 : vector<16x64xf32>
    %377 = math.tanh %376 : vector<16x64xf32>
    %378 = arith.mulf %373, %377 : vector<16x64xf32>
    %379 = arith.truncf %348 : vector<16x64xf32> to vector<16x64xbf16>
    %c0_150 = arith.constant 0 : index
    %c0_151 = arith.constant 0 : index
    %380 = vector.load %arg14[%c0_150, %c0_151] : memref<64x128xbf16, #tpu.memory_space<vmem>>, vector<64x128xbf16>
    %cst_152 = arith.constant dense<0.000000e+00> : vector<16x128xf32>
    %381 = tpu.matmul %379, %380, %cst_152 {dimension_numbers = #tpu.dot_dimension_numbers<[1], [0], [0], [1], [0, 0, 1, 1], [], []>} : vector<16x64xbf16>, vector<64x128xbf16>, vector<16x128xf32> -> vector<16x128xf32>
    %382 = arith.truncf %378 : vector<16x64xf32> to vector<16x64xbf16>
    %c0_153 = arith.constant 0 : index
    %c0_154 = arith.constant 0 : index
    %383 = vector.load %arg15[%c0_153, %c0_154] : memref<64x128xbf16, #tpu.memory_space<vmem>>, vector<64x128xbf16>
    %cst_155 = arith.constant dense<0.000000e+00> : vector<16x128xf32>
    %384 = tpu.matmul %382, %383, %cst_155 {dimension_numbers = #tpu.dot_dimension_numbers<[1], [0], [0], [1], [0, 0, 1, 1], [], []>} : vector<16x64xbf16>, vector<64x128xbf16>, vector<16x128xf32> -> vector<16x128xf32>
    %385 = arith.addf %381, %384 : vector<16x128xf32>
    %c0_156 = arith.constant 0 : index
    %c0_157 = arith.constant 0 : index
    %386 = vector.load %arg16[%c0_156, %c0_157] : memref<1x128xf32, #tpu.memory_space<vmem>>, vector<1x128xf32>
    %387 = vector.broadcast %386 : vector<1x128xf32> to vector<16x128xf32>
    %388 = arith.addf %385, %387 : vector<16x128xf32>
    %cst_158 = arith.constant 0.000000e+00 : f32
    %389 = vector.broadcast %cst_158 : f32 to vector<16x128xf32>
    %390 = arith.maximumf %388, %389 : vector<16x128xf32>
    %391 = arith.truncf %390 : vector<16x128xf32> to vector<16x128xbf16>
    %c0_159 = arith.constant 0 : index
    %c0_160 = arith.constant 0 : index
    %392 = vector.load %arg17[%c0_159, %c0_160] : memref<128x128xbf16, #tpu.memory_space<vmem>>, vector<128x128xbf16>
    %cst_161 = arith.constant dense<0.000000e+00> : vector<16x128xf32>
    %393 = tpu.matmul %391, %392, %cst_161 {dimension_numbers = #tpu.dot_dimension_numbers<[1], [0], [0], [1], [0, 0, 1, 1], [], []>} : vector<16x128xbf16>, vector<128x128xbf16>, vector<16x128xf32> -> vector<16x128xf32>
    %c0_162 = arith.constant 0 : index
    %c0_163 = arith.constant 0 : index
    %394 = vector.load %arg18[%c0_162, %c0_163] : memref<1x128xf32, #tpu.memory_space<vmem>>, vector<1x128xf32>
    %395 = vector.broadcast %394 : vector<1x128xf32> to vector<16x128xf32>
    %396 = arith.addf %393, %395 : vector<16x128xf32>
    %c0_164 = arith.constant 0 : index
    %c0_165 = arith.constant 0 : index
    %397 = vector.load %arg19[%c0_164, %c0_165] : memref<16x128xf32, #tpu.memory_space<vmem>>, vector<16x128xf32>
    tpu.vector_store %arg19[%c0_164, %c0_165], %396 {strides = array<i32>} : memref<16x128xf32, #tpu.memory_space<vmem>>, vector<16x128xf32>,
    return
  }
}

</mosaic_0001>

<llo_original>
// kernel: cnn_lstm_forward.3
$region0: #{cnn_lstm_forward.3}
  #allocation0 [shape = 'u32[]', space=smem, size = 0x4, offset = 0x4, fixed_abs, tag = 'smem constant byte address 0x4 - core index']
  #allocation1 [shape = 'u32[144,128]{1,0:T(1,128)}', space=vmem, size = 0x12000, scoped, tag = 'internal scratch']
  %s0 = inlined_call_operand.vmem [shape: bf16[4,32,16], index: 0, kind: input, shape index: {}]
  %s1 = inlined_call_operand.vmem [shape: bf16[16,16], index: 1, kind: input, shape index: {}]
  %s2 = inlined_call_operand.vmem [shape: f32[1,16], index: 2, kind: input, shape index: {}]
  %s3 = inlined_call_operand.vmem [shape: f32[32,16], index: 3, kind: output, shape index: {}]
  %s4 = sld [smem:[#allocation0]]
  $region22: #{cnn_lstm_forward.3} parent=0
    _
  %s6 = ssub.s32 1, %s4
  %s7 = scalar_select 0, %s6, %s4
  // Predicated region
  $region2: #{cnn_lstm_forward.3} parent=0 // pred_check
    _
  $region3: #{cnn_lstm_forward.3} parent=0 // pred_check_branch
    %9 = sbr.rel (0) target = $region5
  $region4: #{cnn_lstm_forward.3} parent=0 // pred_region
    _
  $region5: #{cnn_lstm_forward.3} parent=0 // pred_fallthru
    _
  // Predicated region
  $region6: #{cnn_lstm_forward.3} parent=0 // pred_check
    _
  $region7: #{cnn_lstm_forward.3} parent=0 // pred_check_branch
    %11 = sbr.rel (0) target = $region9
  $region8: #{cnn_lstm_forward.3} parent=0 // pred_region
    _
  $region9: #{cnn_lstm_forward.3} parent=0 // pred_fallthru
    _
  // Predicated region
  $region10: #{cnn_lstm_forward.3} parent=0 // pred_check
    _
  $region11: #{cnn_lstm_forward.3} parent=0 // pred_check_branch
    %13 = sbr.rel (0) target = $region13
  $region12: #{cnn_lstm_forward.3} parent=0 // pred_region
    _
  $region13: #{cnn_lstm_forward.3} parent=0 // pred_fallthru
    _
  %v15 = vld [vmem:[%s0] sm:$0xf]
  %v16 = vld [vmem:[%s0 + $0x4] sm:$0xf]
  %v17 = vld [vmem:[%s0 + $0x8] sm:$0xf]
  %v18 = vld [vmem:[%s0 + $0xc] sm:$0xf]
  %v19 = vld [vmem:[%s0 + $0x10] sm:$0xf]
  %v20 = vld [vmem:[%s0 + $0x14] sm:$0xf]
  %v21 = vld [vmem:[%s0 + $0x18] sm:$0xf]
  %v22 = vld [vmem:[%s0 + $0x1c] sm:$0xf]
  %v23 = vld [vmem:[%s0 + $0x20] sm:$0xf]
  %v24 = vld [vmem:[%s0 + $0x24] sm:$0xf]
  %v25 = vld [vmem:[%s0 + $0x28] sm:$0xf]
  %v26 = vld [vmem:[%s0 + $0x2c] sm:$0xf]
  %v27 = vld [vmem:[%s0 + $0x30] sm:$0xf]
  %v28 = vld [vmem:[%s0 + $0x34] sm:$0xf]
  %v29 = vld [vmem:[%s0 + $0x38] sm:$0xf]
  %v30 = vld [vmem:[%s0 + $0x3c] sm:$0xf]
  %v31 = vld [vmem:[%s1] sm:$0xf]
  %v32 = vld [vmem:[%s1 + $0x4] sm:$0xf]
  %v49 = vunpack.c.l.b16 %v15
  %v50 = vunpack.c.l.b16 %v16
  %v51 = vunpack.c.l.b16 %v17
  %v52 = vunpack.c.l.b16 %v18
  %v53 = vunpack.c.l.b16 %v19
  %v54 = vunpack.c.l.b16 %v20
  %v55 = vunpack.c.l.b16 %v21
  %v56 = vunpack.c.l.b16 %v22
  %v57 = vunpack.c.l.b16 %v23
  %v58 = vunpack.c.l.b16 %v24
  %v59 = vunpack.c.l.b16 %v25
  %v60 = vunpack.c.l.b16 %v26
  %v61 = vunpack.c.l.b16 %v27
  %v62 = vunpack.c.l.b16 %v28
  %v63 = vunpack.c.l.b16 %v29
  %v64 = vunpack.c.l.b16 %v30
  %v65 = vpack.c.b16 %v50, %v49
  %v66 = vpack.c.b16 %v52, %v51
  %v67 = vpack.c.b16 %v54, %v53
  %v68 = vpack.c.b16 %v56, %v55
  %v69 = vpack.c.b16 %v58, %v57
  %v70 = vpack.c.b16 %v60, %v59
  %v71 = vpack.c.b16 %v62, %v61
  %v72 = vpack.c.b16 %v64, %v63
  %v75 = vunpack.c.l.b16 %v31
  %v76 = vunpack.c.l.b16 %v32
  %v77 = vpack.c.b16 %v76, %v75
  %vm79 = vcmask 130048
  %v81 = vsel %vm79, %v65, 0
  %v84 = vsel %vm79, %v66, 0
  %v87 = vsel %vm79, %v67, 0
  %v90 = vsel %vm79, %v68, 0
  %v93 = vsel %vm79, %v69, 0
  %v96 = vsel %vm79, %v70, 0
  %v99 = vsel %vm79, %v71, 0
  %v102 = vsel %vm79, %v72, 0
  %104 = vmatprep.subr.bf16.mxu0 0
  %105 = vmatpush1.bf16.msra.mxu0 0
  %106 = vmatprep.subr.bf16.mxu0 0
  %107 = vmatpush1.bf16.msra.mxu0 0
  %108 = vmatprep.subr.bf16.mxu0 0
  %109 = vmatpush1.bf16.msra.mxu0 0
  %110 = vmatprep.subr.bf16.mxu0 0
  %111 = vmatpush1.bf16.msra.mxu0 0
  %112 = vmatprep.subr.bf16.mxu0 0
  %113 = vmatpush1.bf16.msra.mxu0 0
  %114 = vmatprep.subr.bf16.mxu0 0
  %115 = vmatpush1.bf16.msra.mxu0 0
  %116 = vmatprep.subr.bf16.mxu0 0
  %117 = vmatpush1.bf16.msra.mxu0 0
  %118 = vmatprep.subr.bf16.mxu0 0
  %119 = vmatpush1.bf16.msra.mxu0 %v77
  %120 = vmatprep.subr.bf16.mxu0 0
  %121 = vmatpush2.bf16.msra.mxu0 0
  %122 = vmatprep.subr.bf16.mxu0 0
  %123 = vmatpush2.bf16.msra.mxu0 0
  %124 = vmatprep.subr.bf16.mxu0 0
  %125 = vmatpush2.bf16.msra.mxu0 0
  %126 = vmatprep.subr.bf16.mxu0 0
  %127 = vmatpush2.bf16.msra.mxu0 0
  %128 = vmatprep.subr.bf16.mxu0 0
  %129 = vmatpush2.bf16.msra.mxu0 0
  %130 = vmatprep.subr.bf16.mxu0 0
  %131 = vmatpush2.bf16.msra.mxu0 0
  %132 = vmatprep.subr.bf16.mxu0 0
  %133 = vmatpush2.bf16.msra.mxu0 0
  %134 = vmatprep.subr.bf16.mxu0 0
  %135 = vmatpush2.bf16.msra.mxu0 0
  %136 = vmatprep.mubr.bf16.mxu0 0
  %137 = vmatmul.mubr.bf16.gmra.mxu0 %v81
  %v138 = vpop.f32.mrf.mxu0
  %v139 = vadd.f32 0.0, %v138
  %v140 = vpop.f32.mrf.mxu0
  %v141 = vpop.f32.mrf.mxu0
  %v142 = vadd.f32 0.0, %v141
  %v143 = vpop.f32.mrf.mxu0
  %144 = vmatprep.mubr.bf16.mxu0 0
  %145 = vmatmul.mubr.bf16.gmra.mxu0 %v84
  %v146 = vpop.f32.mrf.mxu0
  %v147 = vadd.f32 0.0, %v146
  %v148 = vpop.f32.mrf.mxu0
  %v149 = vpop.f32.mrf.mxu0
  %v150 = vadd.f32 0.0, %v149
  %v151 = vpop.f32.mrf.mxu0
  %152 = vmatprep.mubr.bf16.mxu0 0
  %153 = vmatmul.mubr.bf16.gmra.mxu0 %v87
  %v154 = vpop.f32.mrf.mxu0
  %v155 = vadd.f32 0.0, %v154
  %v156 = vpop.f32.mrf.mxu0
  %v157 = vpop.f32.mrf.mxu0
  %v158 = vadd.f32 0.0, %v157
  %v159 = vpop.f32.mrf.mxu0
  %160 = vmatprep.mubr.bf16.mxu0 0
  %161 = vmatmul.mubr.bf16.gmra.mxu0 %v90
  %v162 = vpop.f32.mrf.mxu0
  %v163 = vadd.f32 0.0, %v162
  %v164 = vpop.f32.mrf.mxu0
  %v165 = vpop.f32.mrf.mxu0
  %v166 = vadd.f32 0.0, %v165
  %v167 = vpop.f32.mrf.mxu0
  %168 = vmatprep.mubr.bf16.mxu0 0
  %169 = vmatmul.mubr.bf16.gmra.mxu0 %v93
  %v170 = vpop.f32.mrf.mxu0
  %v171 = vadd.f32 0.0, %v170
  %v172 = vpop.f32.mrf.mxu0
  %v173 = vpop.f32.mrf.mxu0
  %v174 = vadd.f32 0.0, %v173
  %v175 = vpop.f32.mrf.mxu0
  %176 = vmatprep.mubr.bf16.mxu0 0
  %177 = vmatmul.mubr.bf16.gmra.mxu0 %v96
  %v178 = vpop.f32.mrf.mxu0
  %v179 = vadd.f32 0.0, %v178
  %v180 = vpop.f32.mrf.mxu0
  %v181 = vpop.f32.mrf.mxu0
  %v182 = vadd.f32 0.0, %v181
  %v183 = vpop.f32.mrf.mxu0
  %184 = vmatprep.mubr.bf16.mxu0 0
  %185 = vmatmul.mubr.bf16.gmra.mxu0 %v99
  %v186 = vpop.f32.mrf.mxu0
  %v187 = vadd.f32 0.0, %v186
  %v188 = vpop.f32.mrf.mxu0
  %v189 = vpop.f32.mrf.mxu0
  %v190 = vadd.f32 0.0, %v189
  %v191 = vpop.f32.mrf.mxu0
  %192 = vmatprep.mubr.bf16.mxu0 0
  %193 = vmatmul.mubr.bf16.gmra.mxu0 %v102
  %v194 = vpop.f32.mrf.mxu0
  %v195 = vadd.f32 0.0, %v194
  %v196 = vpop.f32.mrf.mxu0
  %v197 = vpop.f32.mrf.mxu0
  %v198 = vadd.f32 0.0, %v197
  %v199 = vpop.f32.mrf.mxu0
  %200 = vdwg.mxu0
  %v201 = vmax.f32 %v139, %v155
  %v202 = vmax.f32 %v142, %v158
  %v203 = vmax.f32 %v147, %v163
  %v204 = vmax.f32 %v150, %v166
  %v205 = vmax.f32 %v171, %v187
  %v206 = vmax.f32 %v174, %v190
  %v207 = vmax.f32 %v179, %v195
  %v208 = vmax.f32 %v182, %v198
  %v209 = vmax.f32 %v201, %v205
  %v210 = vmax.f32 %v202, %v206
  %v211 = vmax.f32 %v203, %v207
  %v212 = vmax.f32 %v204, %v208
  %v213 = vld [vmem:[%s2] sm:$0x1]
  %v215 = vlaneseq
  %v216 = vshrl.u32 %v215, 7
  %v217 = vsub.s32 0, %v216
  %v218 = vrot.slane %v213, %v217
  %v220 = vadd.f32 %v209, %v218
  %v221 = vadd.f32 %v210, %v218
  %v222 = vadd.f32 %v211, %v218
  %v223 = vadd.f32 %v212, %v218
  %v224 = vmax.f32 %v220, 0.0
  %v225 = vmax.f32 %v221, 0.0
  %v226 = vmax.f32 %v222, 0.0
  %v227 = vmax.f32 %v223, 0.0
  %228 = vst.msk [vmem:[%s3] sm:$0xff] %vm79, %v224
  %229 = vst.msk [vmem:[%s3 + $0x8] sm:$0xff] %vm79, %v225
  %230 = vst.msk [vmem:[%s3 + $0x10] sm:$0xff] %vm79, %v226
  %231 = vst.msk [vmem:[%s3 + $0x18] sm:$0xff] %vm79, %v227
  // Predicated region
  $region14: #{cnn_lstm_forward.3} parent=0 // pred_check
    _
  $region15: #{cnn_lstm_forward.3} parent=0 // pred_check_branch
    %233 = sbr.rel (0) target = $region17
  $region16: #{cnn_lstm_forward.3} parent=0 // pred_region
    _
  $region17: #{cnn_lstm_forward.3} parent=0 // pred_fallthru
    _
  // Predicated region
  $region18: #{cnn_lstm_forward.3} parent=0 // pred_check
    _
  $region19: #{cnn_lstm_forward.3} parent=0 // pred_check_branch
    %235 = sbr.rel (0) target = $region21
  $region20: #{cnn_lstm_forward.3} parent=0 // pred_region
    _
  $region21: #{cnn_lstm_forward.3} parent=0 // pred_fallthru
    _

// kernel: cnn_lstm_forward.4
$region0: #{cnn_lstm_forward.4}
  #allocation0 [shape = 'u32[]', space=smem, size = 0x4, offset = 0x4, fixed_abs, tag = 'smem constant byte address 0x4 - core index']
  #allocation1 [shape = 'u32[144,128]{1,0:T(1,128)}', space=vmem, size = 0x12000, scoped, tag = 'internal scratch']
  %s0 = inlined_call_operand.vmem [shape: bf16[4,16,144], index: 0, kind: input, shape index: {}]
  %s1 = inlined_call_operand.vmem [shape: bf16[144,32], index: 1, kind: input, shape index: {}]
  %s2 = inlined_call_operand.vmem [shape: f32[1,32], index: 2, kind: input, shape index: {}]
  %s3 = inlined_call_operand.vmem [shape: f32[16,32], index: 3, kind: output, shape index: {}]
  %s4 = sld [smem:[#allocation0]]
  $region22: #{cnn_lstm_forward.4} parent=0
    _
  %s6 = ssub.s32 1, %s4
  %s7 = scalar_select 0, %s6, %s4
  // Predicated region
  $region2: #{cnn_lstm_forward.4} parent=0 // pred_check
    _
  $region3: #{cnn_lstm_forward.4} parent=0 // pred_check_branch
    %9 = sbr.rel (0) target = $region5
  $region4: #{cnn_lstm_forward.4} parent=0 // pred_region
    _
  $region5: #{cnn_lstm_forward.4} parent=0 // pred_fallthru
    _
  // Predicated region
  $region6: #{cnn_lstm_forward.4} parent=0 // pred_check
    _
  $region7: #{cnn_lstm_forward.4} parent=0 // pred_check_branch
    %11 = sbr.rel (0) target = $region9
  $region8: #{cnn_lstm_forward.4} parent=0 // pred_region
    _
  $region9: #{cnn_lstm_forward.4} parent=0 // pred_fallthru
    _
  // Predicated region
  $region10: #{cnn_lstm_forward.4} parent=0 // pred_check
    _
  $region11: #{cnn_lstm_forward.4} parent=0 // pred_check_branch
    %13 = sbr.rel (0) target = $region13
  $region12: #{cnn_lstm_forward.4} parent=0 // pred_region
    _
  $region13: #{cnn_lstm_forward.4} parent=0 // pred_fallthru
    _
  %v15 = vld [vmem:[%s0] sm:$0xff]
  %v16 = vld [vmem:[%s0 + $0x8] sm:$0xff]
  %v17 = vld [vmem:[%s0 + $0x10] sm:$0xff]
  %v18 = vld [vmem:[%s0 + $0x18] sm:$0xff]
  %v19 = vld [vmem:[%s0 + $0x20] sm:$0xff]
  %v20 = vld [vmem:[%s0 + $0x28] sm:$0xff]
  %v21 = vld [vmem:[%s0 + $0x30] sm:$0xff]
  %v22 = vld [vmem:[%s0 + $0x38] sm:$0xff]
  %v23 = vld [vmem:[%s1] sm:$0xf]
  %v24 = vld [vmem:[%s1 + $0x4] sm:$0xf]
  %v25 = vld [vmem:[%s1 + $0x8] sm:$0xf]
  %v26 = vld [vmem:[%s1 + $0xc] sm:$0xf]
  %v27 = vld [vmem:[%s1 + $0x10] sm:$0xf]
  %v28 = vld [vmem:[%s1 + $0x14] sm:$0xf]
  %v29 = vld [vmem:[%s1 + $0x18] sm:$0xf]
  %v30 = vld [vmem:[%s1 + $0x1c] sm:$0xf]
  %v31 = vld [vmem:[%s1 + $0x20] sm:$0xf]
  %v32 = vld [vmem:[%s1 + $0x24] sm:$0xf]
  %v33 = vld [vmem:[%s1 + $0x28] sm:$0xf]
  %v34 = vld [vmem:[%s1 + $0x2c] sm:$0xf]
  %v35 = vld [vmem:[%s1 + $0x30] sm:$0xf]
  %v36 = vld [vmem:[%s1 + $0x34] sm:$0xf]
  %v37 = vld [vmem:[%s1 + $0x38] sm:$0xf]
  %v38 = vld [vmem:[%s1 + $0x3c] sm:$0xf]
  %v39 = vld [vmem:[%s1 + $0x40] sm:$0xf]
  %v40 = vld [vmem:[%s1 + $0x44] sm:$0xf]
  %v49 = vunpack.c.l.b16 %v15
  %v50 = vunpack.c.h.b16 %v15
  %v51 = vunpack.c.l.b16 %v16
  %v52 = vunpack.c.h.b16 %v16
  %v53 = vunpack.c.l.b16 %v17
  %v54 = vunpack.c.h.b16 %v17
  %v55 = vunpack.c.l.b16 %v18
  %v56 = vunpack.c.h.b16 %v18
  %v57 = vunpack.c.l.b16 %v19
  %v58 = vunpack.c.h.b16 %v19
  %v59 = vunpack.c.l.b16 %v20
  %v60 = vunpack.c.h.b16 %v20
  %v61 = vunpack.c.l.b16 %v21
  %v62 = vunpack.c.h.b16 %v21
  %v63 = vunpack.c.l.b16 %v22
  %v64 = vunpack.c.h.b16 %v22
  %v65 = vpack.c.b16 %v51, %v49
  %v66 = vpack.c.b16 %v52, %v50
  %v67 = vpack.c.b16 %v55, %v53
  %v68 = vpack.c.b16 %v56, %v54
  %v69 = vpack.c.b16 %v59, %v57
  %v70 = vpack.c.b16 %v60, %v58
  %v71 = vpack.c.b16 %v63, %v61
  %v72 = vpack.c.b16 %v64, %v62
  %v95 = vunpack.c.l.b16 %v23
  %v96 = vunpack.c.l.b16 %v24
  %v97 = vunpack.c.l.b16 %v25
  %v98 = vunpack.c.l.b16 %v26
  %v99 = vunpack.c.l.b16 %v27
  %v100 = vunpack.c.l.b16 %v28
  %v101 = vunpack.c.l.b16 %v29
  %v102 = vunpack.c.l.b16 %v30
  %v103 = vunpack.c.l.b16 %v31
  %v104 = vunpack.c.l.b16 %v32
  %v105 = vunpack.c.l.b16 %v33
  %v106 = vunpack.c.l.b16 %v34
  %v107 = vunpack.c.l.b16 %v35
  %v108 = vunpack.c.l.b16 %v36
  %v109 = vunpack.c.l.b16 %v37
  %v110 = vunpack.c.l.b16 %v38
  %v111 = vunpack.c.l.b16 %v39
  %v112 = vunpack.c.l.b16 %v40
  %v113 = vpack.c.b16 %v96, %v95
  %v114 = vpack.c.b16 %v98, %v97
  %v115 = vpack.c.b16 %v100, %v99
  %v116 = vpack.c.b16 %v102, %v101
  %v117 = vpack.c.b16 %v104, %v103
  %v118 = vpack.c.b16 %v106, %v105
  %v119 = vpack.c.b16 %v108, %v107
  %v120 = vpack.c.b16 %v110, %v109
  %v121 = vpack.c.b16 %v112, %v111
  %vm131 = vcmask 130048
  %v133 = vsel %vm131, %v66, 0
  %v136 = vsel %vm131, %v68, 0
  %v139 = vsel %vm131, %v70, 0
  %v142 = vsel %vm131, %v72, 0
  %144 = vmatprep.subr.bf16.mxu0 0
  %145 = vmatpush1.bf16.msra.mxu0 %v120
  %146 = vmatprep.subr.bf16.mxu0 0
  %147 = vmatpush1.bf16.msra.mxu0 %v119
  %148 = vmatprep.subr.bf16.mxu0 0
  %149 = vmatpush1.bf16.msra.mxu0 %v118
  %150 = vmatprep.subr.bf16.mxu0 0
  %151 = vmatpush1.bf16.msra.mxu0 %v117
  %152 = vmatprep.subr.bf16.mxu0 0
  %153 = vmatpush1.bf16.msra.mxu0 %v116
  %154 = vmatprep.subr.bf16.mxu0 0
  %155 = vmatpush1.bf16.msra.mxu0 %v115
  %156 = vmatprep.subr.bf16.mxu0 0
  %157 = vmatpush1.bf16.msra.mxu0 %v114
  %158 = vmatprep.subr.bf16.mxu0 0
  %159 = vmatpush1.bf16.msra.mxu0 %v113
  %160 = vmatprep.subr.bf16.mxu0 0
  %161 = vmatpush2.bf16.msra.mxu0 0
  %162 = vmatprep.subr.bf16.mxu0 0
  %163 = vmatpush2.bf16.msra.mxu0 0
  %164 = vmatprep.subr.bf16.mxu0 0
  %165 = vmatpush2.bf16.msra.mxu0 0
  %166 = vmatprep.subr.bf16.mxu0 0
  %167 = vmatpush2.bf16.msra.mxu0 0
  %168 = vmatprep.subr.bf16.mxu0 0
  %169 = vmatpush2.bf16.msra.mxu0 0
  %170 = vmatprep.subr.bf16.mxu0 0
  %171 = vmatpush2.bf16.msra.mxu0 0
  %172 = vmatprep.subr.bf16.mxu0 0
  %173 = vmatpush2.bf16.msra.mxu0 0
  %174 = vmatprep.subr.bf16.mxu0 0
  %175 = vmatpush2.bf16.msra.mxu0 %v121
  %176 = vmatprep.mubr.bf16.mxu0 %v133
  %177 = vmatmul.mubr.bf16.gmra.mxu0 %v65
  %v178 = vpop.f32.mrf.mxu0
  %v179 = vadd.f32 0.0, %v178
  %v180 = vpop.f32.mrf.mxu0
  %v181 = vpop.f32.mrf.mxu0
  %v182 = vadd.f32 0.0, %v181
  %v183 = vpop.f32.mrf.mxu0
  %184 = vmatprep.mubr.bf16.mxu0 %v136
  %185 = vmatmul.mubr.bf16.gmra.mxu0 %v67
  %v186 = vpop.f32.mrf.mxu0
  %v187 = vadd.f32 0.0, %v186
  %v188 = vpop.f32.mrf.mxu0
  %v189 = vpop.f32.mrf.mxu0
  %v190 = vadd.f32 0.0, %v189
  %v191 = vpop.f32.mrf.mxu0
  %192 = vmatprep.mubr.bf16.mxu0 %v139
  %193 = vmatmul.mubr.bf16.gmra.mxu0 %v69
  %v194 = vpop.f32.mrf.mxu0
  %v195 = vadd.f32 0.0, %v194
  %v196 = vpop.f32.mrf.mxu0
  %v197 = vpop.f32.mrf.mxu0
  %v198 = vadd.f32 0.0, %v197
  %v199 = vpop.f32.mrf.mxu0
  %200 = vmatprep.mubr.bf16.mxu0 %v142
  %201 = vmatmul.mubr.bf16.gmra.mxu0 %v71
  %v202 = vpop.f32.mrf.mxu0
  %v203 = vadd.f32 0.0, %v202
  %v204 = vpop.f32.mrf.mxu0
  %v205 = vpop.f32.mrf.mxu0
  %v206 = vadd.f32 0.0, %v205
  %v207 = vpop.f32.mrf.mxu0
  %208 = vdwg.mxu0
  %v209 = vmax.f32 %v179, %v187
  %v210 = vmax.f32 %v182, %v190
  %v211 = vmax.f32 %v195, %v203
  %v212 = vmax.f32 %v198, %v206
  %v213 = vmax.f32 %v209, %v211
  %v214 = vmax.f32 %v210, %v212
  %v215 = vld [vmem:[%s2] sm:$0x1]
  %v217 = vlaneseq
  %v218 = vshrl.u32 %v217, 7
  %v219 = vsub.s32 0, %v218
  %v220 = vrot.slane %v215, %v219
  %v222 = vadd.f32 %v213, %v220
  %v223 = vadd.f32 %v214, %v220
  %v224 = vmax.f32 %v222, 0.0
  %v225 = vmax.f32 %v223, 0.0
  %vm226 = vcmask 261120
  %227 = vst.msk [vmem:[%s3] sm:$0xff] %vm226, %v224
  %228 = vst.msk [vmem:[%s3 + $0x8] sm:$0xff] %vm226, %v225
  // Predicated region
  $region14: #{cnn_lstm_forward.4} parent=0 // pred_check
    _
  $region15: #{cnn_lstm_forward.4} parent=0 // pred_check_branch
    %230 = sbr.rel (0) target = $region17
  $region16: #{cnn_lstm_forward.4} parent=0 // pred_region
    _
  $region17: #{cnn_lstm_forward.4} parent=0 // pred_fallthru
    _
  // Predicated region
  $region18: #{cnn_lstm_forward.4} parent=0 // pred_check
    _
  $region19: #{cnn_lstm_forward.4} parent=0 // pred_check_branch
    %232 = sbr.rel (0) target = $region21
  $region20: #{cnn_lstm_forward.4} parent=0 // pred_region
    _
  $region21: #{cnn_lstm_forward.4} parent=0 // pred_fallthru
    _

// kernel: cnn_lstm_forward.5
$region0: #{cnn_lstm_forward.5}
  #allocation0 [shape = 'u32[]', space=smem, size = 0x4, offset = 0x4, fixed_abs, tag = 'smem constant byte address 0x4 - core index']
  #allocation1 [shape = 'u32[144,128]{1,0:T(1,128)}', space=vmem, size = 0x12000, scoped, tag = 'internal scratch']
  #allocation2 [shape = 'f32[4,16,256]{2,1,0:T(8,128)}', space=vmem, size = 0x10000, scoped, tag = 'scratch operand']
  #allocation3 [shape = 'f32[4,16,256]{2,1,0:T(8,128)}', space=vmem, size = 0x10000, scoped, tag = 'scratch operand']
  #allocation4 [shape = 'f32[4,16,64]{2,1,0:T(8,128)}', space=vmem, size = 0x8000, scoped, tag = 'scratch operand']
  #allocation5 [shape = 'f32[4,16,64]{2,1,0:T(8,128)}', space=vmem, size = 0x8000, scoped, tag = 'scratch operand']
  #allocation6 [shape = 'f32[4,16,256]{2,1,0:T(8,128)}', space=vmem, size = 0x10000, scoped, tag = 'scratch operand']
  %s0 = inlined_call_operand.vmem [shape: bf16[4,16,32], index: 0, kind: input, shape index: {}]
  %s1 = inlined_call_operand.vmem [shape: bf16[32,256], index: 1, kind: input, shape index: {}]
  %s2 = inlined_call_operand.vmem [shape: bf16[64,256], index: 2, kind: input, shape index: {}]
  %s3 = inlined_call_operand.vmem [shape: f32[1,256], index: 3, kind: input, shape index: {}]
  %s4 = inlined_call_operand.vmem [shape: bf16[32,256], index: 4, kind: input, shape index: {}]
  %s5 = inlined_call_operand.vmem [shape: bf16[64,256], index: 5, kind: input, shape index: {}]
  %s6 = inlined_call_operand.vmem [shape: f32[1,256], index: 6, kind: input, shape index: {}]
  %s7 = inlined_call_operand.vmem [shape: bf16[64,256], index: 7, kind: input, shape index: {}]
  %s8 = inlined_call_operand.vmem [shape: bf16[64,256], index: 8, kind: input, shape index: {}]
  %s9 = inlined_call_operand.vmem [shape: bf16[64,256], index: 9, kind: input, shape index: {}]
  %s10 = inlined_call_operand.vmem [shape: f32[1,256], index: 10, kind: input, shape index: {}]
  %s11 = inlined_call_operand.vmem [shape: bf16[64,256], index: 11, kind: input, shape index: {}]
  %s12 = inlined_call_operand.vmem [shape: bf16[64,256], index: 12, kind: input, shape index: {}]
  %s13 = inlined_call_operand.vmem [shape: f32[1,256], index: 13, kind: input, shape index: {}]
  %s14 = inlined_call_operand.vmem [shape: bf16[64,128], index: 14, kind: input, shape index: {}]
  %s15 = inlined_call_operand.vmem [shape: bf16[64,128], index: 15, kind: input, shape index: {}]
  %s16 = inlined_call_operand.vmem [shape: f32[1,128], index: 16, kind: input, shape index: {}]
  %s17 = inlined_call_operand.vmem [shape: bf16[128,128], index: 17, kind: input, shape index: {}]
  %s18 = inlined_call_operand.vmem [shape: f32[1,128], index: 18, kind: input, shape index: {}]
  %s19 = inlined_call_operand.vmem [shape: f32[16,128], index: 19, kind: output, shape index: {}]
  %s20 = sld [smem:[#allocation0]]
  $region86: #{cnn_lstm_forward.5} parent=0
    _
  %s22 = ssub.s32 1, %s20
  %s23 = scalar_select 0, %s22, %s20
  // Predicated region
  $region2: #{cnn_lstm_forward.5} parent=0 // pred_check
    _
  $region3: #{cnn_lstm_forward.5} parent=0 // pred_check_branch
    %25 = sbr.rel (0) target = $region5
  $region4: #{cnn_lstm_forward.5} parent=0 // pred_region
    _
  $region5: #{cnn_lstm_forward.5} parent=0 // pred_fallthru
    _
  // Predicated region
  $region6: #{cnn_lstm_forward.5} parent=0 // pred_check
    _
  $region7: #{cnn_lstm_forward.5} parent=0 // pred_check_branch
    %27 = sbr.rel (0) target = $region9
  $region8: #{cnn_lstm_forward.5} parent=0 // pred_region
    _
  $region9: #{cnn_lstm_forward.5} parent=0 // pred_fallthru
    _
  // Predicated region
  $region10: #{cnn_lstm_forward.5} parent=0 // pred_check
    _
  $region11: #{cnn_lstm_forward.5} parent=0 // pred_check_branch
    %29 = sbr.rel (0) target = $region13
  $region12: #{cnn_lstm_forward.5} parent=0 // pred_region
    _
  $region13: #{cnn_lstm_forward.5} parent=0 // pred_fallthru
    _
  // Predicated region
  $region14: #{cnn_lstm_forward.5} parent=0 // pred_check
    _
  $region15: #{cnn_lstm_forward.5} parent=0 // pred_check_branch
    %31 = sbr.rel (0) target = $region17
  $region16: #{cnn_lstm_forward.5} parent=0 // pred_region
    _
  $region17: #{cnn_lstm_forward.5} parent=0 // pred_fallthru
    _
  // Predicated region
  $region18: #{cnn_lstm_forward.5} parent=0 // pred_check
    _
  $region19: #{cnn_lstm_forward.5} parent=0 // pred_check_branch
    %33 = sbr.rel (0) target = $region21
  $region20: #{cnn_lstm_forward.5} parent=0 // pred_region
    _
  $region21: #{cnn_lstm_forward.5} parent=0 // pred_fallthru
    _
  // Predicated region
  $region22: #{cnn_lstm_forward.5} parent=0 // pred_check
    _
  $region23: #{cnn_lstm_forward.5} parent=0 // pred_check_branch
    %35 = sbr.rel (0) target = $region25
  $region24: #{cnn_lstm_forward.5} parent=0 // pred_region
    _
  $region25: #{cnn_lstm_forward.5} parent=0 // pred_fallthru
    _
  // Predicated region
  $region26: #{cnn_lstm_forward.5} parent=0 // pred_check
    _
  $region27: #{cnn_lstm_forward.5} parent=0 // pred_check_branch
    %37 = sbr.rel (0) target = $region29
  $region28: #{cnn_lstm_forward.5} parent=0 // pred_region
    _
  $region29: #{cnn_lstm_forward.5} parent=0 // pred_fallthru
    _
  // Predicated region
  $region30: #{cnn_lstm_forward.5} parent=0 // pred_check
    _
  $region31: #{cnn_lstm_forward.5} parent=0 // pred_check_branch
    %39 = sbr.rel (0) target = $region33
  $region32: #{cnn_lstm_forward.5} parent=0 // pred_region
    _
  $region33: #{cnn_lstm_forward.5} parent=0 // pred_fallthru
    _
  // Predicated region
  $region34: #{cnn_lstm_forward.5} parent=0 // pred_check
    _
  $region35: #{cnn_lstm_forward.5} parent=0 // pred_check_branch
    %41 = sbr.rel (0) target = $region37
  $region36: #{cnn_lstm_forward.5} parent=0 // pred_region
    _
  $region37: #{cnn_lstm_forward.5} parent=0 // pred_fallthru
    _
  // Predicated region
  $region38: #{cnn_lstm_forward.5} parent=0 // pred_check
    _
  $region39: #{cnn_lstm_forward.5} parent=0 // pred_check_branch
    %43 = sbr.rel (0) target = $region41
  $region40: #{cnn_lstm_forward.5} parent=0 // pred_region
    _
  $region41: #{cnn_lstm_forward.5} parent=0 // pred_fallthru
    _
  // Predicated region
  $region42: #{cnn_lstm_forward.5} parent=0 // pred_check
    _
  $region43: #{cnn_lstm_forward.5} parent=0 // pred_check_branch
    %45 = sbr.rel (0) target = $region45
  $region44: #{cnn_lstm_forward.5} parent=0 // pred_region
    _
  $region45: #{cnn_lstm_forward.5} parent=0 // pred_fallthru
    _
  // Predicated region
  $region46: #{cnn_lstm_forward.5} parent=0 // pred_check
    _
  $region47: #{cnn_lstm_forward.5} parent=0 // pred_check_branch
    %47 = sbr.rel (0) target = $region49
  $region48: #{cnn_lstm_forward.5} parent=0 // pred_region
    _
  $region49: #{cnn_lstm_forward.5} parent=0 // pred_fallthru
    _
  // Predicated region
  $region50: #{cnn_lstm_forward.5} parent=0 // pred_check
    _
  $region51: #{cnn_lstm_forward.5} parent=0 // pred_check_branch
    %49 = sbr.rel (0) target = $region53
  $region52: #{cnn_lstm_forward.5} parent=0 // pred_region
    _
  $region53: #{cnn_lstm_forward.5} parent=0 // pred_fallthru
    _
  // Predicated region
  $region54: #{cnn_lstm_forward.5} parent=0 // pred_check
    _
  $region55: #{cnn_lstm_forward.5} parent=0 // pred_check_branch
    %51 = sbr.rel (0) target = $region57
  $region56: #{cnn_lstm_forward.5} parent=0 // pred_region
    _
  $region57: #{cnn_lstm_forward.5} parent=0 // pred_fallthru
    _
  // Predicated region
  $region58: #{cnn_lstm_forward.5} parent=0 // pred_check
    _
  $region59: #{cnn_lstm_forward.5} parent=0 // pred_check_branch
    %53 = sbr.rel (0) target = $region61
  $region60: #{cnn_lstm_forward.5} parent=0 // pred_region
    _
  $region61: #{cnn_lstm_forward.5} parent=0 // pred_fallthru
    _
  // Predicated region
  $region62: #{cnn_lstm_forward.5} parent=0 // pred_check
    _
  $region63: #{cnn_lstm_forward.5} parent=0 // pred_check_branch
    %55 = sbr.rel (0) target = $region65
  $region64: #{cnn_lstm_forward.5} parent=0 // pred_region
    _
  $region65: #{cnn_lstm_forward.5} parent=0 // pred_fallthru
    _
  // Predicated region
  $region66: #{cnn_lstm_forward.5} parent=0 // pred_check
    _
  $region67: #{cnn_lstm_forward.5} parent=0 // pred_check_branch
    %57 = sbr.rel (0) target = $region69
  $region68: #{cnn_lstm_forward.5} parent=0 // pred_region
    _
  $region69: #{cnn_lstm_forward.5} parent=0 // pred_fallthru
    _
  // Predicated region
  $region70: #{cnn_lstm_forward.5} parent=0 // pred_check
    _
  $region71: #{cnn_lstm_forward.5} parent=0 // pred_check_branch
    %59 = sbr.rel (0) target = $region73
  $region72: #{cnn_lstm_forward.5} parent=0 // pred_region
    _
  $region73: #{cnn_lstm_forward.5} parent=0 // pred_fallthru
    _
  // Predicated region
  $region74: #{cnn_lstm_forward.5} parent=0 // pred_check
    _
  $region75: #{cnn_lstm_forward.5} parent=0 // pred_check_branch
    %61 = sbr.rel (0) target = $region77
  $region76: #{cnn_lstm_forward.5} parent=0 // pred_region
    _
  $region77: #{cnn_lstm_forward.5} parent=0 // pred_fallthru
    _
  %v63 = vld [vmem:[%s0] sm:$0xf]
  %v64 = vld [vmem:[%s0 + $0x4] sm:$0xf]
  %v65 = vld [vmem:[%s0 + $0x8] sm:$0xf]
  %v66 = vld [vmem:[%s0 + $0xc] sm:$0xf]
  %v67 = vld [vmem:[%s0 + $0x10] sm:$0xf]
  %v68 = vld [vmem:[%s0 + $0x14] sm:$0xf]
  %v69 = vld [vmem:[%s0 + $0x18] sm:$0xf]
  %v70 = vld [vmem:[%s0 + $0x1c] sm:$0xf]
  %v71 = vld [vmem:[%s1] sm:$0xff]
  %v72 = vld [vmem:[%s1 + $0x8] sm:$0xff]
  %v73 = vld [vmem:[%s1 + $0x10] sm:$0xff]
  %v74 = vld [vmem:[%s1 + $0x18] sm:$0xff]
  %v75 = vld [vmem:[%s3] sm:$0x3]
  %v77 = vlaneseq
  %v78 = vshrl.u32 %v77, 7
  %v79 = vsub.s32 0, %v78
  %v80 = vrot.slane %v75, %v79
  %v81 = vlaneseq
  %v82 = vshrl.u32 %v81, 7
  %v83 = vsub.s32 1, %v82
  %v84 = vrot.slane %v75, %v83
  %v95 = vunpack.c.l.b16 %v63
  %v96 = vunpack.c.l.b16 %v64
  %v97 = vunpack.c.l.b16 %v65
  %v98 = vunpack.c.l.b16 %v66
  %v99 = vunpack.c.l.b16 %v67
  %v100 = vunpack.c.l.b16 %v68
  %v101 = vunpack.c.l.b16 %v69
  %v102 = vunpack.c.l.b16 %v70
  %v103 = vpack.c.b16 %v96, %v95
  %v104 = vpack.c.b16 %v98, %v97
  %v105 = vpack.c.b16 %v100, %v99
  %v106 = vpack.c.b16 %v102, %v101
  %v111 = vunpack.c.l.b16 %v71
  %v112 = vunpack.c.h.b16 %v71
  %v113 = vunpack.c.l.b16 %v72
  %v114 = vunpack.c.h.b16 %v72
  %v115 = vunpack.c.l.b16 %v73
  %v116 = vunpack.c.h.b16 %v73
  %v117 = vunpack.c.l.b16 %v74
  %v118 = vunpack.c.h.b16 %v74
  %v119 = vpack.c.b16 %v113, %v111
  %v120 = vpack.c.b16 %v114, %v112
  %v121 = vpack.c.b16 %v117, %v115
  %v122 = vpack.c.b16 %v118, %v116
  %vm127 = vcmask 261120
  %v129 = vsel %vm127, %v103, 0
  %v132 = vsel %vm127, %v104, 0
  %v135 = vsel %vm127, %v105, 0
  %v138 = vsel %vm127, %v106, 0
  %140 = vmatprep.subr.bf16.mxu0 0
  %141 = vmatpush1.bf16.msra.mxu0 0
  %142 = vmatprep.subr.bf16.mxu0 0
  %143 = vmatpush1.bf16.msra.mxu0 0
  %144 = vmatprep.subr.bf16.mxu0 0
  %145 = vmatpush1.bf16.msra.mxu0 0
  %146 = vmatprep.subr.bf16.mxu0 0
  %147 = vmatpush1.bf16.msra.mxu0 0
  %148 = vmatprep.subr.bf16.mxu0 0
  %149 = vmatpush1.bf16.msra.mxu0 0
  %150 = vmatprep.subr.bf16.mxu0 0
  %151 = vmatpush1.bf16.msra.mxu0 0
  %152 = vmatprep.subr.bf16.mxu0 %v122
  %153 = vmatpush1.bf16.msra.mxu0 %v121
  %154 = vmatprep.subr.bf16.mxu0 %v120
  %155 = vmatpush1.bf16.msra.mxu0 %v119
  %156 = vmatprep.subr.bf16.mxu0 0
  %157 = vmatpush2.bf16.msra.mxu0 0
  %158 = vmatprep.subr.bf16.mxu0 0
  %159 = vmatpush2.bf16.msra.mxu0 0
  %160 = vmatprep.subr.bf16.mxu0 0
  %161 = vmatpush2.bf16.msra.mxu0 0
  %162 = vmatprep.subr.bf16.mxu0 0
  %163 = vmatpush2.bf16.msra.mxu0 0
  %164 = vmatprep.subr.bf16.mxu0 0
  %165 = vmatpush2.bf16.msra.mxu0 0
  %166 = vmatprep.subr.bf16.mxu0 0
  %167 = vmatpush2.bf16.msra.mxu0 0
  %168 = vmatprep.subr.bf16.mxu0 0
  %169 = vmatpush2.bf16.msra.mxu0 0
  %170 = vmatprep.subr.bf16.mxu0 0
  %171 = vmatpush2.bf16.msra.mxu0 0
  %172 = vmatprep.mubr.bf16.mxu0 0
  %173 = vmatmul.mubr.bf16.gmra.mxu0 %v129
  %v174 = vpop.f32.mrf.mxu0
  %v175 = vadd.f32 %v80, %v174
  %v176 = vpop.f32.mrf.mxu0
  %v177 = vadd.f32 %v84, %v176
  %v178 = vpop.f32.mrf.mxu0
  %v179 = vadd.f32 %v80, %v178
  %v180 = vpop.f32.mrf.mxu0
  %v181 = vadd.f32 %v84, %v180
  %182 = vmatprep.mubr.bf16.mxu0 0
  %183 = vmatmul.mubr.bf16.gmra.mxu0 %v132
  %v184 = vpop.f32.mrf.mxu0
  %v185 = vadd.f32 %v80, %v184
  %v186 = vpop.f32.mrf.mxu0
  %v187 = vadd.f32 %v84, %v186
  %v188 = vpop.f32.mrf.mxu0
  %v189 = vadd.f32 %v80, %v188
  %v190 = vpop.f32.mrf.mxu0
  %v191 = vadd.f32 %v84, %v190
  %192 = vmatprep.mubr.bf16.mxu0 0
  %193 = vmatmul.mubr.bf16.gmra.mxu0 %v135
  %v194 = vpop.f32.mrf.mxu0
  %v195 = vadd.f32 %v80, %v194
  %v196 = vpop.f32.mrf.mxu0
  %v197 = vadd.f32 %v84, %v196
  %v198 = vpop.f32.mrf.mxu0
  %v199 = vadd.f32 %v80, %v198
  %v200 = vpop.f32.mrf.mxu0
  %v201 = vadd.f32 %v84, %v200
  %202 = vmatprep.mubr.bf16.mxu0 0
  %203 = vmatmul.mubr.bf16.gmra.mxu0 %v138
  %v204 = vpop.f32.mrf.mxu0
  %v205 = vadd.f32 %v80, %v204
  %v206 = vpop.f32.mrf.mxu0
  %v207 = vadd.f32 %v84, %v206
  %v208 = vpop.f32.mrf.mxu0
  %v209 = vadd.f32 %v80, %v208
  %v210 = vpop.f32.mrf.mxu0
  %v211 = vadd.f32 %v84, %v210
  %212 = vdwg.mxu0
  %213 = vst [vmem:[#allocation2] sm:$0xff] %v175
  %214 = vst [vmem:[#allocation2 + $0x8] sm:$0xff] %v177
  %215 = vst [vmem:[#allocation2 + $0x10] sm:$0xff] %v179
  %216 = vst [vmem:[#allocation2 + $0x18] sm:$0xff] %v181
  %217 = vst [vmem:[#allocation2 + $0x20] sm:$0xff] %v185
  %218 = vst [vmem:[#allocation2 + $0x28] sm:$0xff] %v187
  %219 = vst [vmem:[#allocation2 + $0x30] sm:$0xff] %v189
  %220 = vst [vmem:[#allocation2 + $0x38] sm:$0xff] %v191
  %221 = vst [vmem:[#allocation2 + $0x40] sm:$0xff] %v195
  %222 = vst [vmem:[#allocation2 + $0x48] sm:$0xff] %v197
  %223 = vst [vmem:[#allocation2 + $0x50] sm:$0xff] %v199
  %224 = vst [vmem:[#allocation2 + $0x58] sm:$0xff] %v201
  %225 = vst [vmem:[#allocation2 + $0x60] sm:$0xff] %v205
  %226 = vst [vmem:[#allocation2 + $0x68] sm:$0xff] %v207
  %227 = vst [vmem:[#allocation2 + $0x70] sm:$0xff] %v209
  %228 = vst [vmem:[#allocation2 + $0x78] sm:$0xff] %v211
  %v229 = vld [vmem:[%s4] sm:$0xff]
  %v230 = vld [vmem:[%s4 + $0x8] sm:$0xff]
  %v231 = vld [vmem:[%s4 + $0x10] sm:$0xff]
  %v232 = vld [vmem:[%s4 + $0x18] sm:$0xff]
  %v233 = vld [vmem:[%s6] sm:$0x3]
  %v235 = vlaneseq
  %v236 = vshrl.u32 %v235, 7
  %v237 = vsub.s32 0, %v236
  %v238 = vrot.slane %v233, %v237
  %v239 = vlaneseq
  %v240 = vshrl.u32 %v239, 7
  %v241 = vsub.s32 1, %v240
  %v242 = vrot.slane %v233, %v241
  %v249 = vunpack.c.l.b16 %v229
  %v250 = vunpack.c.h.b16 %v229
  %v251 = vunpack.c.l.b16 %v230
  %v252 = vunpack.c.h.b16 %v230
  %v253 = vunpack.c.l.b16 %v231
  %v254 = vunpack.c.h.b16 %v231
  %v255 = vunpack.c.l.b16 %v232
  %v256 = vunpack.c.h.b16 %v232
  %v257 = vpack.c.b16 %v251, %v249
  %v258 = vpack.c.b16 %v252, %v250
  %v259 = vpack.c.b16 %v255, %v253
  %v260 = vpack.c.b16 %v256, %v254
  %265 = vmatprep.subr.bf16.mxu0 0
  %266 = vmatpush1.bf16.msra.mxu0 0
  %267 = vmatprep.subr.bf16.mxu0 0
  %268 = vmatpush1.bf16.msra.mxu0 0
  %269 = vmatprep.subr.bf16.mxu0 0
  %270 = vmatpush1.bf16.msra.mxu0 0
  %271 = vmatprep.subr.bf16.mxu0 0
  %272 = vmatpush1.bf16.msra.mxu0 0
  %273 = vmatprep.subr.bf16.mxu0 0
  %274 = vmatpush1.bf16.msra.mxu0 0
  %275 = vmatprep.subr.bf16.mxu0 0
  %276 = vmatpush1.bf16.msra.mxu0 0
  %277 = vmatprep.subr.bf16.mxu0 %v260
  %278 = vmatpush1.bf16.msra.mxu0 %v259
  %279 = vmatprep.subr.bf16.mxu0 %v258
  %280 = vmatpush1.bf16.msra.mxu0 %v257
  %281 = vmatprep.subr.bf16.mxu0 0
  %282 = vmatpush2.bf16.msra.mxu0 0
  %283 = vmatprep.subr.bf16.mxu0 0
  %284 = vmatpush2.bf16.msra.mxu0 0
  %285 = vmatprep.subr.bf16.mxu0 0
  %286 = vmatpush2.bf16.msra.mxu0 0
  %287 = vmatprep.subr.bf16.mxu0 0
  %288 = vmatpush2.bf16.msra.mxu0 0
  %289 = vmatprep.subr.bf16.mxu0 0
  %290 = vmatpush2.bf16.msra.mxu0 0
  %291 = vmatprep.subr.bf16.mxu0 0
  %292 = vmatpush2.bf16.msra.mxu0 0
  %293 = vmatprep.subr.bf16.mxu0 0
  %294 = vmatpush2.bf16.msra.mxu0 0
  %295 = vmatprep.subr.bf16.mxu0 0
  %296 = vmatpush2.bf16.msra.mxu0 0
  %297 = vmatprep.mubr.bf16.mxu0 0
  %298 = vmatmul.mubr.bf16.gmra.mxu0 %v129
  %v299 = vpop.f32.mrf.mxu0
  %v300 = vadd.f32 %v238, %v299
  %v301 = vpop.f32.mrf.mxu0
  %v302 = vadd.f32 %v242, %v301
  %v303 = vpop.f32.mrf.mxu0
  %v304 = vadd.f32 %v238, %v303
  %v305 = vpop.f32.mrf.mxu0
  %v306 = vadd.f32 %v242, %v305
  %307 = vmatprep.mubr.bf16.mxu0 0
  %308 = vmatmul.mubr.bf16.gmra.mxu0 %v132
  %v309 = vpop.f32.mrf.mxu0
  %v310 = vadd.f32 %v238, %v309
  %v311 = vpop.f32.mrf.mxu0
  %v312 = vadd.f32 %v242, %v311
  %v313 = vpop.f32.mrf.mxu0
  %v314 = vadd.f32 %v238, %v313
  %v315 = vpop.f32.mrf.mxu0
  %v316 = vadd.f32 %v242, %v315
  %317 = vmatprep.mubr.bf16.mxu0 0
  %318 = vmatmul.mubr.bf16.gmra.mxu0 %v135
  %v319 = vpop.f32.mrf.mxu0
  %v320 = vadd.f32 %v238, %v319
  %v321 = vpop.f32.mrf.mxu0
  %v322 = vadd.f32 %v242, %v321
  %v323 = vpop.f32.mrf.mxu0
  %v324 = vadd.f32 %v238, %v323
  %v325 = vpop.f32.mrf.mxu0
  %v326 = vadd.f32 %v242, %v325
  %327 = vmatprep.mubr.bf16.mxu0 0
  %328 = vmatmul.mubr.bf16.gmra.mxu0 %v138
  %v329 = vpop.f32.mrf.mxu0
  %v330 = vadd.f32 %v238, %v329
  %v331 = vpop.f32.mrf.mxu0
  %v332 = vadd.f32 %v242, %v331
  %v333 = vpop.f32.mrf.mxu0
  %v334 = vadd.f32 %v238, %v333
  %v335 = vpop.f32.mrf.mxu0
  %v336 = vadd.f32 %v242, %v335
  %337 = vdwg.mxu0
  %338 = vst [vmem:[#allocation3] sm:$0xff] %v300
  %339 = vst [vmem:[#allocation3 + $0x8] sm:$0xff] %v302
  %340 = vst [vmem:[#allocation3 + $0x10] sm:$0xff] %v304
  %341 = vst [vmem:[#allocation3 + $0x18] sm:$0xff] %v306
  %342 = vst [vmem:[#allocation3 + $0x20] sm:$0xff] %v310
  %343 = vst [vmem:[#allocation3 + $0x28] sm:$0xff] %v312
  %344 = vst [vmem:[#allocation3 + $0x30] sm:$0xff] %v314
  %345 = vst [vmem:[#allocation3 + $0x38] sm:$0xff] %v316
  %346 = vst [vmem:[#allocation3 + $0x40] sm:$0xff] %v320
  %347 = vst [vmem:[#allocation3 + $0x48] sm:$0xff] %v322
  %348 = vst [vmem:[#allocation3 + $0x50] sm:$0xff] %v324
  %349 = vst [vmem:[#allocation3 + $0x58] sm:$0xff] %v326
  %350 = vst [vmem:[#allocation3 + $0x60] sm:$0xff] %v330
  %351 = vst [vmem:[#allocation3 + $0x68] sm:$0xff] %v332
  %352 = vst [vmem:[#allocation3 + $0x70] sm:$0xff] %v334
  %353 = vst [vmem:[#allocation3 + $0x78] sm:$0xff] %v336
  %v354 = vld [vmem:[#allocation2] sm:$0xff]
  %v355 = vld [vmem:[#allocation2 + $0x8] sm:$0xff]
  %v356 = vld [vmem:[#allocation2 + $0x10] sm:$0xff]
  %v357 = vld [vmem:[#allocation2 + $0x18] sm:$0xff]
  %v358 = vld [vmem:[%s2] sm:$0xff]
  %v359 = vld [vmem:[%s2 + $0x8] sm:$0xff]
  %v360 = vld [vmem:[%s2 + $0x10] sm:$0xff]
  %v361 = vld [vmem:[%s2 + $0x18] sm:$0xff]
  %v362 = vld [vmem:[%s2 + $0x20] sm:$0xff]
  %v363 = vld [vmem:[%s2 + $0x28] sm:$0xff]
  %v364 = vld [vmem:[%s2 + $0x30] sm:$0xff]
  %v365 = vld [vmem:[%s2 + $0x38] sm:$0xff]
  %v374 = vunpack.c.l.b16 %v358
  %v375 = vunpack.c.h.b16 %v358
  %v376 = vunpack.c.l.b16 %v359
  %v377 = vunpack.c.h.b16 %v359
  %v378 = vunpack.c.l.b16 %v360
  %v379 = vunpack.c.h.b16 %v360
  %v380 = vunpack.c.l.b16 %v361
  %v381 = vunpack.c.h.b16 %v361
  %v382 = vunpack.c.l.b16 %v362
  %v383 = vunpack.c.h.b16 %v362
  %v384 = vunpack.c.l.b16 %v363
  %v385 = vunpack.c.h.b16 %v363
  %v386 = vunpack.c.l.b16 %v364
  %v387 = vunpack.c.h.b16 %v364
  %v388 = vunpack.c.l.b16 %v365
  %v389 = vunpack.c.h.b16 %v365
  %v390 = vpack.c.b16 %v376, %v374
  %v391 = vpack.c.b16 %v377, %v375
  %v392 = vpack.c.b16 %v380, %v378
  %v393 = vpack.c.b16 %v381, %v379
  %v394 = vpack.c.b16 %v384, %v382
  %v395 = vpack.c.b16 %v385, %v383
  %v396 = vpack.c.b16 %v388, %v386
  %v397 = vpack.c.b16 %v389, %v387
  %vm406 = vcmask 523264
  %v408 = vsel %vm406, 0, 0
  %410 = vmatprep.subr.bf16.mxu0 0
  %411 = vmatpush1.bf16.msra.mxu0 0
  %412 = vmatprep.subr.bf16.mxu0 0
  %413 = vmatpush1.bf16.msra.mxu0 0
  %414 = vmatprep.subr.bf16.mxu0 0
  %415 = vmatpush1.bf16.msra.mxu0 0
  %416 = vmatprep.subr.bf16.mxu0 0
  %417 = vmatpush1.bf16.msra.mxu0 0
  %418 = vmatprep.subr.bf16.mxu0 %v397
  %419 = vmatpush1.bf16.msra.mxu0 %v396
  %420 = vmatprep.subr.bf16.mxu0 %v395
  %421 = vmatpush1.bf16.msra.mxu0 %v394
  %422 = vmatprep.subr.bf16.mxu0 %v393
  %423 = vmatpush1.bf16.msra.mxu0 %v392
  %424 = vmatprep.subr.bf16.mxu0 %v391
  %425 = vmatpush1.bf16.msra.mxu0 %v390
  %426 = vmatprep.subr.bf16.mxu0 0
  %427 = vmatpush2.bf16.msra.mxu0 0
  %428 = vmatprep.subr.bf16.mxu0 0
  %429 = vmatpush2.bf16.msra.mxu0 0
  %430 = vmatprep.subr.bf16.mxu0 0
  %431 = vmatpush2.bf16.msra.mxu0 0
  %432 = vmatprep.subr.bf16.mxu0 0
  %433 = vmatpush2.bf16.msra.mxu0 0
  %434 = vmatprep.subr.bf16.mxu0 0
  %435 = vmatpush2.bf16.msra.mxu0 0
  %436 = vmatprep.subr.bf16.mxu0 0
  %437 = vmatpush2.bf16.msra.mxu0 0
  %438 = vmatprep.subr.bf16.mxu0 0
  %439 = vmatpush2.bf16.msra.mxu0 0
  %440 = vmatprep.subr.bf16.mxu0 0
  %441 = vmatpush2.bf16.msra.mxu0 0
  %442 = vmatprep.mubr.bf16.mxu0 0
  %443 = vmatmul.mubr.bf16.gmra.mxu0 %v408
  %v444 = vpop.f32.mrf.mxu0
  %v445 = vadd.f32 0.0, %v444
  %v446 = vpop.f32.mrf.mxu0
  %v447 = vadd.f32 0.0, %v446
  %v448 = vpop.f32.mrf.mxu0
  %v449 = vadd.f32 0.0, %v448
  %v450 = vpop.f32.mrf.mxu0
  %v451 = vadd.f32 0.0, %v450
  %452 = vdwg.mxu0
  %v453 = vadd.f32 %v354, %v445
  %v454 = vadd.f32 %v355, %v447
  %v455 = vadd.f32 %v356, %v449
  %v456 = vadd.f32 %v357, %v451
  %v457 = vxor.u32 %v453, 2147483648
  %v458 = vxor.u32 %v454, 2147483648
  %v459 = vxor.u32 %v455, 2147483648
  %v460 = vxor.u32 %v456, 2147483648
  %v461 = vmul.f32 %v457, 1.442695
  %v462 = vpow.pop %v461
  %v463 = vmul.f32 %v458, 1.442695
  %v464 = vpow.pop %v463
  %v465 = vmul.f32 %v459, 1.442695
  %v466 = vpow.pop %v465
  %v467 = vmul.f32 %v460, 1.442695
  %v468 = vpow.pop %v467
  %v469 = vadd.f32 %v462, 1.0
  %v470 = vadd.f32 %v464, 1.0
  %v471 = vadd.f32 %v466, 1.0
  %v472 = vadd.f32 %v468, 1.0
  %v473 = vrcp.pop %v469
  %v474 = vmul.f32 1.0, %v473
  %v475 = vrcp.pop %v470
  %v476 = vmul.f32 1.0, %v475
  %v477 = vrcp.pop %v471
  %v478 = vmul.f32 1.0, %v477
  %v479 = vrcp.pop %v472
  %v480 = vmul.f32 1.0, %v479
  %v481 = vtanh.pop %v454
  %v482 = vtanh.pop %v456
  %v483 = vmul.f32 %v474, 0.0
  %v484 = vmul.f32 %v478, 0.0
  %487 = vrot.lane.b32.xlu0 %v481, 64
  %v488 = vpop.permute.xlu0 %487
  %489 = vrot.lane.b32.xlu0 %v482, 64
  %v490 = vpop.permute.xlu0 %489
  %v493 = vmul.f32 %v474, %v488
  %v494 = vmul.f32 %v478, %v490
  %497 = vrot.lane.b32.xlu0 %v493, 64
  %v498 = vpop.permute.xlu0 %497
  %499 = vrot.lane.b32.xlu0 %v494, 64
  %v500 = vpop.permute.xlu0 %499
  %v503 = vadd.f32 %v483, %v498
  %v504 = vadd.f32 %v484, %v500
  %v505 = vtanh.pop %v503
  %v506 = vtanh.pop %v504
  %509 = vrot.lane.b32.xlu0 %v505, 64
  %v510 = vpop.permute.xlu0 %509
  %511 = vrot.lane.b32.xlu0 %v506, 64
  %v512 = vpop.permute.xlu0 %511
  %v515 = vmul.f32 %v476, %v510
  %v516 = vmul.f32 %v480, %v512
  %s517 = scalar_lea.vmem [#allocation3], 96
  %v518 = vld [vmem:[%s517] sm:$0xff]
  %v519 = vld [vmem:[%s517 + $0x8] sm:$0xff]
  %v520 = vld [vmem:[%s517 + $0x10] sm:$0xff]
  %v521 = vld [vmem:[%s517 + $0x18] sm:$0xff]
  %v522 = vld [vmem:[%s5] sm:$0xff]
  %v523 = vld [vmem:[%s5 + $0x8] sm:$0xff]
  %v524 = vld [vmem:[%s5 + $0x10] sm:$0xff]
  %v525 = vld [vmem:[%s5 + $0x18] sm:$0xff]
  %v526 = vld [vmem:[%s5 + $0x20] sm:$0xff]
  %v527 = vld [vmem:[%s5 + $0x28] sm:$0xff]
  %v528 = vld [vmem:[%s5 + $0x30] sm:$0xff]
  %v529 = vld [vmem:[%s5 + $0x38] sm:$0xff]
  %v538 = vunpack.c.l.b16 %v522
  %v539 = vunpack.c.h.b16 %v522
  %v540 = vunpack.c.l.b16 %v523
  %v541 = vunpack.c.h.b16 %v523
  %v542 = vunpack.c.l.b16 %v524
  %v543 = vunpack.c.h.b16 %v524
  %v544 = vunpack.c.l.b16 %v525
  %v545 = vunpack.c.h.b16 %v525
  %v546 = vunpack.c.l.b16 %v526
  %v547 = vunpack.c.h.b16 %v526
  %v548 = vunpack.c.l.b16 %v527
  %v549 = vunpack.c.h.b16 %v527
  %v550 = vunpack.c.l.b16 %v528
  %v551 = vunpack.c.h.b16 %v528
  %v552 = vunpack.c.l.b16 %v529
  %v553 = vunpack.c.h.b16 %v529
  %v554 = vpack.c.b16 %v540, %v538
  %v555 = vpack.c.b16 %v541, %v539
  %v556 = vpack.c.b16 %v544, %v542
  %v557 = vpack.c.b16 %v545, %v543
  %v558 = vpack.c.b16 %v548, %v546
  %v559 = vpack.c.b16 %v549, %v547
  %v560 = vpack.c.b16 %v552, %v550
  %v561 = vpack.c.b16 %v553, %v551
  %570 = vmatprep.subr.bf16.mxu0 0
  %571 = vmatpush1.bf16.msra.mxu0 0
  %572 = vmatprep.subr.bf16.mxu0 0
  %573 = vmatpush1.bf16.msra.mxu0 0
  %574 = vmatprep.subr.bf16.mxu0 0
  %575 = vmatpush1.bf16.msra.mxu0 0
  %576 = vmatprep.subr.bf16.mxu0 0
  %577 = vmatpush1.bf16.msra.mxu0 0
  %578 = vmatprep.subr.bf16.mxu0 %v561
  %579 = vmatpush1.bf16.msra.mxu0 %v560
  %580 = vmatprep.subr.bf16.mxu0 %v559
  %581 = vmatpush1.bf16.msra.mxu0 %v558
  %582 = vmatprep.subr.bf16.mxu0 %v557
  %583 = vmatpush1.bf16.msra.mxu0 %v556
  %584 = vmatprep.subr.bf16.mxu0 %v555
  %585 = vmatpush1.bf16.msra.mxu0 %v554
  %586 = vmatprep.subr.bf16.mxu0 0
  %587 = vmatpush2.bf16.msra.mxu0 0
  %588 = vmatprep.subr.bf16.mxu0 0
  %589 = vmatpush2.bf16.msra.mxu0 0
  %590 = vmatprep.subr.bf16.mxu0 0
  %591 = vmatpush2.bf16.msra.mxu0 0
  %592 = vmatprep.subr.bf16.mxu0 0
  %593 = vmatpush2.bf16.msra.mxu0 0
  %594 = vmatprep.subr.bf16.mxu0 0
  %595 = vmatpush2.bf16.msra.mxu0 0
  %596 = vmatprep.subr.bf16.mxu0 0
  %597 = vmatpush2.bf16.msra.mxu0 0
  %598 = vmatprep.subr.bf16.mxu0 0
  %599 = vmatpush2.bf16.msra.mxu0 0
  %600 = vmatprep.subr.bf16.mxu0 0
  %601 = vmatpush2.bf16.msra.mxu0 0
  %602 = vmatprep.mubr.bf16.mxu0 0
  %603 = vmatmul.mubr.bf16.gmra.mxu0 %v408
  %v604 = vpop.f32.mrf.mxu0
  %v605 = vadd.f32 0.0, %v604
  %v606 = vpop.f32.mrf.mxu0
  %v607 = vadd.f32 0.0, %v606
  %v608 = vpop.f32.mrf.mxu0
  %v609 = vadd.f32 0.0, %v608
  %v610 = vpop.f32.mrf.mxu0
  %v611 = vadd.f32 0.0, %v610
  %612 = vdwg.mxu0
  %v613 = vadd.f32 %v518, %v605
  %v614 = vadd.f32 %v519, %v607
  %v615 = vadd.f32 %v520, %v609
  %v616 = vadd.f32 %v521, %v611
  %v617 = vxor.u32 %v613, 2147483648
  %v618 = vxor.u32 %v614, 2147483648
  %v619 = vxor.u32 %v615, 2147483648
  %v620 = vxor.u32 %v616, 2147483648
  %v621 = vmul.f32 %v617, 1.442695
  %v622 = vpow.pop %v621
  %v623 = vmul.f32 %v618, 1.442695
  %v624 = vpow.pop %v623
  %v625 = vmul.f32 %v619, 1.442695
  %v626 = vpow.pop %v625
  %v627 = vmul.f32 %v620, 1.442695
  %v628 = vpow.pop %v627
  %v629 = vadd.f32 %v622, 1.0
  %v630 = vadd.f32 %v624, 1.0
  %v631 = vadd.f32 %v626, 1.0
  %v632 = vadd.f32 %v628, 1.0
  %v633 = vrcp.pop %v629
  %v634 = vmul.f32 1.0, %v633
  %v635 = vrcp.pop %v630
  %v636 = vmul.f32 1.0, %v635
  %v637 = vrcp.pop %v631
  %v638 = vmul.f32 1.0, %v637
  %v639 = vrcp.pop %v632
  %v640 = vmul.f32 1.0, %v639
  %v641 = vtanh.pop %v614
  %v642 = vtanh.pop %v616
  %v643 = vmul.f32 %v634, 0.0
  %v644 = vmul.f32 %v638, 0.0
  %647 = vrot.lane.b32.xlu0 %v641, 64
  %v648 = vpop.permute.xlu0 %647
  %649 = vrot.lane.b32.xlu0 %v642, 64
  %v650 = vpop.permute.xlu0 %649
  %v653 = vmul.f32 %v634, %v648
  %v654 = vmul.f32 %v638, %v650
  %657 = vrot.lane.b32.xlu0 %v653, 64
  %v658 = vpop.permute.xlu0 %657
  %659 = vrot.lane.b32.xlu0 %v654, 64
  %v660 = vpop.permute.xlu0 %659
  %v663 = vadd.f32 %v643, %v658
  %v664 = vadd.f32 %v644, %v660
  %v665 = vtanh.pop %v663
  %v666 = vtanh.pop %v664
  %669 = vrot.lane.b32.xlu0 %v665, 64
  %v670 = vpop.permute.xlu0 %669
  %671 = vrot.lane.b32.xlu0 %v666, 64
  %v672 = vpop.permute.xlu0 %671
  %v675 = vmul.f32 %v636, %v670
  %v676 = vmul.f32 %v640, %v672
  %677 = vst.msk [vmem:[#allocation4] sm:$0xff] %vm406, %v515
  %678 = vst.msk [vmem:[#allocation4 + $0x8] sm:$0xff] %vm406, %v516
  %s679 = scalar_lea.vmem [#allocation5], 48
  %680 = vst.msk [vmem:[%s679] sm:$0xff] %vm406, %v675
  %681 = vst.msk [vmem:[%s679 + $0x8] sm:$0xff] %vm406, %v676
  %s682 = scalar_lea.vmem [#allocation2], 32
  %v683 = vld [vmem:[%s682] sm:$0xff]
  %v684 = vld [vmem:[%s682 + $0x8] sm:$0xff]
  %v685 = vld [vmem:[%s682 + $0x10] sm:$0xff]
  %v686 = vld [vmem:[%s682 + $0x18] sm:$0xff]
  %v687 = vpack.c.bf16 %v516, %v515
  %v688 = vld [vmem:[%s2] sm:$0xff]
  %v689 = vld [vmem:[%s2 + $0x8] sm:$0xff]
  %v690 = vld [vmem:[%s2 + $0x10] sm:$0xff]
  %v691 = vld [vmem:[%s2 + $0x18] sm:$0xff]
  %v692 = vld [vmem:[%s2 + $0x20] sm:$0xff]
  %v693 = vld [vmem:[%s2 + $0x28] sm:$0xff]
  %v694 = vld [vmem:[%s2 + $0x30] sm:$0xff]
  %v695 = vld [vmem:[%s2 + $0x38] sm:$0xff]
  %v704 = vunpack.c.l.b16 %v688
  %v705 = vunpack.c.h.b16 %v688
  %v706 = vunpack.c.l.b16 %v689
  %v707 = vunpack.c.h.b16 %v689
  %v708 = vunpack.c.l.b16 %v690
  %v709 = vunpack.c.h.b16 %v690
  %v710 = vunpack.c.l.b16 %v691
  %v711 = vunpack.c.h.b16 %v691
  %v712 = vunpack.c.l.b16 %v692
  %v713 = vunpack.c.h.b16 %v692
  %v714 = vunpack.c.l.b16 %v693
  %v715 = vunpack.c.h.b16 %v693
  %v716 = vunpack.c.l.b16 %v694
  %v717 = vunpack.c.h.b16 %v694
  %v718 = vunpack.c.l.b16 %v695
  %v719 = vunpack.c.h.b16 %v695
  %v720 = vpack.c.b16 %v706, %v704
  %v721 = vpack.c.b16 %v707, %v705
  %v722 = vpack.c.b16 %v710, %v708
  %v723 = vpack.c.b16 %v711, %v709
  %v724 = vpack.c.b16 %v714, %v712
  %v725 = vpack.c.b16 %v715, %v713
  %v726 = vpack.c.b16 %v718, %v716
  %v727 = vpack.c.b16 %v719, %v717
  %v737 = vsel %vm406, %v687, 0
  %739 = vmatprep.subr.bf16.mxu0 0
  %740 = vmatpush1.bf16.msra.mxu0 0
  %741 = vmatprep.subr.bf16.mxu0 0
  %742 = vmatpush1.bf16.msra.mxu0 0
  %743 = vmatprep.subr.bf16.mxu0 0
  %744 = vmatpush1.bf16.msra.mxu0 0
  %745 = vmatprep.subr.bf16.mxu0 0
  %746 = vmatpush1.bf16.msra.mxu0 0
  %747 = vmatprep.subr.bf16.mxu0 %v727
  %748 = vmatpush1.bf16.msra.mxu0 %v726
  %749 = vmatprep.subr.bf16.mxu0 %v725
  %750 = vmatpush1.bf16.msra.mxu0 %v724
  %751 = vmatprep.subr.bf16.mxu0 %v723
  %752 = vmatpush1.bf16.msra.mxu0 %v722
  %753 = vmatprep.subr.bf16.mxu0 %v721
  %754 = vmatpush1.bf16.msra.mxu0 %v720
  %755 = vmatprep.subr.bf16.mxu0 0
  %756 = vmatpush2.bf16.msra.mxu0 0
  %757 = vmatprep.subr.bf16.mxu0 0
  %758 = vmatpush2.bf16.msra.mxu0 0
  %759 = vmatprep.subr.bf16.mxu0 0
  %760 = vmatpush2.bf16.msra.mxu0 0
  %761 = vmatprep.subr.bf16.mxu0 0
  %762 = vmatpush2.bf16.msra.mxu0 0
  %763 = vmatprep.subr.bf16.mxu0 0
  %764 = vmatpush2.bf16.msra.mxu0 0
  %765 = vmatprep.subr.bf16.mxu0 0
  %766 = vmatpush2.bf16.msra.mxu0 0
  %767 = vmatprep.subr.bf16.mxu0 0
  %768 = vmatpush2.bf16.msra.mxu0 0
  %769 = vmatprep.subr.bf16.mxu0 0
  %770 = vmatpush2.bf16.msra.mxu0 0
  %771 = vmatprep.mubr.bf16.mxu0 0
  %772 = vmatmul.mubr.bf16.gmra.mxu0 %v737
  %v773 = vpop.f32.mrf.mxu0
  %v774 = vadd.f32 0.0, %v773
  %v775 = vpop.f32.mrf.mxu0
  %v776 = vadd.f32 0.0, %v775
  %v777 = vpop.f32.mrf.mxu0
  %v778 = vadd.f32 0.0, %v777
  %v779 = vpop.f32.mrf.mxu0
  %v780 = vadd.f32 0.0, %v779
  %781 = vdwg.mxu0
  %v782 = vadd.f32 %v683, %v774
  %v783 = vadd.f32 %v684, %v776
  %v784 = vadd.f32 %v685, %v778
  %v785 = vadd.f32 %v686, %v780
  %v786 = vxor.u32 %v782, 2147483648
  %v787 = vxor.u32 %v783, 2147483648
  %v788 = vxor.u32 %v784, 2147483648
  %v789 = vxor.u32 %v785, 2147483648
  %v790 = vmul.f32 %v786, 1.442695
  %v791 = vpow.pop %v790
  %v792 = vmul.f32 %v787, 1.442695
  %v793 = vpow.pop %v792
  %v794 = vmul.f32 %v788, 1.442695
  %v795 = vpow.pop %v794
  %v796 = vmul.f32 %v789, 1.442695
  %v797 = vpow.pop %v796
  %v798 = vadd.f32 %v791, 1.0
  %v799 = vadd.f32 %v793, 1.0
  %v800 = vadd.f32 %v795, 1.0
  %v801 = vadd.f32 %v797, 1.0
  %v802 = vrcp.pop %v798
  %v803 = vmul.f32 1.0, %v802
  %v804 = vrcp.pop %v799
  %v805 = vmul.f32 1.0, %v804
  %v806 = vrcp.pop %v800
  %v807 = vmul.f32 1.0, %v806
  %v808 = vrcp.pop %v801
  %v809 = vmul.f32 1.0, %v808
  %v810 = vtanh.pop %v783
  %v811 = vtanh.pop %v785
  %v812 = vmul.f32 %v803, %v503
  %v813 = vmul.f32 %v807, %v504
  %816 = vrot.lane.b32.xlu0 %v810, 64
  %v817 = vpop.permute.xlu0 %816
  %818 = vrot.lane.b32.xlu0 %v811, 64
  %v819 = vpop.permute.xlu0 %818
  %v822 = vmul.f32 %v803, %v817
  %v823 = vmul.f32 %v807, %v819
  %826 = vrot.lane.b32.xlu0 %v822, 64
  %v827 = vpop.permute.xlu0 %826
  %828 = vrot.lane.b32.xlu0 %v823, 64
  %v829 = vpop.permute.xlu0 %828
  %v832 = vadd.f32 %v812, %v827
  %v833 = vadd.f32 %v813, %v829
  %v834 = vtanh.pop %v832
  %v835 = vtanh.pop %v833
  %838 = vrot.lane.b32.xlu0 %v834, 64
  %v839 = vpop.permute.xlu0 %838
  %840 = vrot.lane.b32.xlu0 %v835, 64
  %v841 = vpop.permute.xlu0 %840
  %v844 = vmul.f32 %v805, %v839
  %v845 = vmul.f32 %v809, %v841
  %s846 = scalar_lea.vmem [#allocation3], 64
  %v847 = vld [vmem:[%s846] sm:$0xff]
  %v848 = vld [vmem:[%s846 + $0x8] sm:$0xff]
  %v849 = vld [vmem:[%s846 + $0x10] sm:$0xff]
  %v850 = vld [vmem:[%s846 + $0x18] sm:$0xff]
  %v851 = vpack.c.bf16 %v676, %v675
  %v852 = vld [vmem:[%s5] sm:$0xff]
  %v853 = vld [vmem:[%s5 + $0x8] sm:$0xff]
  %v854 = vld [vmem:[%s5 + $0x10] sm:$0xff]
  %v855 = vld [vmem:[%s5 + $0x18] sm:$0xff]
  %v856 = vld [vmem:[%s5 + $0x20] sm:$0xff]
  %v857 = vld [vmem:[%s5 + $0x28] sm:$0xff]
  %v858 = vld [vmem:[%s5 + $0x30] sm:$0xff]
  %v859 = vld [vmem:[%s5 + $0x38] sm:$0xff]
  %v868 = vunpack.c.l.b16 %v852
  %v869 = vunpack.c.h.b16 %v852
  %v870 = vunpack.c.l.b16 %v853
  %v871 = vunpack.c.h.b16 %v853
  %v872 = vunpack.c.l.b16 %v854
  %v873 = vunpack.c.h.b16 %v854
  %v874 = vunpack.c.l.b16 %v855
  %v875 = vunpack.c.h.b16 %v855
  %v876 = vunpack.c.l.b16 %v856
  %v877 = vunpack.c.h.b16 %v856
  %v878 = vunpack.c.l.b16 %v857
  %v879 = vunpack.c.h.b16 %v857
  %v880 = vunpack.c.l.b16 %v858
  %v881 = vunpack.c.h.b16 %v858
  %v882 = vunpack.c.l.b16 %v859
  %v883 = vunpack.c.h.b16 %v859
  %v884 = vpack.c.b16 %v870, %v868
  %v885 = vpack.c.b16 %v871, %v869
  %v886 = vpack.c.b16 %v874, %v872
  %v887 = vpack.c.b16 %v875, %v873
  %v888 = vpack.c.b16 %v878, %v876
  %v889 = vpack.c.b16 %v879, %v877
  %v890 = vpack.c.b16 %v882, %v880
  %v891 = vpack.c.b16 %v883, %v881
  %v901 = vsel %vm406, %v851, 0
  %903 = vmatprep.subr.bf16.mxu0 0
  %904 = vmatpush1.bf16.msra.mxu0 0
  %905 = vmatprep.subr.bf16.mxu0 0
  %906 = vmatpush1.bf16.msra.mxu0 0
  %907 = vmatprep.subr.bf16.mxu0 0
  %908 = vmatpush1.bf16.msra.mxu0 0
  %909 = vmatprep.subr.bf16.mxu0 0
  %910 = vmatpush1.bf16.msra.mxu0 0
  %911 = vmatprep.subr.bf16.mxu0 %v891
  %912 = vmatpush1.bf16.msra.mxu0 %v890
  %913 = vmatprep.subr.bf16.mxu0 %v889
  %914 = vmatpush1.bf16.msra.mxu0 %v888
  %915 = vmatprep.subr.bf16.mxu0 %v887
  %916 = vmatpush1.bf16.msra.mxu0 %v886
  %917 = vmatprep.subr.bf16.mxu0 %v885
  %918 = vmatpush1.bf16.msra.mxu0 %v884
  %919 = vmatprep.subr.bf16.mxu0 0
  %920 = vmatpush2.bf16.msra.mxu0 0
  %921 = vmatprep.subr.bf16.mxu0 0
  %922 = vmatpush2.bf16.msra.mxu0 0
  %923 = vmatprep.subr.bf16.mxu0 0
  %924 = vmatpush2.bf16.msra.mxu0 0
  %925 = vmatprep.subr.bf16.mxu0 0
  %926 = vmatpush2.bf16.msra.mxu0 0
  %927 = vmatprep.subr.bf16.mxu0 0
  %928 = vmatpush2.bf16.msra.mxu0 0
  %929 = vmatprep.subr.bf16.mxu0 0
  %930 = vmatpush2.bf16.msra.mxu0 0
  %931 = vmatprep.subr.bf16.mxu0 0
  %932 = vmatpush2.bf16.msra.mxu0 0
  %933 = vmatprep.subr.bf16.mxu0 0
  %934 = vmatpush2.bf16.msra.mxu0 0
  %935 = vmatprep.mubr.bf16.mxu0 0
  %936 = vmatmul.mubr.bf16.gmra.mxu0 %v901
  %v937 = vpop.f32.mrf.mxu0
  %v938 = vadd.f32 0.0, %v937
  %v939 = vpop.f32.mrf.mxu0
  %v940 = vadd.f32 0.0, %v939
  %v941 = vpop.f32.mrf.mxu0
  %v942 = vadd.f32 0.0, %v941
  %v943 = vpop.f32.mrf.mxu0
  %v944 = vadd.f32 0.0, %v943
  %945 = vdwg.mxu0
  %v946 = vadd.f32 %v847, %v938
  %v947 = vadd.f32 %v848, %v940
  %v948 = vadd.f32 %v849, %v942
  %v949 = vadd.f32 %v850, %v944
  %v950 = vxor.u32 %v946, 2147483648
  %v951 = vxor.u32 %v947, 2147483648
  %v952 = vxor.u32 %v948, 2147483648
  %v953 = vxor.u32 %v949, 2147483648
  %v954 = vmul.f32 %v950, 1.442695
  %v955 = vpow.pop %v954
  %v956 = vmul.f32 %v951, 1.442695
  %v957 = vpow.pop %v956
  %v958 = vmul.f32 %v952, 1.442695
  %v959 = vpow.pop %v958
  %v960 = vmul.f32 %v953, 1.442695
  %v961 = vpow.pop %v960
  %v962 = vadd.f32 %v955, 1.0
  %v963 = vadd.f32 %v957, 1.0
  %v964 = vadd.f32 %v959, 1.0
  %v965 = vadd.f32 %v961, 1.0
  %v966 = vrcp.pop %v962
  %v967 = vmul.f32 1.0, %v966
  %v968 = vrcp.pop %v963
  %v969 = vmul.f32 1.0, %v968
  %v970 = vrcp.pop %v964
  %v971 = vmul.f32 1.0, %v970
  %v972 = vrcp.pop %v965
  %v973 = vmul.f32 1.0, %v972
  %v974 = vtanh.pop %v947
  %v975 = vtanh.pop %v949
  %v976 = vmul.f32 %v967, %v663
  %v977 = vmul.f32 %v971, %v664
  %980 = vrot.lane.b32.xlu0 %v974, 64
  %v981 = vpop.permute.xlu0 %980
  %982 = vrot.lane.b32.xlu0 %v975, 64
  %v983 = vpop.permute.xlu0 %982
  %v986 = vmul.f32 %v967, %v981
  %v987 = vmul.f32 %v971, %v983
  %990 = vrot.lane.b32.xlu0 %v986, 64
  %v991 = vpop.permute.xlu0 %990
  %992 = vrot.lane.b32.xlu0 %v987, 64
  %v993 = vpop.permute.xlu0 %992
  %v996 = vadd.f32 %v976, %v991
  %v997 = vadd.f32 %v977, %v993
  %v998 = vtanh.pop %v996
  %v999 = vtanh.pop %v997
  %1002 = vrot.lane.b32.xlu0 %v998, 64
  %v1003 = vpop.permute.xlu0 %1002
  %1004 = vrot.lane.b32.xlu0 %v999, 64
  %v1005 = vpop.permute.xlu0 %1004
  %v1008 = vmul.f32 %v969, %v1003
  %v1009 = vmul.f32 %v973, %v1005
  %s1010 = scalar_lea.vmem [#allocation4], 16
  %1011 = vst.msk [vmem:[%s1010] sm:$0xff] %vm406, %v844
  %1012 = vst.msk [vmem:[%s1010 + $0x8] sm:$0xff] %vm406, %v845
  %s1013 = scalar_lea.vmem [#allocation5], 32
  %1014 = vst.msk [vmem:[%s1013] sm:$0xff] %vm406, %v1008
  %1015 = vst.msk [vmem:[%s1013 + $0x8] sm:$0xff] %vm406, %v1009
  %s1016 = scalar_lea.vmem [#allocation2], 64
  %v1017 = vld [vmem:[%s1016] sm:$0xff]
  %v1018 = vld [vmem:[%s1016 + $0x8] sm:$0xff]
  %v1019 = vld [vmem:[%s1016 + $0x10] sm:$0xff]
  %v1020 = vld [vmem:[%s1016 + $0x18] sm:$0xff]
  %v1021 = vpack.c.bf16 %v845, %v844
  %v1022 = vld [vmem:[%s2] sm:$0xff]
  %v1023 = vld [vmem:[%s2 + $0x8] sm:$0xff]
  %v1024 = vld [vmem:[%s2 + $0x10] sm:$0xff]
  %v1025 = vld [vmem:[%s2 + $0x18] sm:$0xff]
  %v1026 = vld [vmem:[%s2 + $0x20] sm:$0xff]
  %v1027 = vld [vmem:[%s2 + $0x28] sm:$0xff]
  %v1028 = vld [vmem:[%s2 + $0x30] sm:$0xff]
  %v1029 = vld [vmem:[%s2 + $0x38] sm:$0xff]
  %v1038 = vunpack.c.l.b16 %v1022
  %v1039 = vunpack.c.h.b16 %v1022
  %v1040 = vunpack.c.l.b16 %v1023
  %v1041 = vunpack.c.h.b16 %v1023
  %v1042 = vunpack.c.l.b16 %v1024
  %v1043 = vunpack.c.h.b16 %v1024
  %v1044 = vunpack.c.l.b16 %v1025
  %v1045 = vunpack.c.h.b16 %v1025
  %v1046 = vunpack.c.l.b16 %v1026
  %v1047 = vunpack.c.h.b16 %v1026
  %v1048 = vunpack.c.l.b16 %v1027
  %v1049 = vunpack.c.h.b16 %v1027
  %v1050 = vunpack.c.l.b16 %v1028
  %v1051 = vunpack.c.h.b16 %v1028
  %v1052 = vunpack.c.l.b16 %v1029
  %v1053 = vunpack.c.h.b16 %v1029
  %v1054 = vpack.c.b16 %v1040, %v1038
  %v1055 = vpack.c.b16 %v1041, %v1039
  %v1056 = vpack.c.b16 %v1044, %v1042
  %v1057 = vpack.c.b16 %v1045, %v1043
  %v1058 = vpack.c.b16 %v1048, %v1046
  %v1059 = vpack.c.b16 %v1049, %v1047
  %v1060 = vpack.c.b16 %v1052, %v1050
  %v1061 = vpack.c.b16 %v1053, %v1051
  %v1071 = vsel %vm406, %v1021, 0
  %1073 = vmatprep.subr.bf16.mxu0 0
  %1074 = vmatpush1.bf16.msra.mxu0 0
  %1075 = vmatprep.subr.bf16.mxu0 0
  %1076 = vmatpush1.bf16.msra.mxu0 0
  %1077 = vmatprep.subr.bf16.mxu0 0
  %1078 = vmatpush1.bf16.msra.mxu0 0
  %1079 = vmatprep.subr.bf16.mxu0 0
  %1080 = vmatpush1.bf16.msra.mxu0 0
  %1081 = vmatprep.subr.bf16.mxu0 %v1061
  %1082 = vmatpush1.bf16.msra.mxu0 %v1060
  %1083 = vmatprep.subr.bf16.mxu0 %v1059
  %1084 = vmatpush1.bf16.msra.mxu0 %v1058
  %1085 = vmatprep.subr.bf16.mxu0 %v1057
  %1086 = vmatpush1.bf16.msra.mxu0 %v1056
  %1087 = vmatprep.subr.bf16.mxu0 %v1055
  %1088 = vmatpush1.bf16.msra.mxu0 %v1054
  %1089 = vmatprep.subr.bf16.mxu0 0
  %1090 = vmatpush2.bf16.msra.mxu0 0
  %1091 = vmatprep.subr.bf16.mxu0 0
  %1092 = vmatpush2.bf16.msra.mxu0 0
  %1093 = vmatprep.subr.bf16.mxu0 0
  %1094 = vmatpush2.bf16.msra.mxu0 0
  %1095 = vmatprep.subr.bf16.mxu0 0
  %1096 = vmatpush2.bf16.msra.mxu0 0
  %1097 = vmatprep.subr.bf16.mxu0 0
  %1098 = vmatpush2.bf16.msra.mxu0 0
  %1099 = vmatprep.subr.bf16.mxu0 0
  %1100 = vmatpush2.bf16.msra.mxu0 0
  %1101 = vmatprep.subr.bf16.mxu0 0
  %1102 = vmatpush2.bf16.msra.mxu0 0
  %1103 = vmatprep.subr.bf16.mxu0 0
  %1104 = vmatpush2.bf16.msra.mxu0 0
  %1105 = vmatprep.mubr.bf16.mxu0 0
  %1106 = vmatmul.mubr.bf16.gmra.mxu0 %v1071
  %v1107 = vpop.f32.mrf.mxu0
  %v1108 = vadd.f32 0.0, %v1107
  %v1109 = vpop.f32.mrf.mxu0
  %v1110 = vadd.f32 0.0, %v1109
  %v1111 = vpop.f32.mrf.mxu0
  %v1112 = vadd.f32 0.0, %v1111
  %v1113 = vpop.f32.mrf.mxu0
  %v1114 = vadd.f32 0.0, %v1113
  %1115 = vdwg.mxu0
  %v1116 = vadd.f32 %v1017, %v1108
  %v1117 = vadd.f32 %v1018, %v1110
  %v1118 = vadd.f32 %v1019, %v1112
  %v1119 = vadd.f32 %v1020, %v1114
  %v1120 = vxor.u32 %v1116, 2147483648
  %v1121 = vxor.u32 %v1117, 2147483648
  %v1122 = vxor.u32 %v1118, 2147483648
  %v1123 = vxor.u32 %v1119, 2147483648
  %v1124 = vmul.f32 %v1120, 1.442695
  %v1125 = vpow.pop %v1124
  %v1126 = vmul.f32 %v1121, 1.442695
  %v1127 = vpow.pop %v1126
  %v1128 = vmul.f32 %v1122, 1.442695
  %v1129 = vpow.pop %v1128
  %v1130 = vmul.f32 %v1123, 1.442695
  %v1131 = vpow.pop %v1130
  %v1132 = vadd.f32 %v1125, 1.0
  %v1133 = vadd.f32 %v1127, 1.0
  %v1134 = vadd.f32 %v1129, 1.0
  %v1135 = vadd.f32 %v1131, 1.0
  %v1136 = vrcp.pop %v1132
  %v1137 = vmul.f32 1.0, %v1136
  %v1138 = vrcp.pop %v1133
  %v1139 = vmul.f32 1.0, %v1138
  %v1140 = vrcp.pop %v1134
  %v1141 = vmul.f32 1.0, %v1140
  %v1142 = vrcp.pop %v1135
  %v1143 = vmul.f32 1.0, %v1142
  %v1144 = vtanh.pop %v1117
  %v1145 = vtanh.pop %v1119
  %v1146 = vmul.f32 %v1137, %v832
  %v1147 = vmul.f32 %v1141, %v833
  %1150 = vrot.lane.b32.xlu0 %v1144, 64
  %v1151 = vpop.permute.xlu0 %1150
  %1152 = vrot.lane.b32.xlu0 %v1145, 64
  %v1153 = vpop.permute.xlu0 %1152
  %v1156 = vmul.f32 %v1137, %v1151
  %v1157 = vmul.f32 %v1141, %v1153
  %1160 = vrot.lane.b32.xlu0 %v1156, 64
  %v1161 = vpop.permute.xlu0 %1160
  %1162 = vrot.lane.b32.xlu0 %v1157, 64
  %v1163 = vpop.permute.xlu0 %1162
  %v1166 = vadd.f32 %v1146, %v1161
  %v1167 = vadd.f32 %v1147, %v1163
  %v1168 = vtanh.pop %v1166
  %v1169 = vtanh.pop %v1167
  %1172 = vrot.lane.b32.xlu0 %v1168, 64
  %v1173 = vpop.permute.xlu0 %1172
  %1174 = vrot.lane.b32.xlu0 %v1169, 64
  %v1175 = vpop.permute.xlu0 %1174
  %v1178 = vmul.f32 %v1139, %v1173
  %v1179 = vmul.f32 %v1143, %v1175
  %s1180 = scalar_lea.vmem [#allocation3], 32
  %v1181 = vld [vmem:[%s1180] sm:$0xff]
  %v1182 = vld [vmem:[%s1180 + $0x8] sm:$0xff]
  %v1183 = vld [vmem:[%s1180 + $0x10] sm:$0xff]
  %v1184 = vld [vmem:[%s1180 + $0x18] sm:$0xff]
  %v1185 = vpack.c.bf16 %v1009, %v1008
  %v1186 = vld [vmem:[%s5] sm:$0xff]
  %v1187 = vld [vmem:[%s5 + $0x8] sm:$0xff]
  %v1188 = vld [vmem:[%s5 + $0x10] sm:$0xff]
  %v1189 = vld [vmem:[%s5 + $0x18] sm:$0xff]
  %v1190 = vld [vmem:[%s5 + $0x20] sm:$0xff]
  %v1191 = vld [vmem:[%s5 + $0x28] sm:$0xff]
  %v1192 = vld [vmem:[%s5 + $0x30] sm:$0xff]
  %v1193 = vld [vmem:[%s5 + $0x38] sm:$0xff]
  %v1202 = vunpack.c.l.b16 %v1186
  %v1203 = vunpack.c.h.b16 %v1186
  %v1204 = vunpack.c.l.b16 %v1187
  %v1205 = vunpack.c.h.b16 %v1187
  %v1206 = vunpack.c.l.b16 %v1188
  %v1207 = vunpack.c.h.b16 %v1188
  %v1208 = vunpack.c.l.b16 %v1189
  %v1209 = vunpack.c.h.b16 %v1189
  %v1210 = vunpack.c.l.b16 %v1190
  %v1211 = vunpack.c.h.b16 %v1190
  %v1212 = vunpack.c.l.b16 %v1191
  %v1213 = vunpack.c.h.b16 %v1191
  %v1214 = vunpack.c.l.b16 %v1192
  %v1215 = vunpack.c.h.b16 %v1192
  %v1216 = vunpack.c.l.b16 %v1193
  %v1217 = vunpack.c.h.b16 %v1193
  %v1218 = vpack.c.b16 %v1204, %v1202
  %v1219 = vpack.c.b16 %v1205, %v1203
  %v1220 = vpack.c.b16 %v1208, %v1206
  %v1221 = vpack.c.b16 %v1209, %v1207
  %v1222 = vpack.c.b16 %v1212, %v1210
  %v1223 = vpack.c.b16 %v1213, %v1211
  %v1224 = vpack.c.b16 %v1216, %v1214
  %v1225 = vpack.c.b16 %v1217, %v1215
  %v1235 = vsel %vm406, %v1185, 0
  %1237 = vmatprep.subr.bf16.mxu0 0
  %1238 = vmatpush1.bf16.msra.mxu0 0
  %1239 = vmatprep.subr.bf16.mxu0 0
  %1240 = vmatpush1.bf16.msra.mxu0 0
  %1241 = vmatprep.subr.bf16.mxu0 0
  %1242 = vmatpush1.bf16.msra.mxu0 0
  %1243 = vmatprep.subr.bf16.mxu0 0
  %1244 = vmatpush1.bf16.msra.mxu0 0
  %1245 = vmatprep.subr.bf16.mxu0 %v1225
  %1246 = vmatpush1.bf16.msra.mxu0 %v1224
  %1247 = vmatprep.subr.bf16.mxu0 %v1223
  %1248 = vmatpush1.bf16.msra.mxu0 %v1222
  %1249 = vmatprep.subr.bf16.mxu0 %v1221
  %1250 = vmatpush1.bf16.msra.mxu0 %v1220
  %1251 = vmatprep.subr.bf16.mxu0 %v1219
  %1252 = vmatpush1.bf16.msra.mxu0 %v1218
  %1253 = vmatprep.subr.bf16.mxu0 0
  %1254 = vmatpush2.bf16.msra.mxu0 0
  %1255 = vmatprep.subr.bf16.mxu0 0
  %1256 = vmatpush2.bf16.msra.mxu0 0
  %1257 = vmatprep.subr.bf16.mxu0 0
  %1258 = vmatpush2.bf16.msra.mxu0 0
  %1259 = vmatprep.subr.bf16.mxu0 0
  %1260 = vmatpush2.bf16.msra.mxu0 0
  %1261 = vmatprep.subr.bf16.mxu0 0
  %1262 = vmatpush2.bf16.msra.mxu0 0
  %1263 = vmatprep.subr.bf16.mxu0 0
  %1264 = vmatpush2.bf16.msra.mxu0 0
  %1265 = vmatprep.subr.bf16.mxu0 0
  %1266 = vmatpush2.bf16.msra.mxu0 0
  %1267 = vmatprep.subr.bf16.mxu0 0
  %1268 = vmatpush2.bf16.msra.mxu0 0
  %1269 = vmatprep.mubr.bf16.mxu0 0
  %1270 = vmatmul.mubr.bf16.gmra.mxu0 %v1235
  %v1271 = vpop.f32.mrf.mxu0
  %v1272 = vadd.f32 0.0, %v1271
  %v1273 = vpop.f32.mrf.mxu0
  %v1274 = vadd.f32 0.0, %v1273
  %v1275 = vpop.f32.mrf.mxu0
  %v1276 = vadd.f32 0.0, %v1275
  %v1277 = vpop.f32.mrf.mxu0
  %v1278 = vadd.f32 0.0, %v1277
  %1279 = vdwg.mxu0
  %v1280 = vadd.f32 %v1181, %v1272
  %v1281 = vadd.f32 %v1182, %v1274
  %v1282 = vadd.f32 %v1183, %v1276
  %v1283 = vadd.f32 %v1184, %v1278
  %v1284 = vxor.u32 %v1280, 2147483648
  %v1285 = vxor.u32 %v1281, 2147483648
  %v1286 = vxor.u32 %v1282, 2147483648
  %v1287 = vxor.u32 %v1283, 2147483648
  %v1288 = vmul.f32 %v1284, 1.442695
  %v1289 = vpow.pop %v1288
  %v1290 = vmul.f32 %v1285, 1.442695
  %v1291 = vpow.pop %v1290
  %v1292 = vmul.f32 %v1286, 1.442695
  %v1293 = vpow.pop %v1292
  %v1294 = vmul.f32 %v1287, 1.442695
  %v1295 = vpow.pop %v1294
  %v1296 = vadd.f32 %v1289, 1.0
  %v1297 = vadd.f32 %v1291, 1.0
  %v1298 = vadd.f32 %v1293, 1.0
  %v1299 = vadd.f32 %v1295, 1.0
  %v1300 = vrcp.pop %v1296
  %v1301 = vmul.f32 1.0, %v1300
  %v1302 = vrcp.pop %v1297
  %v1303 = vmul.f32 1.0, %v1302
  %v1304 = vrcp.pop %v1298
  %v1305 = vmul.f32 1.0, %v1304
  %v1306 = vrcp.pop %v1299
  %v1307 = vmul.f32 1.0, %v1306
  %v1308 = vtanh.pop %v1281
  %v1309 = vtanh.pop %v1283
  %v1310 = vmul.f32 %v1301, %v996
  %v1311 = vmul.f32 %v1305, %v997
  %1314 = vrot.lane.b32.xlu0 %v1308, 64
  %v1315 = vpop.permute.xlu0 %1314
  %1316 = vrot.lane.b32.xlu0 %v1309, 64
  %v1317 = vpop.permute.xlu0 %1316
  %v1320 = vmul.f32 %v1301, %v1315
  %v1321 = vmul.f32 %v1305, %v1317
  %1324 = vrot.lane.b32.xlu0 %v1320, 64
  %v1325 = vpop.permute.xlu0 %1324
  %1326 = vrot.lane.b32.xlu0 %v1321, 64
  %v1327 = vpop.permute.xlu0 %1326
  %v1330 = vadd.f32 %v1310, %v1325
  %v1331 = vadd.f32 %v1311, %v1327
  %v1332 = vtanh.pop %v1330
  %v1333 = vtanh.pop %v1331
  %1336 = vrot.lane.b32.xlu0 %v1332, 64
  %v1337 = vpop.permute.xlu0 %1336
  %1338 = vrot.lane.b32.xlu0 %v1333, 64
  %v1339 = vpop.permute.xlu0 %1338
  %v1342 = vmul.f32 %v1303, %v1337
  %v1343 = vmul.f32 %v1307, %v1339
  %s1344 = scalar_lea.vmem [#allocation4], 32
  %1345 = vst.msk [vmem:[%s1344] sm:$0xff] %vm406, %v1178
  %1346 = vst.msk [vmem:[%s1344 + $0x8] sm:$0xff] %vm406, %v1179
  %s1347 = scalar_lea.vmem [#allocation5], 16
  %1348 = vst.msk [vmem:[%s1347] sm:$0xff] %vm406, %v1342
  %1349 = vst.msk [vmem:[%s1347 + $0x8] sm:$0xff] %vm406, %v1343
  %s1350 = scalar_lea.vmem [#allocation2], 96
  %v1351 = vld [vmem:[%s1350] sm:$0xff]
  %v1352 = vld [vmem:[%s1350 + $0x8] sm:$0xff]
  %v1353 = vld [vmem:[%s1350 + $0x10] sm:$0xff]
  %v1354 = vld [vmem:[%s1350 + $0x18] sm:$0xff]
  %v1355 = vpack.c.bf16 %v1179, %v1178
  %v1356 = vld [vmem:[%s2] sm:$0xff]
  %v1357 = vld [vmem:[%s2 + $0x8] sm:$0xff]
  %v1358 = vld [vmem:[%s2 + $0x10] sm:$0xff]
  %v1359 = vld [vmem:[%s2 + $0x18] sm:$0xff]
  %v1360 = vld [vmem:[%s2 + $0x20] sm:$0xff]
  %v1361 = vld [vmem:[%s2 + $0x28] sm:$0xff]
  %v1362 = vld [vmem:[%s2 + $0x30] sm:$0xff]
  %v1363 = vld [vmem:[%s2 + $0x38] sm:$0xff]
  %v1372 = vunpack.c.l.b16 %v1356
  %v1373 = vunpack.c.h.b16 %v1356
  %v1374 = vunpack.c.l.b16 %v1357
  %v1375 = vunpack.c.h.b16 %v1357
  %v1376 = vunpack.c.l.b16 %v1358
  %v1377 = vunpack.c.h.b16 %v1358
  %v1378 = vunpack.c.l.b16 %v1359
  %v1379 = vunpack.c.h.b16 %v1359
  %v1380 = vunpack.c.l.b16 %v1360
  %v1381 = vunpack.c.h.b16 %v1360
  %v1382 = vunpack.c.l.b16 %v1361
  %v1383 = vunpack.c.h.b16 %v1361
  %v1384 = vunpack.c.l.b16 %v1362
  %v1385 = vunpack.c.h.b16 %v1362
  %v1386 = vunpack.c.l.b16 %v1363
  %v1387 = vunpack.c.h.b16 %v1363
  %v1388 = vpack.c.b16 %v1374, %v1372
  %v1389 = vpack.c.b16 %v1375, %v1373
  %v1390 = vpack.c.b16 %v1378, %v1376
  %v1391 = vpack.c.b16 %v1379, %v1377
  %v1392 = vpack.c.b16 %v1382, %v1380
  %v1393 = vpack.c.b16 %v1383, %v1381
  %v1394 = vpack.c.b16 %v1386, %v1384
  %v1395 = vpack.c.b16 %v1387, %v1385
  %v1405 = vsel %vm406, %v1355, 0
  %1407 = vmatprep.subr.bf16.mxu0 0
  %1408 = vmatpush1.bf16.msra.mxu0 0
  %1409 = vmatprep.subr.bf16.mxu0 0
  %1410 = vmatpush1.bf16.msra.mxu0 0
  %1411 = vmatprep.subr.bf16.mxu0 0
  %1412 = vmatpush1.bf16.msra.mxu0 0
  %1413 = vmatprep.subr.bf16.mxu0 0
  %1414 = vmatpush1.bf16.msra.mxu0 0
  %1415 = vmatprep.subr.bf16.mxu0 %v1395
  %1416 = vmatpush1.bf16.msra.mxu0 %v1394
  %1417 = vmatprep.subr.bf16.mxu0 %v1393
  %1418 = vmatpush1.bf16.msra.mxu0 %v1392
  %1419 = vmatprep.subr.bf16.mxu0 %v1391
  %1420 = vmatpush1.bf16.msra.mxu0 %v1390
  %1421 = vmatprep.subr.bf16.mxu0 %v1389
  %1422 = vmatpush1.bf16.msra.mxu0 %v1388
  %1423 = vmatprep.subr.bf16.mxu0 0
  %1424 = vmatpush2.bf16.msra.mxu0 0
  %1425 = vmatprep.subr.bf16.mxu0 0
  %1426 = vmatpush2.bf16.msra.mxu0 0
  %1427 = vmatprep.subr.bf16.mxu0 0
  %1428 = vmatpush2.bf16.msra.mxu0 0
  %1429 = vmatprep.subr.bf16.mxu0 0
  %1430 = vmatpush2.bf16.msra.mxu0 0
  %1431 = vmatprep.subr.bf16.mxu0 0
  %1432 = vmatpush2.bf16.msra.mxu0 0
  %1433 = vmatprep.subr.bf16.mxu0 0
  %1434 = vmatpush2.bf16.msra.mxu0 0
  %1435 = vmatprep.subr.bf16.mxu0 0
  %1436 = vmatpush2.bf16.msra.mxu0 0
  %1437 = vmatprep.subr.bf16.mxu0 0
  %1438 = vmatpush2.bf16.msra.mxu0 0
  %1439 = vmatprep.mubr.bf16.mxu0 0
  %1440 = vmatmul.mubr.bf16.gmra.mxu0 %v1405
  %v1441 = vpop.f32.mrf.mxu0
  %v1442 = vadd.f32 0.0, %v1441
  %v1443 = vpop.f32.mrf.mxu0
  %v1444 = vadd.f32 0.0, %v1443
  %v1445 = vpop.f32.mrf.mxu0
  %v1446 = vadd.f32 0.0, %v1445
  %v1447 = vpop.f32.mrf.mxu0
  %v1448 = vadd.f32 0.0, %v1447
  %1449 = vdwg.mxu0
  %v1450 = vadd.f32 %v1351, %v1442
  %v1451 = vadd.f32 %v1352, %v1444
  %v1452 = vadd.f32 %v1353, %v1446
  %v1453 = vadd.f32 %v1354, %v1448
  %v1454 = vxor.u32 %v1450, 2147483648
  %v1455 = vxor.u32 %v1451, 2147483648
  %v1456 = vxor.u32 %v1452, 2147483648
  %v1457 = vxor.u32 %v1453, 2147483648
  %v1458 = vmul.f32 %v1454, 1.442695
  %v1459 = vpow.pop %v1458
  %v1460 = vmul.f32 %v1455, 1.442695
  %v1461 = vpow.pop %v1460
  %v1462 = vmul.f32 %v1456, 1.442695
  %v1463 = vpow.pop %v1462
  %v1464 = vmul.f32 %v1457, 1.442695
  %v1465 = vpow.pop %v1464
  %v1466 = vadd.f32 %v1459, 1.0
  %v1467 = vadd.f32 %v1461, 1.0
  %v1468 = vadd.f32 %v1463, 1.0
  %v1469 = vadd.f32 %v1465, 1.0
  %v1470 = vrcp.pop %v1466
  %v1471 = vmul.f32 1.0, %v1470
  %v1472 = vrcp.pop %v1467
  %v1473 = vmul.f32 1.0, %v1472
  %v1474 = vrcp.pop %v1468
  %v1475 = vmul.f32 1.0, %v1474
  %v1476 = vrcp.pop %v1469
  %v1477 = vmul.f32 1.0, %v1476
  %v1478 = vtanh.pop %v1451
  %v1479 = vtanh.pop %v1453
  %v1480 = vmul.f32 %v1471, %v1166
  %v1481 = vmul.f32 %v1475, %v1167
  %1484 = vrot.lane.b32.xlu0 %v1478, 64
  %v1485 = vpop.permute.xlu0 %1484
  %1486 = vrot.lane.b32.xlu0 %v1479, 64
  %v1487 = vpop.permute.xlu0 %1486
  %v1490 = vmul.f32 %v1471, %v1485
  %v1491 = vmul.f32 %v1475, %v1487
  %1494 = vrot.lane.b32.xlu0 %v1490, 64
  %v1495 = vpop.permute.xlu0 %1494
  %1496 = vrot.lane.b32.xlu0 %v1491, 64
  %v1497 = vpop.permute.xlu0 %1496
  %v1500 = vadd.f32 %v1480, %v1495
  %v1501 = vadd.f32 %v1481, %v1497
  %v1502 = vtanh.pop %v1500
  %v1503 = vtanh.pop %v1501
  %1506 = vrot.lane.b32.xlu0 %v1502, 64
  %v1507 = vpop.permute.xlu0 %1506
  %1508 = vrot.lane.b32.xlu0 %v1503, 64
  %v1509 = vpop.permute.xlu0 %1508
  %v1512 = vmul.f32 %v1473, %v1507
  %v1513 = vmul.f32 %v1477, %v1509
  %v1514 = vld [vmem:[#allocation3] sm:$0xff]
  %v1515 = vld [vmem:[#allocation3 + $0x8] sm:$0xff]
  %v1516 = vld [vmem:[#allocation3 + $0x10] sm:$0xff]
  %v1517 = vld [vmem:[#allocation3 + $0x18] sm:$0xff]
  %v1518 = vpack.c.bf16 %v1343, %v1342
  %v1519 = vld [vmem:[%s5] sm:$0xff]
  %v1520 = vld [vmem:[%s5 + $0x8] sm:$0xff]
  %v1521 = vld [vmem:[%s5 + $0x10] sm:$0xff]
  %v1522 = vld [vmem:[%s5 + $0x18] sm:$0xff]
  %v1523 = vld [vmem:[%s5 + $0x20] sm:$0xff]
  %v1524 = vld [vmem:[%s5 + $0x28] sm:$0xff]
  %v1525 = vld [vmem:[%s5 + $0x30] sm:$0xff]
  %v1526 = vld [vmem:[%s5 + $0x38] sm:$0xff]
  %v1535 = vunpack.c.l.b16 %v1519
  %v1536 = vunpack.c.h.b16 %v1519
  %v1537 = vunpack.c.l.b16 %v1520
  %v1538 = vunpack.c.h.b16 %v1520
  %v1539 = vunpack.c.l.b16 %v1521
  %v1540 = vunpack.c.h.b16 %v1521
  %v1541 = vunpack.c.l.b16 %v1522
  %v1542 = vunpack.c.h.b16 %v1522
  %v1543 = vunpack.c.l.b16 %v1523
  %v1544 = vunpack.c.h.b16 %v1523
  %v1545 = vunpack.c.l.b16 %v1524
  %v1546 = vunpack.c.h.b16 %v1524
  %v1547 = vunpack.c.l.b16 %v1525
  %v1548 = vunpack.c.h.b16 %v1525
  %v1549 = vunpack.c.l.b16 %v1526
  %v1550 = vunpack.c.h.b16 %v1526
  %v1551 = vpack.c.b16 %v1537, %v1535
  %v1552 = vpack.c.b16 %v1538, %v1536
  %v1553 = vpack.c.b16 %v1541, %v1539
  %v1554 = vpack.c.b16 %v1542, %v1540
  %v1555 = vpack.c.b16 %v1545, %v1543
  %v1556 = vpack.c.b16 %v1546, %v1544
  %v1557 = vpack.c.b16 %v1549, %v1547
  %v1558 = vpack.c.b16 %v1550, %v1548
  %v1568 = vsel %vm406, %v1518, 0
  %1570 = vmatprep.subr.bf16.mxu0 0
  %1571 = vmatpush1.bf16.msra.mxu0 0
  %1572 = vmatprep.subr.bf16.mxu0 0
  %1573 = vmatpush1.bf16.msra.mxu0 0
  %1574 = vmatprep.subr.bf16.mxu0 0
  %1575 = vmatpush1.bf16.msra.mxu0 0
  %1576 = vmatprep.subr.bf16.mxu0 0
  %1577 = vmatpush1.bf16.msra.mxu0 0
  %1578 = vmatprep.subr.bf16.mxu0 %v1558
  %1579 = vmatpush1.bf16.msra.mxu0 %v1557
  %1580 = vmatprep.subr.bf16.mxu0 %v1556
  %1581 = vmatpush1.bf16.msra.mxu0 %v1555
  %1582 = vmatprep.subr.bf16.mxu0 %v1554
  %1583 = vmatpush1.bf16.msra.mxu0 %v1553
  %1584 = vmatprep.subr.bf16.mxu0 %v1552
  %1585 = vmatpush1.bf16.msra.mxu0 %v1551
  %1586 = vmatprep.subr.bf16.mxu0 0
  %1587 = vmatpush2.bf16.msra.mxu0 0
  %1588 = vmatprep.subr.bf16.mxu0 0
  %1589 = vmatpush2.bf16.msra.mxu0 0
  %1590 = vmatprep.subr.bf16.mxu0 0
  %1591 = vmatpush2.bf16.msra.mxu0 0
  %1592 = vmatprep.subr.bf16.mxu0 0
  %1593 = vmatpush2.bf16.msra.mxu0 0
  %1594 = vmatprep.subr.bf16.mxu0 0
  %1595 = vmatpush2.bf16.msra.mxu0 0
  %1596 = vmatprep.subr.bf16.mxu0 0
  %1597 = vmatpush2.bf16.msra.mxu0 0
  %1598 = vmatprep.subr.bf16.mxu0 0
  %1599 = vmatpush2.bf16.msra.mxu0 0
  %1600 = vmatprep.subr.bf16.mxu0 0
  %1601 = vmatpush2.bf16.msra.mxu0 0
  %1602 = vmatprep.mubr.bf16.mxu0 0
  %1603 = vmatmul.mubr.bf16.gmra.mxu0 %v1568
  %v1604 = vpop.f32.mrf.mxu0
  %v1605 = vadd.f32 0.0, %v1604
  %v1606 = vpop.f32.mrf.mxu0
  %v1607 = vadd.f32 0.0, %v1606
  %v1608 = vpop.f32.mrf.mxu0
  %v1609 = vadd.f32 0.0, %v1608
  %v1610 = vpop.f32.mrf.mxu0
  %v1611 = vadd.f32 0.0, %v1610
  %1612 = vdwg.mxu0
  %v1613 = vadd.f32 %v1514, %v1605
  %v1614 = vadd.f32 %v1515, %v1607
  %v1615 = vadd.f32 %v1516, %v1609
  %v1616 = vadd.f32 %v1517, %v1611
  %v1617 = vxor.u32 %v1613, 2147483648
  %v1618 = vxor.u32 %v1614, 2147483648
  %v1619 = vxor.u32 %v1615, 2147483648
  %v1620 = vxor.u32 %v1616, 2147483648
  %v1621 = vmul.f32 %v1617, 1.442695
  %v1622 = vpow.pop %v1621
  %v1623 = vmul.f32 %v1618, 1.442695
  %v1624 = vpow.pop %v1623
  %v1625 = vmul.f32 %v1619, 1.442695
  %v1626 = vpow.pop %v1625
  %v1627 = vmul.f32 %v1620, 1.442695
  %v1628 = vpow.pop %v1627
  %v1629 = vadd.f32 %v1622, 1.0
  %v1630 = vadd.f32 %v1624, 1.0
  %v1631 = vadd.f32 %v1626, 1.0
  %v1632 = vadd.f32 %v1628, 1.0
  %v1633 = vrcp.pop %v1629
  %v1634 = vmul.f32 1.0, %v1633
  %v1635 = vrcp.pop %v1630
  %v1636 = vmul.f32 1.0, %v1635
  %v1637 = vrcp.pop %v1631
  %v1638 = vmul.f32 1.0, %v1637
  %v1639 = vrcp.pop %v1632
  %v1640 = vmul.f32 1.0, %v1639
  %v1641 = vtanh.pop %v1614
  %v1642 = vtanh.pop %v1616
  %v1643 = vmul.f32 %v1634, %v1330
  %v1644 = vmul.f32 %v1638, %v1331
  %1647 = vrot.lane.b32.xlu0 %v1641, 64
  %v1648 = vpop.permute.xlu0 %1647
  %1649 = vrot.lane.b32.xlu0 %v1642, 64
  %v1650 = vpop.permute.xlu0 %1649
  %v1653 = vmul.f32 %v1634, %v1648
  %v1654 = vmul.f32 %v1638, %v1650
  %1657 = vrot.lane.b32.xlu0 %v1653, 64
  %v1658 = vpop.permute.xlu0 %1657
  %1659 = vrot.lane.b32.xlu0 %v1654, 64
  %v1660 = vpop.permute.xlu0 %1659
  %v1663 = vadd.f32 %v1643, %v1658
  %v1664 = vadd.f32 %v1644, %v1660
  %v1665 = vtanh.pop %v1663
  %v1666 = vtanh.pop %v1664
  %1669 = vrot.lane.b32.xlu0 %v1665, 64
  %v1670 = vpop.permute.xlu0 %1669
  %1671 = vrot.lane.b32.xlu0 %v1666, 64
  %v1672 = vpop.permute.xlu0 %1671
  %v1675 = vmul.f32 %v1636, %v1670
  %v1676 = vmul.f32 %v1640, %v1672
  %s1677 = scalar_lea.vmem [#allocation4], 48
  %1678 = vst.msk [vmem:[%s1677] sm:$0xff] %vm406, %v1512
  %1679 = vst.msk [vmem:[%s1677 + $0x8] sm:$0xff] %vm406, %v1513
  %1680 = vst.msk [vmem:[#allocation5] sm:$0xff] %vm406, %v1675
  %1681 = vst.msk [vmem:[#allocation5 + $0x8] sm:$0xff] %vm406, %v1676
  %v1682 = vld [vmem:[#allocation4] sm:$0xff]
  %v1683 = vld [vmem:[#allocation4 + $0x8] sm:$0xff]
  %v1684 = vld [vmem:[#allocation4 + $0x10] sm:$0xff]
  %v1685 = vld [vmem:[#allocation4 + $0x18] sm:$0xff]
  %v1686 = vld [vmem:[#allocation4 + $0x20] sm:$0xff]
  %v1687 = vld [vmem:[#allocation4 + $0x28] sm:$0xff]
  %v1688 = vld [vmem:[#allocation4 + $0x30] sm:$0xff]
  %v1689 = vld [vmem:[#allocation4 + $0x38] sm:$0xff]
  %v1690 = vpack.c.bf16 %v1683, %v1682
  %v1691 = vpack.c.bf16 %v1685, %v1684
  %v1692 = vpack.c.bf16 %v1687, %v1686
  %v1693 = vpack.c.bf16 %v1689, %v1688
  %v1694 = vld [vmem:[#allocation5] sm:$0xff]
  %v1695 = vld [vmem:[#allocation5 + $0x8] sm:$0xff]
  %v1696 = vld [vmem:[#allocation5 + $0x10] sm:$0xff]
  %v1697 = vld [vmem:[#allocation5 + $0x18] sm:$0xff]
  %v1698 = vld [vmem:[#allocation5 + $0x20] sm:$0xff]
  %v1699 = vld [vmem:[#allocation5 + $0x28] sm:$0xff]
  %v1700 = vld [vmem:[#allocation5 + $0x30] sm:$0xff]
  %v1701 = vld [vmem:[#allocation5 + $0x38] sm:$0xff]
  %v1702 = vpack.c.bf16 %v1695, %v1694
  %v1703 = vpack.c.bf16 %v1697, %v1696
  %v1704 = vpack.c.bf16 %v1699, %v1698
  %v1705 = vpack.c.bf16 %v1701, %v1700
  %v1706 = vld [vmem:[%s7] sm:$0xff]
  %v1707 = vld [vmem:[%s7 + $0x8] sm:$0xff]
  %v1708 = vld [vmem:[%s7 + $0x10] sm:$0xff]
  %v1709 = vld [vmem:[%s7 + $0x18] sm:$0xff]
  %v1710 = vld [vmem:[%s7 + $0x20] sm:$0xff]
  %v1711 = vld [vmem:[%s7 + $0x28] sm:$0xff]
  %v1712 = vld [vmem:[%s7 + $0x30] sm:$0xff]
  %v1713 = vld [vmem:[%s7 + $0x38] sm:$0xff]
  %v1714 = vld [vmem:[%s8] sm:$0xff]
  %v1715 = vld [vmem:[%s8 + $0x8] sm:$0xff]
  %v1716 = vld [vmem:[%s8 + $0x10] sm:$0xff]
  %v1717 = vld [vmem:[%s8 + $0x18] sm:$0xff]
  %v1718 = vld [vmem:[%s8 + $0x20] sm:$0xff]
  %v1719 = vld [vmem:[%s8 + $0x28] sm:$0xff]
  %v1720 = vld [vmem:[%s8 + $0x30] sm:$0xff]
  %v1721 = vld [vmem:[%s8 + $0x38] sm:$0xff]
  %v1730 = vunpack.c.l.b16 %v1714
  %v1731 = vunpack.c.h.b16 %v1714
  %v1732 = vunpack.c.l.b16 %v1715
  %v1733 = vunpack.c.h.b16 %v1715
  %v1734 = vunpack.c.l.b16 %v1716
  %v1735 = vunpack.c.h.b16 %v1716
  %v1736 = vunpack.c.l.b16 %v1717
  %v1737 = vunpack.c.h.b16 %v1717
  %v1738 = vunpack.c.l.b16 %v1718
  %v1739 = vunpack.c.h.b16 %v1718
  %v1740 = vunpack.c.l.b16 %v1719
  %v1741 = vunpack.c.h.b16 %v1719
  %v1742 = vunpack.c.l.b16 %v1720
  %v1743 = vunpack.c.h.b16 %v1720
  %v1744 = vunpack.c.l.b16 %v1721
  %v1745 = vunpack.c.h.b16 %v1721
  %v1746 = vpack.c.b16 %v1732, %v1730
  %v1747 = vpack.c.b16 %v1733, %v1731
  %v1748 = vpack.c.b16 %v1736, %v1734
  %v1749 = vpack.c.b16 %v1737, %v1735
  %v1750 = vpack.c.b16 %v1740, %v1738
  %v1751 = vpack.c.b16 %v1741, %v1739
  %v1752 = vpack.c.b16 %v1744, %v1742
  %v1753 = vpack.c.b16 %v1745, %v1743
  %v1763 = vsel %vm406, %v1702, 0
  %v1766 = vsel %vm406, %v1703, 0
  %v1769 = vsel %vm406, %v1704, 0
  %v1772 = vsel %vm406, %v1705, 0
  %1774 = vmatprep.subr.bf16.mxu0 0
  %1775 = vmatpush1.bf16.msra.mxu0 0
  %1776 = vmatprep.subr.bf16.mxu0 0
  %1777 = vmatpush1.bf16.msra.mxu0 0
  %1778 = vmatprep.subr.bf16.mxu0 0
  %1779 = vmatpush1.bf16.msra.mxu0 0
  %1780 = vmatprep.subr.bf16.mxu0 0
  %1781 = vmatpush1.bf16.msra.mxu0 0
  %1782 = vmatprep.subr.bf16.mxu0 %v1753
  %1783 = vmatpush1.bf16.msra.mxu0 %v1752
  %1784 = vmatprep.subr.bf16.mxu0 %v1751
  %1785 = vmatpush1.bf16.msra.mxu0 %v1750
  %1786 = vmatprep.subr.bf16.mxu0 %v1749
  %1787 = vmatpush1.bf16.msra.mxu0 %v1748
  %1788 = vmatprep.subr.bf16.mxu0 %v1747
  %1789 = vmatpush1.bf16.msra.mxu0 %v1746
  %1790 = vmatprep.subr.bf16.mxu0 0
  %1791 = vmatpush2.bf16.msra.mxu0 0
  %1792 = vmatprep.subr.bf16.mxu0 0
  %1793 = vmatpush2.bf16.msra.mxu0 0
  %1794 = vmatprep.subr.bf16.mxu0 0
  %1795 = vmatpush2.bf16.msra.mxu0 0
  %1796 = vmatprep.subr.bf16.mxu0 0
  %1797 = vmatpush2.bf16.msra.mxu0 0
  %1798 = vmatprep.subr.bf16.mxu0 0
  %1799 = vmatpush2.bf16.msra.mxu0 0
  %1800 = vmatprep.subr.bf16.mxu0 0
  %1801 = vmatpush2.bf16.msra.mxu0 0
  %1802 = vmatprep.subr.bf16.mxu0 0
  %1803 = vmatpush2.bf16.msra.mxu0 0
  %1804 = vmatprep.subr.bf16.mxu0 0
  %1805 = vmatpush2.bf16.msra.mxu0 0
  %1806 = vmatprep.mubr.bf16.mxu0 0
  %1807 = vmatmul.mubr.bf16.gmra.mxu0 %v1763
  %v1808 = vpop.f32.mrf.mxu0
  %v1809 = vadd.f32 0.0, %v1808
  %v1810 = vpop.f32.mrf.mxu0
  %v1811 = vadd.f32 0.0, %v1810
  %v1812 = vpop.f32.mrf.mxu0
  %v1813 = vadd.f32 0.0, %v1812
  %v1814 = vpop.f32.mrf.mxu0
  %v1815 = vadd.f32 0.0, %v1814
  %1816 = vmatprep.mubr.bf16.mxu0 0
  %1817 = vmatmul.mubr.bf16.gmra.mxu0 %v1766
  %v1818 = vpop.f32.mrf.mxu0
  %v1819 = vadd.f32 0.0, %v1818
  %v1820 = vpop.f32.mrf.mxu0
  %v1821 = vadd.f32 0.0, %v1820
  %v1822 = vpop.f32.mrf.mxu0
  %v1823 = vadd.f32 0.0, %v1822
  %v1824 = vpop.f32.mrf.mxu0
  %v1825 = vadd.f32 0.0, %v1824
  %1826 = vmatprep.mubr.bf16.mxu0 0
  %1827 = vmatmul.mubr.bf16.gmra.mxu0 %v1769
  %v1828 = vpop.f32.mrf.mxu0
  %v1829 = vadd.f32 0.0, %v1828
  %v1830 = vpop.f32.mrf.mxu0
  %v1831 = vadd.f32 0.0, %v1830
  %v1832 = vpop.f32.mrf.mxu0
  %v1833 = vadd.f32 0.0, %v1832
  %v1834 = vpop.f32.mrf.mxu0
  %v1835 = vadd.f32 0.0, %v1834
  %1836 = vmatprep.mubr.bf16.mxu0 0
  %1837 = vmatmul.mubr.bf16.gmra.mxu0 %v1772
  %v1838 = vpop.f32.mrf.mxu0
  %v1839 = vadd.f32 0.0, %v1838
  %v1840 = vpop.f32.mrf.mxu0
  %v1841 = vadd.f32 0.0, %v1840
  %v1842 = vpop.f32.mrf.mxu0
  %v1843 = vadd.f32 0.0, %v1842
  %v1844 = vpop.f32.mrf.mxu0
  %v1845 = vadd.f32 0.0, %v1844
  %1846 = vdwg.mxu0
  %v1855 = vunpack.c.l.b16 %v1706
  %v1856 = vunpack.c.h.b16 %v1706
  %v1857 = vunpack.c.l.b16 %v1707
  %v1858 = vunpack.c.h.b16 %v1707
  %v1859 = vunpack.c.l.b16 %v1708
  %v1860 = vunpack.c.h.b16 %v1708
  %v1861 = vunpack.c.l.b16 %v1709
  %v1862 = vunpack.c.h.b16 %v1709
  %v1863 = vunpack.c.l.b16 %v1710
  %v1864 = vunpack.c.h.b16 %v1710
  %v1865 = vunpack.c.l.b16 %v1711
  %v1866 = vunpack.c.h.b16 %v1711
  %v1867 = vunpack.c.l.b16 %v1712
  %v1868 = vunpack.c.h.b16 %v1712
  %v1869 = vunpack.c.l.b16 %v1713
  %v1870 = vunpack.c.h.b16 %v1713
  %v1871 = vpack.c.b16 %v1857, %v1855
  %v1872 = vpack.c.b16 %v1858, %v1856
  %v1873 = vpack.c.b16 %v1861, %v1859
  %v1874 = vpack.c.b16 %v1862, %v1860
  %v1875 = vpack.c.b16 %v1865, %v1863
  %v1876 = vpack.c.b16 %v1866, %v1864
  %v1877 = vpack.c.b16 %v1869, %v1867
  %v1878 = vpack.c.b16 %v1870, %v1868
  %v1888 = vsel %vm406, %v1690, 0
  %v1891 = vsel %vm406, %v1691, 0
  %v1894 = vsel %vm406, %v1692, 0
  %v1897 = vsel %vm406, %v1693, 0
  %1899 = vmatprep.subr.bf16.mxu0 0
  %1900 = vmatpush1.bf16.msra.mxu0 0
  %1901 = vmatprep.subr.bf16.mxu0 0
  %1902 = vmatpush1.bf16.msra.mxu0 0
  %1903 = vmatprep.subr.bf16.mxu0 0
  %1904 = vmatpush1.bf16.msra.mxu0 0
  %1905 = vmatprep.subr.bf16.mxu0 0
  %1906 = vmatpush1.bf16.msra.mxu0 0
  %1907 = vmatprep.subr.bf16.mxu0 %v1878
  %1908 = vmatpush1.bf16.msra.mxu0 %v1877
  %1909 = vmatprep.subr.bf16.mxu0 %v1876
  %1910 = vmatpush1.bf16.msra.mxu0 %v1875
  %1911 = vmatprep.subr.bf16.mxu0 %v1874
  %1912 = vmatpush1.bf16.msra.mxu0 %v1873
  %1913 = vmatprep.subr.bf16.mxu0 %v1872
  %1914 = vmatpush1.bf16.msra.mxu0 %v1871
  %1915 = vmatprep.subr.bf16.mxu0 0
  %1916 = vmatpush2.bf16.msra.mxu0 0
  %1917 = vmatprep.subr.bf16.mxu0 0
  %1918 = vmatpush2.bf16.msra.mxu0 0
  %1919 = vmatprep.subr.bf16.mxu0 0
  %1920 = vmatpush2.bf16.msra.mxu0 0
  %1921 = vmatprep.subr.bf16.mxu0 0
  %1922 = vmatpush2.bf16.msra.mxu0 0
  %1923 = vmatprep.subr.bf16.mxu0 0
  %1924 = vmatpush2.bf16.msra.mxu0 0
  %1925 = vmatprep.subr.bf16.mxu0 0
  %1926 = vmatpush2.bf16.msra.mxu0 0
  %1927 = vmatprep.subr.bf16.mxu0 0
  %1928 = vmatpush2.bf16.msra.mxu0 0
  %1929 = vmatprep.subr.bf16.mxu0 0
  %1930 = vmatpush2.bf16.msra.mxu0 0
  %1931 = vmatprep.mubr.bf16.mxu0 0
  %1932 = vmatmul.mubr.bf16.gmra.mxu0 %v1888
  %v1933 = vpop.f32.mrf.mxu0
  %v1934 = vadd.f32 %v1809, %v1933
  %v1935 = vpop.f32.mrf.mxu0
  %v1936 = vadd.f32 %v1811, %v1935
  %v1937 = vpop.f32.mrf.mxu0
  %v1938 = vadd.f32 %v1813, %v1937
  %v1939 = vpop.f32.mrf.mxu0
  %v1940 = vadd.f32 %v1815, %v1939
  %1941 = vmatprep.mubr.bf16.mxu0 0
  %1942 = vmatmul.mubr.bf16.gmra.mxu0 %v1891
  %v1943 = vpop.f32.mrf.mxu0
  %v1944 = vadd.f32 %v1819, %v1943
  %v1945 = vpop.f32.mrf.mxu0
  %v1946 = vadd.f32 %v1821, %v1945
  %v1947 = vpop.f32.mrf.mxu0
  %v1948 = vadd.f32 %v1823, %v1947
  %v1949 = vpop.f32.mrf.mxu0
  %v1950 = vadd.f32 %v1825, %v1949
  %1951 = vmatprep.mubr.bf16.mxu0 0
  %1952 = vmatmul.mubr.bf16.gmra.mxu0 %v1894
  %v1953 = vpop.f32.mrf.mxu0
  %v1954 = vadd.f32 %v1829, %v1953
  %v1955 = vpop.f32.mrf.mxu0
  %v1956 = vadd.f32 %v1831, %v1955
  %v1957 = vpop.f32.mrf.mxu0
  %v1958 = vadd.f32 %v1833, %v1957
  %v1959 = vpop.f32.mrf.mxu0
  %v1960 = vadd.f32 %v1835, %v1959
  %1961 = vmatprep.mubr.bf16.mxu0 0
  %1962 = vmatmul.mubr.bf16.gmra.mxu0 %v1897
  %v1963 = vpop.f32.mrf.mxu0
  %v1964 = vadd.f32 %v1839, %v1963
  %v1965 = vpop.f32.mrf.mxu0
  %v1966 = vadd.f32 %v1841, %v1965
  %v1967 = vpop.f32.mrf.mxu0
  %v1968 = vadd.f32 %v1843, %v1967
  %v1969 = vpop.f32.mrf.mxu0
  %v1970 = vadd.f32 %v1845, %v1969
  %1971 = vdwg.mxu0
  %v1972 = vld [vmem:[%s10] sm:$0x3]
  %v1974 = vlaneseq
  %v1975 = vshrl.u32 %v1974, 7
  %v1976 = vsub.s32 0, %v1975
  %v1977 = vrot.slane %v1972, %v1976
  %v1978 = vlaneseq
  %v1979 = vshrl.u32 %v1978, 7
  %v1980 = vsub.s32 1, %v1979
  %v1981 = vrot.slane %v1972, %v1980
  %v1984 = vadd.f32 %v1934, %v1977
  %v1985 = vadd.f32 %v1936, %v1981
  %v1986 = vadd.f32 %v1938, %v1977
  %v1987 = vadd.f32 %v1940, %v1981
  %v1988 = vadd.f32 %v1944, %v1977
  %v1989 = vadd.f32 %v1946, %v1981
  %v1990 = vadd.f32 %v1948, %v1977
  %v1991 = vadd.f32 %v1950, %v1981
  %v1992 = vadd.f32 %v1954, %v1977
  %v1993 = vadd.f32 %v1956, %v1981
  %v1994 = vadd.f32 %v1958, %v1977
  %v1995 = vadd.f32 %v1960, %v1981
  %v1996 = vadd.f32 %v1964, %v1977
  %v1997 = vadd.f32 %v1966, %v1981
  %v1998 = vadd.f32 %v1968, %v1977
  %v1999 = vadd.f32 %v1970, %v1981
  %2000 = vst [vmem:[#allocation6] sm:$0xff] %v1984
  %2001 = vst [vmem:[#allocation6 + $0x8] sm:$0xff] %v1985
  %2002 = vst [vmem:[#allocation6 + $0x10] sm:$0xff] %v1986
  %2003 = vst [vmem:[#allocation6 + $0x18] sm:$0xff] %v1987
  %2004 = vst [vmem:[#allocation6 + $0x20] sm:$0xff] %v1988
  %2005 = vst [vmem:[#allocation6 + $0x28] sm:$0xff] %v1989
  %2006 = vst [vmem:[#allocation6 + $0x30] sm:$0xff] %v1990
  %2007 = vst [vmem:[#allocation6 + $0x38] sm:$0xff] %v1991
  %2008 = vst [vmem:[#allocation6 + $0x40] sm:$0xff] %v1992
  %2009 = vst [vmem:[#allocation6 + $0x48] sm:$0xff] %v1993
  %2010 = vst [vmem:[#allocation6 + $0x50] sm:$0xff] %v1994
  %2011 = vst [vmem:[#allocation6 + $0x58] sm:$0xff] %v1995
  %2012 = vst [vmem:[#allocation6 + $0x60] sm:$0xff] %v1996
  %2013 = vst [vmem:[#allocation6 + $0x68] sm:$0xff] %v1997
  %2014 = vst [vmem:[#allocation6 + $0x70] sm:$0xff] %v1998
  %2015 = vst [vmem:[#allocation6 + $0x78] sm:$0xff] %v1999
  %v2016 = vld [vmem:[#allocation6] sm:$0xff]
  %v2017 = vld [vmem:[#allocation6 + $0x8] sm:$0xff]
  %v2018 = vld [vmem:[#allocation6 + $0x10] sm:$0xff]
  %v2019 = vld [vmem:[#allocation6 + $0x18] sm:$0xff]
  %v2020 = vld [vmem:[%s9] sm:$0xff]
  %v2021 = vld [vmem:[%s9 + $0x8] sm:$0xff]
  %v2022 = vld [vmem:[%s9 + $0x10] sm:$0xff]
  %v2023 = vld [vmem:[%s9 + $0x18] sm:$0xff]
  %v2024 = vld [vmem:[%s9 + $0x20] sm:$0xff]
  %v2025 = vld [vmem:[%s9 + $0x28] sm:$0xff]
  %v2026 = vld [vmem:[%s9 + $0x30] sm:$0xff]
  %v2027 = vld [vmem:[%s9 + $0x38] sm:$0xff]
  %v2036 = vunpack.c.l.b16 %v2020
  %v2037 = vunpack.c.h.b16 %v2020
  %v2038 = vunpack.c.l.b16 %v2021
  %v2039 = vunpack.c.h.b16 %v2021
  %v2040 = vunpack.c.l.b16 %v2022
  %v2041 = vunpack.c.h.b16 %v2022
  %v2042 = vunpack.c.l.b16 %v2023
  %v2043 = vunpack.c.h.b16 %v2023
  %v2044 = vunpack.c.l.b16 %v2024
  %v2045 = vunpack.c.h.b16 %v2024
  %v2046 = vunpack.c.l.b16 %v2025
  %v2047 = vunpack.c.h.b16 %v2025
  %v2048 = vunpack.c.l.b16 %v2026
  %v2049 = vunpack.c.h.b16 %v2026
  %v2050 = vunpack.c.l.b16 %v2027
  %v2051 = vunpack.c.h.b16 %v2027
  %v2052 = vpack.c.b16 %v2038, %v2036
  %v2053 = vpack.c.b16 %v2039, %v2037
  %v2054 = vpack.c.b16 %v2042, %v2040
  %v2055 = vpack.c.b16 %v2043, %v2041
  %v2056 = vpack.c.b16 %v2046, %v2044
  %v2057 = vpack.c.b16 %v2047, %v2045
  %v2058 = vpack.c.b16 %v2050, %v2048
  %v2059 = vpack.c.b16 %v2051, %v2049
  %2068 = vmatprep.subr.bf16.mxu0 0
  %2069 = vmatpush1.bf16.msra.mxu0 0
  %2070 = vmatprep.subr.bf16.mxu0 0
  %2071 = vmatpush1.bf16.msra.mxu0 0
  %2072 = vmatprep.subr.bf16.mxu0 0
  %2073 = vmatpush1.bf16.msra.mxu0 0
  %2074 = vmatprep.subr.bf16.mxu0 0
  %2075 = vmatpush1.bf16.msra.mxu0 0
  %2076 = vmatprep.subr.bf16.mxu0 %v2059
  %2077 = vmatpush1.bf16.msra.mxu0 %v2058
  %2078 = vmatprep.subr.bf16.mxu0 %v2057
  %2079 = vmatpush1.bf16.msra.mxu0 %v2056
  %2080 = vmatprep.subr.bf16.mxu0 %v2055
  %2081 = vmatpush1.bf16.msra.mxu0 %v2054
  %2082 = vmatprep.subr.bf16.mxu0 %v2053
  %2083 = vmatpush1.bf16.msra.mxu0 %v2052
  %2084 = vmatprep.subr.bf16.mxu0 0
  %2085 = vmatpush2.bf16.msra.mxu0 0
  %2086 = vmatprep.subr.bf16.mxu0 0
  %2087 = vmatpush2.bf16.msra.mxu0 0
  %2088 = vmatprep.subr.bf16.mxu0 0
  %2089 = vmatpush2.bf16.msra.mxu0 0
  %2090 = vmatprep.subr.bf16.mxu0 0
  %2091 = vmatpush2.bf16.msra.mxu0 0
  %2092 = vmatprep.subr.bf16.mxu0 0
  %2093 = vmatpush2.bf16.msra.mxu0 0
  %2094 = vmatprep.subr.bf16.mxu0 0
  %2095 = vmatpush2.bf16.msra.mxu0 0
  %2096 = vmatprep.subr.bf16.mxu0 0
  %2097 = vmatpush2.bf16.msra.mxu0 0
  %2098 = vmatprep.subr.bf16.mxu0 0
  %2099 = vmatpush2.bf16.msra.mxu0 0
  %2100 = vmatprep.mubr.bf16.mxu0 0
  %2101 = vmatmul.mubr.bf16.gmra.mxu0 %v408
  %v2102 = vpop.f32.mrf.mxu0
  %v2103 = vadd.f32 0.0, %v2102
  %v2104 = vpop.f32.mrf.mxu0
  %v2105 = vadd.f32 0.0, %v2104
  %v2106 = vpop.f32.mrf.mxu0
  %v2107 = vadd.f32 0.0, %v2106
  %v2108 = vpop.f32.mrf.mxu0
  %v2109 = vadd.f32 0.0, %v2108
  %2110 = vdwg.mxu0
  %v2111 = vadd.f32 %v2016, %v2103
  %v2112 = vadd.f32 %v2017, %v2105
  %v2113 = vadd.f32 %v2018, %v2107
  %v2114 = vadd.f32 %v2019, %v2109
  %v2115 = vxor.u32 %v2111, 2147483648
  %v2116 = vxor.u32 %v2112, 2147483648
  %v2117 = vxor.u32 %v2113, 2147483648
  %v2118 = vxor.u32 %v2114, 2147483648
  %v2119 = vmul.f32 %v2115, 1.442695
  %v2120 = vpow.pop %v2119
  %v2121 = vmul.f32 %v2116, 1.442695
  %v2122 = vpow.pop %v2121
  %v2123 = vmul.f32 %v2117, 1.442695
  %v2124 = vpow.pop %v2123
  %v2125 = vmul.f32 %v2118, 1.442695
  %v2126 = vpow.pop %v2125
  %v2127 = vadd.f32 %v2120, 1.0
  %v2128 = vadd.f32 %v2122, 1.0
  %v2129 = vadd.f32 %v2124, 1.0
  %v2130 = vadd.f32 %v2126, 1.0
  %v2131 = vrcp.pop %v2127
  %v2132 = vmul.f32 1.0, %v2131
  %v2133 = vrcp.pop %v2128
  %v2134 = vmul.f32 1.0, %v2133
  %v2135 = vrcp.pop %v2129
  %v2136 = vmul.f32 1.0, %v2135
  %v2137 = vrcp.pop %v2130
  %v2138 = vmul.f32 1.0, %v2137
  %v2139 = vtanh.pop %v2112
  %v2140 = vtanh.pop %v2114
  %v2141 = vmul.f32 %v2132, 0.0
  %v2142 = vmul.f32 %v2136, 0.0
  %2145 = vrot.lane.b32.xlu0 %v2139, 64
  %v2146 = vpop.permute.xlu0 %2145
  %2147 = vrot.lane.b32.xlu0 %v2140, 64
  %v2148 = vpop.permute.xlu0 %2147
  %v2151 = vmul.f32 %v2132, %v2146
  %v2152 = vmul.f32 %v2136, %v2148
  %2155 = vrot.lane.b32.xlu0 %v2151, 64
  %v2156 = vpop.permute.xlu0 %2155
  %2157 = vrot.lane.b32.xlu0 %v2152, 64
  %v2158 = vpop.permute.xlu0 %2157
  %v2161 = vadd.f32 %v2141, %v2156
  %v2162 = vadd.f32 %v2142, %v2158
  %v2163 = vtanh.pop %v2161
  %v2164 = vtanh.pop %v2162
  %2167 = vrot.lane.b32.xlu0 %v2163, 64
  %v2168 = vpop.permute.xlu0 %2167
  %2169 = vrot.lane.b32.xlu0 %v2164, 64
  %v2170 = vpop.permute.xlu0 %2169
  %v2173 = vmul.f32 %v2134, %v2168
  %v2174 = vmul.f32 %v2138, %v2170
  %s2175 = scalar_lea.vmem [#allocation6], 32
  %v2176 = vld [vmem:[%s2175] sm:$0xff]
  %v2177 = vld [vmem:[%s2175 + $0x8] sm:$0xff]
  %v2178 = vld [vmem:[%s2175 + $0x10] sm:$0xff]
  %v2179 = vld [vmem:[%s2175 + $0x18] sm:$0xff]
  %v2180 = vpack.c.bf16 %v2174, %v2173
  %v2182 = vsel %vm406, %v2180, 0
  %2184 = vmatprep.subr.bf16.mxu0 0
  %2185 = vmatpush1.bf16.msra.mxu0 0
  %2186 = vmatprep.subr.bf16.mxu0 0
  %2187 = vmatpush1.bf16.msra.mxu0 0
  %2188 = vmatprep.subr.bf16.mxu0 0
  %2189 = vmatpush1.bf16.msra.mxu0 0
  %2190 = vmatprep.subr.bf16.mxu0 0
  %2191 = vmatpush1.bf16.msra.mxu0 0
  %2192 = vmatprep.subr.bf16.mxu0 %v2059
  %2193 = vmatpush1.bf16.msra.mxu0 %v2058
  %2194 = vmatprep.subr.bf16.mxu0 %v2057
  %2195 = vmatpush1.bf16.msra.mxu0 %v2056
  %2196 = vmatprep.subr.bf16.mxu0 %v2055
  %2197 = vmatpush1.bf16.msra.mxu0 %v2054
  %2198 = vmatprep.subr.bf16.mxu0 %v2053
  %2199 = vmatpush1.bf16.msra.mxu0 %v2052
  %2200 = vmatprep.subr.bf16.mxu0 0
  %2201 = vmatpush2.bf16.msra.mxu0 0
  %2202 = vmatprep.subr.bf16.mxu0 0
  %2203 = vmatpush2.bf16.msra.mxu0 0
  %2204 = vmatprep.subr.bf16.mxu0 0
  %2205 = vmatpush2.bf16.msra.mxu0 0
  %2206 = vmatprep.subr.bf16.mxu0 0
  %2207 = vmatpush2.bf16.msra.mxu0 0
  %2208 = vmatprep.subr.bf16.mxu0 0
  %2209 = vmatpush2.bf16.msra.mxu0 0
  %2210 = vmatprep.subr.bf16.mxu0 0
  %2211 = vmatpush2.bf16.msra.mxu0 0
  %2212 = vmatprep.subr.bf16.mxu0 0
  %2213 = vmatpush2.bf16.msra.mxu0 0
  %2214 = vmatprep.subr.bf16.mxu0 0
  %2215 = vmatpush2.bf16.msra.mxu0 0
  %2216 = vmatprep.mubr.bf16.mxu0 0
  %2217 = vmatmul.mubr.bf16.gmra.mxu0 %v2182
  %v2218 = vpop.f32.mrf.mxu0
  %v2219 = vadd.f32 0.0, %v2218
  %v2220 = vpop.f32.mrf.mxu0
  %v2221 = vadd.f32 0.0, %v2220
  %v2222 = vpop.f32.mrf.mxu0
  %v2223 = vadd.f32 0.0, %v2222
  %v2224 = vpop.f32.mrf.mxu0
  %v2225 = vadd.f32 0.0, %v2224
  %2226 = vdwg.mxu0
  %v2227 = vadd.f32 %v2176, %v2219
  %v2228 = vadd.f32 %v2177, %v2221
  %v2229 = vadd.f32 %v2178, %v2223
  %v2230 = vadd.f32 %v2179, %v2225
  %v2231 = vxor.u32 %v2227, 2147483648
  %v2232 = vxor.u32 %v2228, 2147483648
  %v2233 = vxor.u32 %v2229, 2147483648
  %v2234 = vxor.u32 %v2230, 2147483648
  %v2235 = vmul.f32 %v2231, 1.442695
  %v2236 = vpow.pop %v2235
  %v2237 = vmul.f32 %v2232, 1.442695
  %v2238 = vpow.pop %v2237
  %v2239 = vmul.f32 %v2233, 1.442695
  %v2240 = vpow.pop %v2239
  %v2241 = vmul.f32 %v2234, 1.442695
  %v2242 = vpow.pop %v2241
  %v2243 = vadd.f32 %v2236, 1.0
  %v2244 = vadd.f32 %v2238, 1.0
  %v2245 = vadd.f32 %v2240, 1.0
  %v2246 = vadd.f32 %v2242, 1.0
  %v2247 = vrcp.pop %v2243
  %v2248 = vmul.f32 1.0, %v2247
  %v2249 = vrcp.pop %v2244
  %v2250 = vmul.f32 1.0, %v2249
  %v2251 = vrcp.pop %v2245
  %v2252 = vmul.f32 1.0, %v2251
  %v2253 = vrcp.pop %v2246
  %v2254 = vmul.f32 1.0, %v2253
  %v2255 = vtanh.pop %v2228
  %v2256 = vtanh.pop %v2230
  %v2257 = vmul.f32 %v2248, %v2161
  %v2258 = vmul.f32 %v2252, %v2162
  %2261 = vrot.lane.b32.xlu0 %v2255, 64
  %v2262 = vpop.permute.xlu0 %2261
  %2263 = vrot.lane.b32.xlu0 %v2256, 64
  %v2264 = vpop.permute.xlu0 %2263
  %v2267 = vmul.f32 %v2248, %v2262
  %v2268 = vmul.f32 %v2252, %v2264
  %2271 = vrot.lane.b32.xlu0 %v2267, 64
  %v2272 = vpop.permute.xlu0 %2271
  %2273 = vrot.lane.b32.xlu0 %v2268, 64
  %v2274 = vpop.permute.xlu0 %2273
  %v2277 = vadd.f32 %v2257, %v2272
  %v2278 = vadd.f32 %v2258, %v2274
  %v2279 = vtanh.pop %v2277
  %v2280 = vtanh.pop %v2278
  %2283 = vrot.lane.b32.xlu0 %v2279, 64
  %v2284 = vpop.permute.xlu0 %2283
  %2285 = vrot.lane.b32.xlu0 %v2280, 64
  %v2286 = vpop.permute.xlu0 %2285
  %v2289 = vmul.f32 %v2250, %v2284
  %v2290 = vmul.f32 %v2254, %v2286
  %s2291 = scalar_lea.vmem [#allocation6], 64
  %v2292 = vld [vmem:[%s2291] sm:$0xff]
  %v2293 = vld [vmem:[%s2291 + $0x8] sm:$0xff]
  %v2294 = vld [vmem:[%s2291 + $0x10] sm:$0xff]
  %v2295 = vld [vmem:[%s2291 + $0x18] sm:$0xff]
  %v2296 = vpack.c.bf16 %v2290, %v2289
  %v2298 = vsel %vm406, %v2296, 0
  %2300 = vmatprep.subr.bf16.mxu0 0
  %2301 = vmatpush1.bf16.msra.mxu0 0
  %2302 = vmatprep.subr.bf16.mxu0 0
  %2303 = vmatpush1.bf16.msra.mxu0 0
  %2304 = vmatprep.subr.bf16.mxu0 0
  %2305 = vmatpush1.bf16.msra.mxu0 0
  %2306 = vmatprep.subr.bf16.mxu0 0
  %2307 = vmatpush1.bf16.msra.mxu0 0
  %2308 = vmatprep.subr.bf16.mxu0 %v2059
  %2309 = vmatpush1.bf16.msra.mxu0 %v2058
  %2310 = vmatprep.subr.bf16.mxu0 %v2057
  %2311 = vmatpush1.bf16.msra.mxu0 %v2056
  %2312 = vmatprep.subr.bf16.mxu0 %v2055
  %2313 = vmatpush1.bf16.msra.mxu0 %v2054
  %2314 = vmatprep.subr.bf16.mxu0 %v2053
  %2315 = vmatpush1.bf16.msra.mxu0 %v2052
  %2316 = vmatprep.subr.bf16.mxu0 0
  %2317 = vmatpush2.bf16.msra.mxu0 0
  %2318 = vmatprep.subr.bf16.mxu0 0
  %2319 = vmatpush2.bf16.msra.mxu0 0
  %2320 = vmatprep.subr.bf16.mxu0 0
  %2321 = vmatpush2.bf16.msra.mxu0 0
  %2322 = vmatprep.subr.bf16.mxu0 0
  %2323 = vmatpush2.bf16.msra.mxu0 0
  %2324 = vmatprep.subr.bf16.mxu0 0
  %2325 = vmatpush2.bf16.msra.mxu0 0
  %2326 = vmatprep.subr.bf16.mxu0 0
  %2327 = vmatpush2.bf16.msra.mxu0 0
  %2328 = vmatprep.subr.bf16.mxu0 0
  %2329 = vmatpush2.bf16.msra.mxu0 0
  %2330 = vmatprep.subr.bf16.mxu0 0
  %2331 = vmatpush2.bf16.msra.mxu0 0
  %2332 = vmatprep.mubr.bf16.mxu0 0
  %2333 = vmatmul.mubr.bf16.gmra.mxu0 %v2298
  %v2334 = vpop.f32.mrf.mxu0
  %v2335 = vadd.f32 0.0, %v2334
  %v2336 = vpop.f32.mrf.mxu0
  %v2337 = vadd.f32 0.0, %v2336
  %v2338 = vpop.f32.mrf.mxu0
  %v2339 = vadd.f32 0.0, %v2338
  %v2340 = vpop.f32.mrf.mxu0
  %v2341 = vadd.f32 0.0, %v2340
  %2342 = vdwg.mxu0
  %v2343 = vadd.f32 %v2292, %v2335
  %v2344 = vadd.f32 %v2293, %v2337
  %v2345 = vadd.f32 %v2294, %v2339
  %v2346 = vadd.f32 %v2295, %v2341
  %v2347 = vxor.u32 %v2343, 2147483648
  %v2348 = vxor.u32 %v2344, 2147483648
  %v2349 = vxor.u32 %v2345, 2147483648
  %v2350 = vxor.u32 %v2346, 2147483648
  %v2351 = vmul.f32 %v2347, 1.442695
  %v2352 = vpow.pop %v2351
  %v2353 = vmul.f32 %v2348, 1.442695
  %v2354 = vpow.pop %v2353
  %v2355 = vmul.f32 %v2349, 1.442695
  %v2356 = vpow.pop %v2355
  %v2357 = vmul.f32 %v2350, 1.442695
  %v2358 = vpow.pop %v2357
  %v2359 = vadd.f32 %v2352, 1.0
  %v2360 = vadd.f32 %v2354, 1.0
  %v2361 = vadd.f32 %v2356, 1.0
  %v2362 = vadd.f32 %v2358, 1.0
  %v2363 = vrcp.pop %v2359
  %v2364 = vmul.f32 1.0, %v2363
  %v2365 = vrcp.pop %v2360
  %v2366 = vmul.f32 1.0, %v2365
  %v2367 = vrcp.pop %v2361
  %v2368 = vmul.f32 1.0, %v2367
  %v2369 = vrcp.pop %v2362
  %v2370 = vmul.f32 1.0, %v2369
  %v2371 = vtanh.pop %v2344
  %v2372 = vtanh.pop %v2346
  %v2373 = vmul.f32 %v2364, %v2277
  %v2374 = vmul.f32 %v2368, %v2278
  %2377 = vrot.lane.b32.xlu0 %v2371, 64
  %v2378 = vpop.permute.xlu0 %2377
  %2379 = vrot.lane.b32.xlu0 %v2372, 64
  %v2380 = vpop.permute.xlu0 %2379
  %v2383 = vmul.f32 %v2364, %v2378
  %v2384 = vmul.f32 %v2368, %v2380
  %2387 = vrot.lane.b32.xlu0 %v2383, 64
  %v2388 = vpop.permute.xlu0 %2387
  %2389 = vrot.lane.b32.xlu0 %v2384, 64
  %v2390 = vpop.permute.xlu0 %2389
  %v2393 = vadd.f32 %v2373, %v2388
  %v2394 = vadd.f32 %v2374, %v2390
  %v2395 = vtanh.pop %v2393
  %v2396 = vtanh.pop %v2394
  %2399 = vrot.lane.b32.xlu0 %v2395, 64
  %v2400 = vpop.permute.xlu0 %2399
  %2401 = vrot.lane.b32.xlu0 %v2396, 64
  %v2402 = vpop.permute.xlu0 %2401
  %v2405 = vmul.f32 %v2366, %v2400
  %v2406 = vmul.f32 %v2370, %v2402
  %s2407 = scalar_lea.vmem [#allocation6], 96
  %v2408 = vld [vmem:[%s2407] sm:$0xff]
  %v2409 = vld [vmem:[%s2407 + $0x8] sm:$0xff]
  %v2410 = vld [vmem:[%s2407 + $0x10] sm:$0xff]
  %v2411 = vld [vmem:[%s2407 + $0x18] sm:$0xff]
  %v2412 = vpack.c.bf16 %v2406, %v2405
  %v2414 = vsel %vm406, %v2412, 0
  %2416 = vmatprep.subr.bf16.mxu0 0
  %2417 = vmatpush1.bf16.msra.mxu0 0
  %2418 = vmatprep.subr.bf16.mxu0 0
  %2419 = vmatpush1.bf16.msra.mxu0 0
  %2420 = vmatprep.subr.bf16.mxu0 0
  %2421 = vmatpush1.bf16.msra.mxu0 0
  %2422 = vmatprep.subr.bf16.mxu0 0
  %2423 = vmatpush1.bf16.msra.mxu0 0
  %2424 = vmatprep.subr.bf16.mxu0 %v2059
  %2425 = vmatpush1.bf16.msra.mxu0 %v2058
  %2426 = vmatprep.subr.bf16.mxu0 %v2057
  %2427 = vmatpush1.bf16.msra.mxu0 %v2056
  %2428 = vmatprep.subr.bf16.mxu0 %v2055
  %2429 = vmatpush1.bf16.msra.mxu0 %v2054
  %2430 = vmatprep.subr.bf16.mxu0 %v2053
  %2431 = vmatpush1.bf16.msra.mxu0 %v2052
  %2432 = vmatprep.subr.bf16.mxu0 0
  %2433 = vmatpush2.bf16.msra.mxu0 0
  %2434 = vmatprep.subr.bf16.mxu0 0
  %2435 = vmatpush2.bf16.msra.mxu0 0
  %2436 = vmatprep.subr.bf16.mxu0 0
  %2437 = vmatpush2.bf16.msra.mxu0 0
  %2438 = vmatprep.subr.bf16.mxu0 0
  %2439 = vmatpush2.bf16.msra.mxu0 0
  %2440 = vmatprep.subr.bf16.mxu0 0
  %2441 = vmatpush2.bf16.msra.mxu0 0
  %2442 = vmatprep.subr.bf16.mxu0 0
  %2443 = vmatpush2.bf16.msra.mxu0 0
  %2444 = vmatprep.subr.bf16.mxu0 0
  %2445 = vmatpush2.bf16.msra.mxu0 0
  %2446 = vmatprep.subr.bf16.mxu0 0
  %2447 = vmatpush2.bf16.msra.mxu0 0
  %2448 = vmatprep.mubr.bf16.mxu0 0
  %2449 = vmatmul.mubr.bf16.gmra.mxu0 %v2414
  %v2450 = vpop.f32.mrf.mxu0
  %v2451 = vadd.f32 0.0, %v2450
  %v2452 = vpop.f32.mrf.mxu0
  %v2453 = vadd.f32 0.0, %v2452
  %v2454 = vpop.f32.mrf.mxu0
  %v2455 = vadd.f32 0.0, %v2454
  %v2456 = vpop.f32.mrf.mxu0
  %v2457 = vadd.f32 0.0, %v2456
  %2458 = vdwg.mxu0
  %v2459 = vadd.f32 %v2408, %v2451
  %v2460 = vadd.f32 %v2409, %v2453
  %v2461 = vadd.f32 %v2410, %v2455
  %v2462 = vadd.f32 %v2411, %v2457
  %v2463 = vxor.u32 %v2459, 2147483648
  %v2464 = vxor.u32 %v2460, 2147483648
  %v2465 = vxor.u32 %v2461, 2147483648
  %v2466 = vxor.u32 %v2462, 2147483648
  %v2467 = vmul.f32 %v2463, 1.442695
  %v2468 = vpow.pop %v2467
  %v2469 = vmul.f32 %v2464, 1.442695
  %v2470 = vpow.pop %v2469
  %v2471 = vmul.f32 %v2465, 1.442695
  %v2472 = vpow.pop %v2471
  %v2473 = vmul.f32 %v2466, 1.442695
  %v2474 = vpow.pop %v2473
  %v2475 = vadd.f32 %v2468, 1.0
  %v2476 = vadd.f32 %v2470, 1.0
  %v2477 = vadd.f32 %v2472, 1.0
  %v2478 = vadd.f32 %v2474, 1.0
  %v2479 = vrcp.pop %v2475
  %v2480 = vmul.f32 1.0, %v2479
  %v2481 = vrcp.pop %v2476
  %v2482 = vmul.f32 1.0, %v2481
  %v2483 = vrcp.pop %v2477
  %v2484 = vmul.f32 1.0, %v2483
  %v2485 = vrcp.pop %v2478
  %v2486 = vmul.f32 1.0, %v2485
  %v2487 = vtanh.pop %v2460
  %v2488 = vtanh.pop %v2462
  %v2489 = vmul.f32 %v2480, %v2393
  %v2490 = vmul.f32 %v2484, %v2394
  %2493 = vrot.lane.b32.xlu0 %v2487, 64
  %v2494 = vpop.permute.xlu0 %2493
  %2495 = vrot.lane.b32.xlu0 %v2488, 64
  %v2496 = vpop.permute.xlu0 %2495
  %v2499 = vmul.f32 %v2480, %v2494
  %v2500 = vmul.f32 %v2484, %v2496
  %2503 = vrot.lane.b32.xlu0 %v2499, 64
  %v2504 = vpop.permute.xlu0 %2503
  %2505 = vrot.lane.b32.xlu0 %v2500, 64
  %v2506 = vpop.permute.xlu0 %2505
  %v2509 = vadd.f32 %v2489, %v2504
  %v2510 = vadd.f32 %v2490, %v2506
  %v2511 = vtanh.pop %v2509
  %v2512 = vtanh.pop %v2510
  %2515 = vrot.lane.b32.xlu0 %v2511, 64
  %v2516 = vpop.permute.xlu0 %2515
  %2517 = vrot.lane.b32.xlu0 %v2512, 64
  %v2518 = vpop.permute.xlu0 %2517
  %v2521 = vmul.f32 %v2482, %v2516
  %v2522 = vmul.f32 %v2486, %v2518
  %v2523 = vld [vmem:[%s1677] sm:$0xff]
  %v2524 = vld [vmem:[%s1677 + $0x8] sm:$0xff]
  %v2525 = vpack.c.bf16 %v2524, %v2523
  %v2526 = vld [vmem:[%s11] sm:$0xff]
  %v2527 = vld [vmem:[%s11 + $0x8] sm:$0xff]
  %v2528 = vld [vmem:[%s11 + $0x10] sm:$0xff]
  %v2529 = vld [vmem:[%s11 + $0x18] sm:$0xff]
  %v2530 = vld [vmem:[%s11 + $0x20] sm:$0xff]
  %v2531 = vld [vmem:[%s11 + $0x28] sm:$0xff]
  %v2532 = vld [vmem:[%s11 + $0x30] sm:$0xff]
  %v2533 = vld [vmem:[%s11 + $0x38] sm:$0xff]
  %v2534 = vld [vmem:[%s679] sm:$0xff]
  %v2535 = vld [vmem:[%s679 + $0x8] sm:$0xff]
  %v2536 = vpack.c.bf16 %v2535, %v2534
  %v2537 = vld [vmem:[%s12] sm:$0xff]
  %v2538 = vld [vmem:[%s12 + $0x8] sm:$0xff]
  %v2539 = vld [vmem:[%s12 + $0x10] sm:$0xff]
  %v2540 = vld [vmem:[%s12 + $0x18] sm:$0xff]
  %v2541 = vld [vmem:[%s12 + $0x20] sm:$0xff]
  %v2542 = vld [vmem:[%s12 + $0x28] sm:$0xff]
  %v2543 = vld [vmem:[%s12 + $0x30] sm:$0xff]
  %v2544 = vld [vmem:[%s12 + $0x38] sm:$0xff]
  %v2553 = vunpack.c.l.b16 %v2537
  %v2554 = vunpack.c.h.b16 %v2537
  %v2555 = vunpack.c.l.b16 %v2538
  %v2556 = vunpack.c.h.b16 %v2538
  %v2557 = vunpack.c.l.b16 %v2539
  %v2558 = vunpack.c.h.b16 %v2539
  %v2559 = vunpack.c.l.b16 %v2540
  %v2560 = vunpack.c.h.b16 %v2540
  %v2561 = vunpack.c.l.b16 %v2541
  %v2562 = vunpack.c.h.b16 %v2541
  %v2563 = vunpack.c.l.b16 %v2542
  %v2564 = vunpack.c.h.b16 %v2542
  %v2565 = vunpack.c.l.b16 %v2543
  %v2566 = vunpack.c.h.b16 %v2543
  %v2567 = vunpack.c.l.b16 %v2544
  %v2568 = vunpack.c.h.b16 %v2544
  %v2569 = vpack.c.b16 %v2555, %v2553
  %v2570 = vpack.c.b16 %v2556, %v2554
  %v2571 = vpack.c.b16 %v2559, %v2557
  %v2572 = vpack.c.b16 %v2560, %v2558
  %v2573 = vpack.c.b16 %v2563, %v2561
  %v2574 = vpack.c.b16 %v2564, %v2562
  %v2575 = vpack.c.b16 %v2567, %v2565
  %v2576 = vpack.c.b16 %v2568, %v2566
  %v2586 = vsel %vm406, %v2536, 0
  %2588 = vmatprep.subr.bf16.mxu0 0
  %2589 = vmatpush1.bf16.msra.mxu0 0
  %2590 = vmatprep.subr.bf16.mxu0 0
  %2591 = vmatpush1.bf16.msra.mxu0 0
  %2592 = vmatprep.subr.bf16.mxu0 0
  %2593 = vmatpush1.bf16.msra.mxu0 0
  %2594 = vmatprep.subr.bf16.mxu0 0
  %2595 = vmatpush1.bf16.msra.mxu0 0
  %2596 = vmatprep.subr.bf16.mxu0 %v2576
  %2597 = vmatpush1.bf16.msra.mxu0 %v2575
  %2598 = vmatprep.subr.bf16.mxu0 %v2574
  %2599 = vmatpush1.bf16.msra.mxu0 %v2573
  %2600 = vmatprep.subr.bf16.mxu0 %v2572
  %2601 = vmatpush1.bf16.msra.mxu0 %v2571
  %2602 = vmatprep.subr.bf16.mxu0 %v2570
  %2603 = vmatpush1.bf16.msra.mxu0 %v2569
  %2604 = vmatprep.subr.bf16.mxu0 0
  %2605 = vmatpush2.bf16.msra.mxu0 0
  %2606 = vmatprep.subr.bf16.mxu0 0
  %2607 = vmatpush2.bf16.msra.mxu0 0
  %2608 = vmatprep.subr.bf16.mxu0 0
  %2609 = vmatpush2.bf16.msra.mxu0 0
  %2610 = vmatprep.subr.bf16.mxu0 0
  %2611 = vmatpush2.bf16.msra.mxu0 0
  %2612 = vmatprep.subr.bf16.mxu0 0
  %2613 = vmatpush2.bf16.msra.mxu0 0
  %2614 = vmatprep.subr.bf16.mxu0 0
  %2615 = vmatpush2.bf16.msra.mxu0 0
  %2616 = vmatprep.subr.bf16.mxu0 0
  %2617 = vmatpush2.bf16.msra.mxu0 0
  %2618 = vmatprep.subr.bf16.mxu0 0
  %2619 = vmatpush2.bf16.msra.mxu0 0
  %2620 = vmatprep.mubr.bf16.mxu0 0
  %2621 = vmatmul.mubr.bf16.gmra.mxu0 %v2586
  %v2622 = vpop.f32.mrf.mxu0
  %v2623 = vadd.f32 0.0, %v2622
  %v2624 = vpop.f32.mrf.mxu0
  %v2625 = vadd.f32 0.0, %v2624
  %v2626 = vpop.f32.mrf.mxu0
  %v2627 = vadd.f32 0.0, %v2626
  %v2628 = vpop.f32.mrf.mxu0
  %v2629 = vadd.f32 0.0, %v2628
  %2630 = vdwg.mxu0
  %v2639 = vunpack.c.l.b16 %v2526
  %v2640 = vunpack.c.h.b16 %v2526
  %v2641 = vunpack.c.l.b16 %v2527
  %v2642 = vunpack.c.h.b16 %v2527
  %v2643 = vunpack.c.l.b16 %v2528
  %v2644 = vunpack.c.h.b16 %v2528
  %v2645 = vunpack.c.l.b16 %v2529
  %v2646 = vunpack.c.h.b16 %v2529
  %v2647 = vunpack.c.l.b16 %v2530
  %v2648 = vunpack.c.h.b16 %v2530
  %v2649 = vunpack.c.l.b16 %v2531
  %v2650 = vunpack.c.h.b16 %v2531
  %v2651 = vunpack.c.l.b16 %v2532
  %v2652 = vunpack.c.h.b16 %v2532
  %v2653 = vunpack.c.l.b16 %v2533
  %v2654 = vunpack.c.h.b16 %v2533
  %v2655 = vpack.c.b16 %v2641, %v2639
  %v2656 = vpack.c.b16 %v2642, %v2640
  %v2657 = vpack.c.b16 %v2645, %v2643
  %v2658 = vpack.c.b16 %v2646, %v2644
  %v2659 = vpack.c.b16 %v2649, %v2647
  %v2660 = vpack.c.b16 %v2650, %v2648
  %v2661 = vpack.c.b16 %v2653, %v2651
  %v2662 = vpack.c.b16 %v2654, %v2652
  %v2672 = vsel %vm406, %v2525, 0
  %2674 = vmatprep.subr.bf16.mxu0 0
  %2675 = vmatpush1.bf16.msra.mxu0 0
  %2676 = vmatprep.subr.bf16.mxu0 0
  %2677 = vmatpush1.bf16.msra.mxu0 0
  %2678 = vmatprep.subr.bf16.mxu0 0
  %2679 = vmatpush1.bf16.msra.mxu0 0
  %2680 = vmatprep.subr.bf16.mxu0 0
  %2681 = vmatpush1.bf16.msra.mxu0 0
  %2682 = vmatprep.subr.bf16.mxu0 %v2662
  %2683 = vmatpush1.bf16.msra.mxu0 %v2661
  %2684 = vmatprep.subr.bf16.mxu0 %v2660
  %2685 = vmatpush1.bf16.msra.mxu0 %v2659
  %2686 = vmatprep.subr.bf16.mxu0 %v2658
  %2687 = vmatpush1.bf16.msra.mxu0 %v2657
  %2688 = vmatprep.subr.bf16.mxu0 %v2656
  %2689 = vmatpush1.bf16.msra.mxu0 %v2655
  %2690 = vmatprep.subr.bf16.mxu0 0
  %2691 = vmatpush2.bf16.msra.mxu0 0
  %2692 = vmatprep.subr.bf16.mxu0 0
  %2693 = vmatpush2.bf16.msra.mxu0 0
  %2694 = vmatprep.subr.bf16.mxu0 0
  %2695 = vmatpush2.bf16.msra.mxu0 0
  %2696 = vmatprep.subr.bf16.mxu0 0
  %2697 = vmatpush2.bf16.msra.mxu0 0
  %2698 = vmatprep.subr.bf16.mxu0 0
  %2699 = vmatpush2.bf16.msra.mxu0 0
  %2700 = vmatprep.subr.bf16.mxu0 0
  %2701 = vmatpush2.bf16.msra.mxu0 0
  %2702 = vmatprep.subr.bf16.mxu0 0
  %2703 = vmatpush2.bf16.msra.mxu0 0
  %2704 = vmatprep.subr.bf16.mxu0 0
  %2705 = vmatpush2.bf16.msra.mxu0 0
  %2706 = vmatprep.mubr.bf16.mxu0 0
  %2707 = vmatmul.mubr.bf16.gmra.mxu0 %v2672
  %v2708 = vpop.f32.mrf.mxu0
  %v2709 = vadd.f32 %v2623, %v2708
  %v2710 = vpop.f32.mrf.mxu0
  %v2711 = vadd.f32 %v2625, %v2710
  %v2712 = vpop.f32.mrf.mxu0
  %v2713 = vadd.f32 %v2627, %v2712
  %v2714 = vpop.f32.mrf.mxu0
  %v2715 = vadd.f32 %v2629, %v2714
  %2716 = vdwg.mxu0
  %v2717 = vld [vmem:[%s13] sm:$0x3]
  %v2719 = vlaneseq
  %v2720 = vshrl.u32 %v2719, 7
  %v2721 = vsub.s32 0, %v2720
  %v2722 = vrot.slane %v2717, %v2721
  %v2723 = vlaneseq
  %v2724 = vshrl.u32 %v2723, 7
  %v2725 = vsub.s32 1, %v2724
  %v2726 = vrot.slane %v2717, %v2725
  %v2729 = vadd.f32 %v2709, %v2722
  %v2730 = vadd.f32 %v2711, %v2726
  %v2731 = vadd.f32 %v2713, %v2722
  %v2732 = vadd.f32 %v2715, %v2726
  %v2733 = vxor.u32 %v2729, 2147483648
  %v2734 = vxor.u32 %v2730, 2147483648
  %v2735 = vxor.u32 %v2731, 2147483648
  %v2736 = vxor.u32 %v2732, 2147483648
  %v2737 = vmul.f32 %v2733, 1.442695
  %v2738 = vpow.pop %v2737
  %v2739 = vmul.f32 %v2734, 1.442695
  %v2740 = vpow.pop %v2739
  %v2741 = vmul.f32 %v2735, 1.442695
  %v2742 = vpow.pop %v2741
  %v2743 = vmul.f32 %v2736, 1.442695
  %v2744 = vpow.pop %v2743
  %v2745 = vadd.f32 %v2738, 1.0
  %v2746 = vadd.f32 %v2740, 1.0
  %v2747 = vadd.f32 %v2742, 1.0
  %v2748 = vadd.f32 %v2744, 1.0
  %v2749 = vrcp.pop %v2745
  %v2750 = vmul.f32 1.0, %v2749
  %v2751 = vrcp.pop %v2746
  %v2752 = vmul.f32 1.0, %v2751
  %v2753 = vrcp.pop %v2747
  %v2754 = vmul.f32 1.0, %v2753
  %v2755 = vrcp.pop %v2748
  %v2756 = vmul.f32 1.0, %v2755
  %v2757 = vtanh.pop %v2730
  %v2758 = vtanh.pop %v2732
  %v2759 = vmul.f32 %v2750, 0.0
  %v2760 = vmul.f32 %v2754, 0.0
  %2763 = vrot.lane.b32.xlu0 %v2757, 64
  %v2764 = vpop.permute.xlu0 %2763
  %2765 = vrot.lane.b32.xlu0 %v2758, 64
  %v2766 = vpop.permute.xlu0 %2765
  %v2769 = vmul.f32 %v2750, %v2764
  %v2770 = vmul.f32 %v2754, %v2766
  %2773 = vrot.lane.b32.xlu0 %v2769, 64
  %v2774 = vpop.permute.xlu0 %2773
  %2775 = vrot.lane.b32.xlu0 %v2770, 64
  %v2776 = vpop.permute.xlu0 %2775
  %v2779 = vadd.f32 %v2759, %v2774
  %v2780 = vadd.f32 %v2760, %v2776
  %v2781 = vtanh.pop %v2779
  %v2782 = vtanh.pop %v2780
  %2785 = vrot.lane.b32.xlu0 %v2781, 64
  %v2786 = vpop.permute.xlu0 %2785
  %2787 = vrot.lane.b32.xlu0 %v2782, 64
  %v2788 = vpop.permute.xlu0 %2787
  %v2791 = vmul.f32 %v2752, %v2786
  %v2792 = vmul.f32 %v2756, %v2788
  %v2793 = vpack.c.bf16 %v2522, %v2521
  %v2794 = vld [vmem:[%s14] sm:$0xf]
  %v2795 = vld [vmem:[%s14 + $0x4] sm:$0xf]
  %v2796 = vld [vmem:[%s14 + $0x8] sm:$0xf]
  %v2797 = vld [vmem:[%s14 + $0xc] sm:$0xf]
  %v2798 = vld [vmem:[%s14 + $0x10] sm:$0xf]
  %v2799 = vld [vmem:[%s14 + $0x14] sm:$0xf]
  %v2800 = vld [vmem:[%s14 + $0x18] sm:$0xf]
  %v2801 = vld [vmem:[%s14 + $0x1c] sm:$0xf]
  %v2802 = vpack.c.bf16 %v2792, %v2791
  %v2803 = vld [vmem:[%s15] sm:$0xf]
  %v2804 = vld [vmem:[%s15 + $0x4] sm:$0xf]
  %v2805 = vld [vmem:[%s15 + $0x8] sm:$0xf]
  %v2806 = vld [vmem:[%s15 + $0xc] sm:$0xf]
  %v2807 = vld [vmem:[%s15 + $0x10] sm:$0xf]
  %v2808 = vld [vmem:[%s15 + $0x14] sm:$0xf]
  %v2809 = vld [vmem:[%s15 + $0x18] sm:$0xf]
  %v2810 = vld [vmem:[%s15 + $0x1c] sm:$0xf]
  %v2819 = vunpack.c.l.b16 %v2803
  %v2820 = vunpack.c.l.b16 %v2804
  %v2821 = vunpack.c.l.b16 %v2805
  %v2822 = vunpack.c.l.b16 %v2806
  %v2823 = vunpack.c.l.b16 %v2807
  %v2824 = vunpack.c.l.b16 %v2808
  %v2825 = vunpack.c.l.b16 %v2809
  %v2826 = vunpack.c.l.b16 %v2810
  %v2827 = vpack.c.b16 %v2820, %v2819
  %v2828 = vpack.c.b16 %v2822, %v2821
  %v2829 = vpack.c.b16 %v2824, %v2823
  %v2830 = vpack.c.b16 %v2826, %v2825
  %v2836 = vsel %vm406, %v2802, 0
  %2838 = vmatprep.subr.bf16.mxu0 0
  %2839 = vmatpush1.bf16.msra.mxu0 0
  %2840 = vmatprep.subr.bf16.mxu0 0
  %2841 = vmatpush1.bf16.msra.mxu0 0
  %2842 = vmatprep.subr.bf16.mxu0 0
  %2843 = vmatpush1.bf16.msra.mxu0 0
  %2844 = vmatprep.subr.bf16.mxu0 0
  %2845 = vmatpush1.bf16.msra.mxu0 0
  %2846 = vmatprep.subr.bf16.mxu0 0
  %2847 = vmatpush1.bf16.msra.mxu0 %v2830
  %2848 = vmatprep.subr.bf16.mxu0 0
  %2849 = vmatpush1.bf16.msra.mxu0 %v2829
  %2850 = vmatprep.subr.bf16.mxu0 0
  %2851 = vmatpush1.bf16.msra.mxu0 %v2828
  %2852 = vmatprep.subr.bf16.mxu0 0
  %2853 = vmatpush1.bf16.msra.mxu0 %v2827
  %2854 = vmatprep.subr.bf16.mxu0 0
  %2855 = vmatpush2.bf16.msra.mxu0 0
  %2856 = vmatprep.subr.bf16.mxu0 0
  %2857 = vmatpush2.bf16.msra.mxu0 0
  %2858 = vmatprep.subr.bf16.mxu0 0
  %2859 = vmatpush2.bf16.msra.mxu0 0
  %2860 = vmatprep.subr.bf16.mxu0 0
  %2861 = vmatpush2.bf16.msra.mxu0 0
  %2862 = vmatprep.subr.bf16.mxu0 0
  %2863 = vmatpush2.bf16.msra.mxu0 0
  %2864 = vmatprep.subr.bf16.mxu0 0
  %2865 = vmatpush2.bf16.msra.mxu0 0
  %2866 = vmatprep.subr.bf16.mxu0 0
  %2867 = vmatpush2.bf16.msra.mxu0 0
  %2868 = vmatprep.subr.bf16.mxu0 0
  %2869 = vmatpush2.bf16.msra.mxu0 0
  %2870 = vmatprep.mubr.bf16.mxu0 0
  %2871 = vmatmul.mubr.bf16.gmra.mxu0 %v2836
  %v2872 = vpop.f32.mrf.mxu0
  %v2873 = vadd.f32 0.0, %v2872
  %v2874 = vpop.f32.mrf.mxu0
  %v2875 = vpop.f32.mrf.mxu0
  %v2876 = vadd.f32 0.0, %v2875
  %v2877 = vpop.f32.mrf.mxu0
  %2878 = vdwg.mxu0
  %v2887 = vunpack.c.l.b16 %v2794
  %v2888 = vunpack.c.l.b16 %v2795
  %v2889 = vunpack.c.l.b16 %v2796
  %v2890 = vunpack.c.l.b16 %v2797
  %v2891 = vunpack.c.l.b16 %v2798
  %v2892 = vunpack.c.l.b16 %v2799
  %v2893 = vunpack.c.l.b16 %v2800
  %v2894 = vunpack.c.l.b16 %v2801
  %v2895 = vpack.c.b16 %v2888, %v2887
  %v2896 = vpack.c.b16 %v2890, %v2889
  %v2897 = vpack.c.b16 %v2892, %v2891
  %v2898 = vpack.c.b16 %v2894, %v2893
  %v2904 = vsel %vm406, %v2793, 0
  %2906 = vmatprep.subr.bf16.mxu0 0
  %2907 = vmatpush1.bf16.msra.mxu0 0
  %2908 = vmatprep.subr.bf16.mxu0 0
  %2909 = vmatpush1.bf16.msra.mxu0 0
  %2910 = vmatprep.subr.bf16.mxu0 0
  %2911 = vmatpush1.bf16.msra.mxu0 0
  %2912 = vmatprep.subr.bf16.mxu0 0
  %2913 = vmatpush1.bf16.msra.mxu0 0
  %2914 = vmatprep.subr.bf16.mxu0 0
  %2915 = vmatpush1.bf16.msra.mxu0 %v2898
  %2916 = vmatprep.subr.bf16.mxu0 0
  %2917 = vmatpush1.bf16.msra.mxu0 %v2897
  %2918 = vmatprep.subr.bf16.mxu0 0
  %2919 = vmatpush1.bf16.msra.mxu0 %v2896
  %2920 = vmatprep.subr.bf16.mxu0 0
  %2921 = vmatpush1.bf16.msra.mxu0 %v2895
  %2922 = vmatprep.subr.bf16.mxu0 0
  %2923 = vmatpush2.bf16.msra.mxu0 0
  %2924 = vmatprep.subr.bf16.mxu0 0
  %2925 = vmatpush2.bf16.msra.mxu0 0
  %2926 = vmatprep.subr.bf16.mxu0 0
  %2927 = vmatpush2.bf16.msra.mxu0 0
  %2928 = vmatprep.subr.bf16.mxu0 0
  %2929 = vmatpush2.bf16.msra.mxu0 0
  %2930 = vmatprep.subr.bf16.mxu0 0
  %2931 = vmatpush2.bf16.msra.mxu0 0
  %2932 = vmatprep.subr.bf16.mxu0 0
  %2933 = vmatpush2.bf16.msra.mxu0 0
  %2934 = vmatprep.subr.bf16.mxu0 0
  %2935 = vmatpush2.bf16.msra.mxu0 0
  %2936 = vmatprep.subr.bf16.mxu0 0
  %2937 = vmatpush2.bf16.msra.mxu0 0
  %2938 = vmatprep.mubr.bf16.mxu0 0
  %2939 = vmatmul.mubr.bf16.gmra.mxu0 %v2904
  %v2940 = vpop.f32.mrf.mxu0
  %v2941 = vadd.f32 %v2873, %v2940
  %v2942 = vpop.f32.mrf.mxu0
  %v2943 = vpop.f32.mrf.mxu0
  %v2944 = vadd.f32 %v2876, %v2943
  %v2945 = vpop.f32.mrf.mxu0
  %2946 = vdwg.mxu0
  %v2947 = vld [vmem:[%s16] sm:$0x1]
  %v2949 = vlaneseq
  %v2950 = vshrl.u32 %v2949, 7
  %v2951 = vsub.s32 0, %v2950
  %v2952 = vrot.slane %v2947, %v2951
  %v2954 = vadd.f32 %v2941, %v2952
  %v2955 = vadd.f32 %v2944, %v2952
  %v2956 = vmax.f32 %v2954, 0.0
  %v2957 = vmax.f32 %v2955, 0.0
  %v2958 = vpack.c.bf16 %v2957, %v2956
  %v2959 = vld [vmem:[%s17] sm:$0xf]
  %v2960 = vld [vmem:[%s17 + $0x4] sm:$0xf]
  %v2961 = vld [vmem:[%s17 + $0x8] sm:$0xf]
  %v2962 = vld [vmem:[%s17 + $0xc] sm:$0xf]
  %v2963 = vld [vmem:[%s17 + $0x10] sm:$0xf]
  %v2964 = vld [vmem:[%s17 + $0x14] sm:$0xf]
  %v2965 = vld [vmem:[%s17 + $0x18] sm:$0xf]
  %v2966 = vld [vmem:[%s17 + $0x1c] sm:$0xf]
  %v2967 = vld [vmem:[%s17 + $0x20] sm:$0xf]
  %v2968 = vld [vmem:[%s17 + $0x24] sm:$0xf]
  %v2969 = vld [vmem:[%s17 + $0x28] sm:$0xf]
  %v2970 = vld [vmem:[%s17 + $0x2c] sm:$0xf]
  %v2971 = vld [vmem:[%s17 + $0x30] sm:$0xf]
  %v2972 = vld [vmem:[%s17 + $0x34] sm:$0xf]
  %v2973 = vld [vmem:[%s17 + $0x38] sm:$0xf]
  %v2974 = vld [vmem:[%s17 + $0x3c] sm:$0xf]
  %v2975 = vld [vmem:[%s18] sm:$0x1]
  %v2977 = vlaneseq
  %v2978 = vshrl.u32 %v2977, 7
  %v2979 = vsub.s32 0, %v2978
  %v2980 = vrot.slane %v2975, %v2979
  %v2998 = vunpack.c.l.b16 %v2959
  %v2999 = vunpack.c.l.b16 %v2960
  %v3000 = vunpack.c.l.b16 %v2961
  %v3001 = vunpack.c.l.b16 %v2962
  %v3002 = vunpack.c.l.b16 %v2963
  %v3003 = vunpack.c.l.b16 %v2964
  %v3004 = vunpack.c.l.b16 %v2965
  %v3005 = vunpack.c.l.b16 %v2966
  %v3006 = vunpack.c.l.b16 %v2967
  %v3007 = vunpack.c.l.b16 %v2968
  %v3008 = vunpack.c.l.b16 %v2969
  %v3009 = vunpack.c.l.b16 %v2970
  %v3010 = vunpack.c.l.b16 %v2971
  %v3011 = vunpack.c.l.b16 %v2972
  %v3012 = vunpack.c.l.b16 %v2973
  %v3013 = vunpack.c.l.b16 %v2974
  %v3014 = vpack.c.b16 %v2999, %v2998
  %v3015 = vpack.c.b16 %v3001, %v3000
  %v3016 = vpack.c.b16 %v3003, %v3002
  %v3017 = vpack.c.b16 %v3005, %v3004
  %v3018 = vpack.c.b16 %v3007, %v3006
  %v3019 = vpack.c.b16 %v3009, %v3008
  %v3020 = vpack.c.b16 %v3011, %v3010
  %v3021 = vpack.c.b16 %v3013, %v3012
  %3030 = vmatprep.subr.bf16.mxu0 0
  %3031 = vmatpush1.bf16.msra.mxu0 %v3021
  %3032 = vmatprep.subr.bf16.mxu0 0
  %3033 = vmatpush1.bf16.msra.mxu0 %v3020
  %3034 = vmatprep.subr.bf16.mxu0 0
  %3035 = vmatpush1.bf16.msra.mxu0 %v3019
  %3036 = vmatprep.subr.bf16.mxu0 0
  %3037 = vmatpush1.bf16.msra.mxu0 %v3018
  %3038 = vmatprep.subr.bf16.mxu0 0
  %3039 = vmatpush1.bf16.msra.mxu0 %v3017
  %3040 = vmatprep.subr.bf16.mxu0 0
  %3041 = vmatpush1.bf16.msra.mxu0 %v3016
  %3042 = vmatprep.subr.bf16.mxu0 0
  %3043 = vmatpush1.bf16.msra.mxu0 %v3015
  %3044 = vmatprep.subr.bf16.mxu0 0
  %3045 = vmatpush1.bf16.msra.mxu0 %v3014
  %3046 = vmatprep.subr.bf16.mxu0 0
  %3047 = vmatpush2.bf16.msra.mxu0 0
  %3048 = vmatprep.subr.bf16.mxu0 0
  %3049 = vmatpush2.bf16.msra.mxu0 0
  %3050 = vmatprep.subr.bf16.mxu0 0
  %3051 = vmatpush2.bf16.msra.mxu0 0
  %3052 = vmatprep.subr.bf16.mxu0 0
  %3053 = vmatpush2.bf16.msra.mxu0 0
  %3054 = vmatprep.subr.bf16.mxu0 0
  %3055 = vmatpush2.bf16.msra.mxu0 0
  %3056 = vmatprep.subr.bf16.mxu0 0
  %3057 = vmatpush2.bf16.msra.mxu0 0
  %3058 = vmatprep.subr.bf16.mxu0 0
  %3059 = vmatpush2.bf16.msra.mxu0 0
  %3060 = vmatprep.subr.bf16.mxu0 0
  %3061 = vmatpush2.bf16.msra.mxu0 0
  %3062 = vmatprep.mubr.bf16.mxu0 0
  %3063 = vmatmul.mubr.bf16.gmra.mxu0 %v2958
  %v3064 = vpop.f32.mrf.mxu0
  %v3065 = vadd.f32 %v2980, %v3064
  %v3066 = vpop.f32.mrf.mxu0
  %v3067 = vpop.f32.mrf.mxu0
  %v3068 = vadd.f32 %v2980, %v3067
  %v3069 = vpop.f32.mrf.mxu0
  %3070 = vdwg.mxu0
  %3071 = vst [vmem:[%s19] sm:$0xff] %v3065
  %3072 = vst [vmem:[%s19 + $0x8] sm:$0xff] %v3068
  // Predicated region
  $region78: #{cnn_lstm_forward.5} parent=0 // pred_check
    _
  $region79: #{cnn_lstm_forward.5} parent=0 // pred_check_branch
    %3074 = sbr.rel (0) target = $region81
  $region80: #{cnn_lstm_forward.5} parent=0 // pred_region
    _
  $region81: #{cnn_lstm_forward.5} parent=0 // pred_fallthru
    _
  // Predicated region
  $region82: #{cnn_lstm_forward.5} parent=0 // pred_check
    _
  $region83: #{cnn_lstm_forward.5} parent=0 // pred_check_branch
    %3076 = sbr.rel (0) target = $region85
  $region84: #{cnn_lstm_forward.5} parent=0 // pred_region
    _
  $region85: #{cnn_lstm_forward.5} parent=0 // pred_fallthru
    _

</llo_original>
